<compile_context>
chip_gen: v7x
topology: tpu7x:2x2x1
jax: 0.10.0
libtpu: 0.0.40
codegen_flags: <defaults>
</compile_context>

<pallas_src>
import jax
import jax.numpy as jnp
import numpy as np
from jax.experimental import pallas as pl
from jax.experimental.pallas import tpu as pltpu

EPS = 1e-5                     # nn.BatchNorm2d default eps
CP = 128                       # padded channel width (lane-dense MXU tiles)
C1 = 32                        # conv1 output channels
C2 = 48                        # conv2 output channels
TAP_GROUPS = (4, 4, 4, 4, 4, 4, 1)   # conv2's 25 taps grouped along K (4 -> K=512)
NG = len(TAP_GROUPS)
KG = 4 * CP                    # K extent of one (padded) weight slab


# ------------------------------ Pallas kernels ------------------------------ #
def _conv1_stats_kernel(pat_ref, w1_ref, st_ref):
    # pat_ref: (nt*144, 100) bf16 | w1_ref: (100, CP) bf16 | st_ref: (1, 2, CP) f32
    y = jnp.dot(pat_ref[...], w1_ref[...], preferred_element_type=jnp.float32)
    ssum = jnp.sum(y, axis=0, keepdims=True)
    ssq = jnp.sum(y * y, axis=0, keepdims=True)
    st_ref[...] = jnp.concatenate([ssum, ssq], axis=0)[None]


def _fused_conv1_pool_conv2_kernel(pat_ref, w1_ref, a1_ref, w2_ref, y2_ref, st_ref):
    # pat_ref: (nt*144, 100) bf16  rows (n, oh1, ow1), cols (phase, kh, kw)
    # w1_ref : (100, CP) bf16      block-diagonal: phase p -> lanes [32p, 32p+32)
    # a1_ref : (2, CP) f32         [scale1; shift1], per-channel affine tiled x4
    # w2_ref : (NG, KG, CP) bf16   group g, rows [128j, 128j+32) = tap 4g+j (32, 48)
    # y2_ref : (nt*64, CP) bf16    rows (n, oh2, ow2) | st_ref: (1, 2, CP) f32
    nt = y2_ref.shape[0] // 64

    # conv1 for all 4 pool phases at once (bias cancels under batch-stat BN).
    y1 = jnp.dot(pat_ref[...], w1_ref[...], preferred_element_type=jnp.float32)
    # fused BN1 affine + ReLU (scale/shift precomputed from global batch stats).
    h = jnp.maximum(y1 * a1_ref[0:1, :] + a1_ref[1:2, :], 0.0)
    # 2x2 / stride-2 max pool == max over the 4 phase lane-groups: two XLU lane
    # rotations + VPU maxes; afterwards every 32-lane group holds the pooled
    # 32 channels (replicas multiply zero weight rows in conv2).
    h = jnp.maximum(h, pltpu.roll(h, 32, axis=1))
    h = jnp.maximum(h, pltpu.roll(h, 64, axis=1))
    # single bf16 cast of the pooled activation (consumed 25x below).
    h1 = h.astype(jnp.bfloat16).reshape(nt, 12, 12, CP)

    # conv2: 25 shifted windows of the VMEM-resident h1 (no im2col round-trip),
    # grouped 4-at-a-time along K -> 7 MXU dots with K=512 slabs.
    acc = jnp.zeros((nt * 64, CP), jnp.float32)
    tap = 0
    for g, m in enumerate(TAP_GROUPS):
        wins = []
        for j in range(m):
            kh, kw = (tap + j) // 5, (tap + j) % 5
            wins.append(h1[:, kh:kh + 8, kw:kw + 8, :].reshape(nt * 64, CP))
        win = wins[0] if m == 1 else jnp.concatenate(wins, axis=-1)
        acc = acc + jnp.dot(win, w2_ref[g, :m * CP, :],
                            preferred_element_type=jnp.float32)
        tap += m

    y2_ref[...] = acc.astype(jnp.bfloat16)
    # BN2 partial stats from the f32 accumulator (before the bf16 downcast).
    ssum = jnp.sum(acc, axis=0, keepdims=True)
    ssq = jnp.sum(acc * acc, axis=0, keepdims=True)
    st_ref[...] = jnp.concatenate([ssum, ssq], axis=0)[None]


def _bn2_relu_pool_kernel(y2_ref, a2_ref, o_ref):
    # y2_ref: (nt*64, CP) bf16, rows (n, oh2, ow2) | a2_ref: (2, CP) | o_ref: (nt,4,4,CP)
    nt = o_ref.shape[0]
    r = jnp.maximum(y2_ref[...].astype(jnp.float32) * a2_ref[0:1, :] + a2_ref[1:2, :],
                    0.0)
    r = jnp.max(r.reshape(nt, 4, 2, 8, CP), axis=2)            # pool over rows
    o_ref[...] = jnp.max(r.reshape(nt, 4, 4, 2, CP), axis=3)   # pool over cols


# -------------------------------- JAX glue ---------------------------------- #
def _im2col_l1(xm):
    """(N,28,28) -> (N*144, 100); rows (n, oh1, ow1); cols (phase=dy*2+dx, kh, kw)."""
    n = xm.shape[0]
    cols = [xm[:, kh:kh + 24, kw:kw + 24] for kh in range(5) for kw in range(5)]
    pat = jnp.stack(cols, axis=-1)                 # (N, 24, 24, 25): (n, oh, ow, tap)
    pat = pat.reshape(n, 12, 2, 12, 2, 25)         # (n, oh1, dy, ow1, dx, tap)
    pat = pat.transpose(0, 1, 3, 2, 4, 5)          # (n, oh1, ow1, dy, dx, tap)
    return pat.reshape(n * 144, 100)


def _batch_tile(n, cap=32):
    # Tile cap ~32 keeps the pass-2 working set well under a 32 MiB VMEM budget
    # on every generation; keep >= 2 grid steps so both v7x TensorCores get work.
    # NOTE: prime/odd batch sizes fall back to small tiles (correct, slower).
    cap = max(1, min(cap, n // 2 if n >= 2 else 1))
    nt = cap
    while n % nt:
        nt -= 1
    return nt


def _pad_vec(v):
    return jnp.zeros((CP,), jnp.float32).at[:v.shape[0]].set(v.astype(jnp.float32))


def _affine(s, count, gamma, beta):
    """[sum; sumsq] (2,C) -> fused training-mode BN scale/shift (2,C)."""
    mean = s[0] / count
    var = jnp.maximum(s[1] / count - mean * mean, 0.0)     # biased (training-mode BN)
    scale = gamma.astype(jnp.float32) * jax.lax.rsqrt(var + EPS)
    shift = beta.astype(jnp.float32) - mean * scale
    return jnp.stack([scale, shift]).astype(jnp.float32)


def _make_w1_blockdiag(w1):
    # (32,1,5,5) OIHW -> (100, CP): phase p's 25 taps feed output lanes [32p,32p+32)
    w1mat = jnp.transpose(w1[:, 0], (1, 2, 0)).reshape(25, C1)     # (tap, cout)
    out = jnp.zeros((100, CP), jnp.float32)
    for ph in range(4):
        out = out.at[ph * 25:(ph + 1) * 25, ph * C1:(ph + 1) * C1].set(w1mat)
    return out.astype(jnp.bfloat16)


def _make_w2_groups(w2):
    # (48,32,5,5) OIHW -> (NG, KG, CP): group g, rows [128j,128j+32) = tap 4g+j
    tapmats = jnp.transpose(w2, (2, 3, 1, 0)).reshape(25, C1, C2)  # (tap, cin, cout)
    out = jnp.zeros((NG, KG, CP), jnp.float32)
    tap = 0
    for g, m in enumerate(TAP_GROUPS):
        for j in range(m):
            out = out.at[g, j * CP:j * CP + C1, :C2].set(tapmats[tap + j])
        tap += m
    return out.astype(jnp.bfloat16)


@jax.jit
def netf_forward(x_nchw, p):
    n = x_nchw.shape[0]
    nt = _batch_tile(n)
    t = n // nt

    # torch.mean(x, 1).view(N, 1, H, W) -> keep as (N, 28, 28)
    xm = jnp.mean(x_nchw, axis=1)
    pat1 = _im2col_l1(xm).astype(jnp.bfloat16)             # (N*144, 100) lane-dense
    w1bd = _make_w1_blockdiag(p["w1"])                     # (100, CP)
    w2g = _make_w2_groups(p["w2"])                         # (NG, KG, CP)
    # NOTE: conv biases b1/b2 cancel exactly under training-mode BatchNorm.

    cparams = pltpu.CompilerParams(dimension_semantics=("parallel",),
                                   vmem_limit_bytes=32 * 1024 * 1024)

    # ---- pass 1: BN1 global batch statistics (conv1 recomputed, no HBM y1) ---
    stats1 = pl.pallas_call(
        _conv1_stats_kernel,
        grid=(t,),
        in_specs=[pl.BlockSpec((nt * 144, 100), lambda i: (i, 0)),
                  pl.BlockSpec((100, CP), lambda i: (0, 0))],
        out_specs=pl.BlockSpec((1, 2, CP), lambda i: (i, 0, 0)),
        out_shape=jax.ShapeDtypeStruct((t, 2, CP), jnp.float32),
        compiler_params=cparams,
        cost_estimate=pl.CostEstimate(flops=2 * n * 144 * 100 * CP,
                                      transcendentals=0,
                                      bytes_accessed=n * 144 * 100 * 2 + 100 * CP * 2),
    )(pat1, w1bd)
    s1 = jnp.sum(stats1, axis=0).reshape(2, 4, C1).sum(axis=1)   # fold 4 pool phases
    a1 = jnp.tile(_affine(s1, float(n * 576), p["g1"], p["be1"]), (1, 4))   # (2, CP)

    # ---- pass 2: conv1 -> BN1+ReLU -> pool -> conv2 (+ BN2 statistics) -------
    y2, stats2 = pl.pallas_call(
        _fused_conv1_pool_conv2_kernel,
        grid=(t,),
        in_specs=[pl.BlockSpec((nt * 144, 100), lambda i: (i, 0)),
                  pl.BlockSpec((100, CP), lambda i: (0, 0)),
                  pl.BlockSpec((2, CP), lambda i: (0, 0)),
                  pl.BlockSpec((NG, KG, CP), lambda i: (0, 0, 0))],
        out_specs=[pl.BlockSpec((nt * 64, CP), lambda i: (i, 0)),
                   pl.BlockSpec((1, 2, CP), lambda i: (i, 0, 0))],
        out_shape=[jax.ShapeDtypeStruct((n * 64, CP), jnp.bfloat16),
                   jax.ShapeDtypeStruct((t, 2, CP), jnp.float32)],
        compiler_params=cparams,
        cost_estimate=pl.CostEstimate(
            flops=2 * n * 144 * 100 * CP + 2 * n * 64 * NG * KG * CP,
            transcendentals=0,
            bytes_accessed=n * 144 * 100 * 2 + NG * KG * CP * 2 + n * 64 * CP * 2),
    )(pat1, w1bd, a1, w2g)
    a2 = _affine(jnp.sum(stats2, axis=0), float(n * 64),
                 _pad_vec(p["g2"]), _pad_vec(p["be2"]))

    # ---- pass 3: BN2+ReLU -> pool -> features (mem-bound; y2 is bf16) --------
    h2 = pl.pallas_call(
        _bn2_relu_pool_kernel,
        grid=(t,),
        in_specs=[pl.BlockSpec((nt * 64, CP), lambda i: (i, 0)),
                  pl.BlockSpec((2, CP), lambda i: (0, 0))],
        out_specs=pl.BlockSpec((nt, 4, 4, CP), lambda i: (i, 0, 0, 0)),
        out_shape=jax.ShapeDtypeStruct((n, 4, 4, CP), jnp.float32),
        compiler_params=cparams,
        cost_estimate=pl.CostEstimate(flops=6 * n * 64 * CP,
                                      transcendentals=0,
                                      bytes_accessed=n * 64 * CP * 2 + n * 16 * CP * 4),
    )(y2, a2)

    h2 = h2[:, :, :, :C2]                                  # drop channel padding
    # PyTorch flattens NCHW: view(N, 48*4*4)
    return jnp.transpose(h2, (0, 3, 1, 2)).reshape(n, C2 * 4 * 4)


# ---------------------------- pure-JAX reference ----------------------------- #
def _ref_block(x_nchw, w, b, g, be):
    y = jax.lax.conv_general_dilated(
        x_nchw, w, (1, 1), "VALID",
        dimension_numbers=("NCHW", "OIHW", "NCHW")) + b[None, :, None, None]
    mean = jnp.mean(y, axis=(0, 2, 3), keepdims=True)
    var = jnp.mean((y - mean) ** 2, axis=(0, 2, 3), keepdims=True)
    yn = (y - mean) / jnp.sqrt(var + EPS) * g[None, :, None, None] + be[None, :, None, None]
    r = jnp.maximum(yn, 0.0)
    n, c, h, w_ = r.shape
    return jnp.max(r.reshape(n, c, h // 2, 2, w_ // 2, 2), axis=(3, 5))


def ref_forward(x, p):
    xm = jnp.mean(x, axis=1, keepdims=True)
    h = _ref_block(xm, p["w1"], p["b1"], p["g1"], p["be1"])
    h = _ref_block(h, p["w2"], p["b2"], p["g2"], p["be2"])
    return h.reshape(h.shape[0], -1)


# ----------------------------------- main ------------------------------------ #
if __name__ == "__main__":
    key = jax.random.PRNGKey(0)
    ks = jax.random.split(key, 10)
    # forward implies 28x28 spatial (flatten expects 48*4*4); channels are
    # mean-reduced, so any C works — use 3 to exercise the reduction.
    x = jax.random.normal(ks[0], (2, 3, 28, 28), dtype=jnp.float32)

    params = dict(
        w1=0.1 * jax.random.normal(ks[1], (32, 1, 5, 5), jnp.float32),
        b1=0.1 * jax.random.normal(ks[2], (32,), jnp.float32),   # cancels under BN
        g1=1.0 + 0.1 * jax.random.normal(ks[3], (32,), jnp.float32),
        be1=0.1 * jax.random.normal(ks[4], (32,), jnp.float32),
        w2=0.1 * jax.random.normal(ks[5], (48, 32, 5, 5), jnp.float32),
        b2=0.1 * jax.random.normal(ks[6], (48,), jnp.float32),   # cancels under BN
        g2=1.0 + 0.1 * jax.random.normal(ks[7], (48,), jnp.float32),
        be2=0.1 * jax.random.normal(ks[8], (48,), jnp.float32),
    )

    out = jax.block_until_ready(netf_forward(x, params))
    assert out.shape == (2, 48 * 4 * 4), out.shape

    ref = jax.block_until_ready(ref_forward(x, params))
    # bf16 matmul operands / bf16 y2 intermediate -> looser tolerance vs f32 ref.
    np.testing.assert_allclose(np.asarray(out), np.asarray(ref), rtol=5e-2, atol=5e-2)

    print("KERNEL_OK")
</pallas_src>

<mosaic_0001>
module attributes {stable_mosaic.version = 11 : i64} {
  func.func @_conv1_stats_kernel(%arg0: i32, %arg1: memref<144x100xbf16, #tpu.memory_space<vmem>>, %arg2: memref<100x128xbf16, #tpu.memory_space<vmem>>, %arg3: memref<1x2x128xf32, #tpu.memory_space<vmem>>) attributes {dimension_semantics = [#tpu.dimension_semantics<parallel>], iteration_bounds = array<i64: 2>, scalar_prefetch = 0 : i64, scratch_operands = 0 : i64, tpu.core_type = #tpu.core_type<tc>, window_params = [{transform_indices = @transform_0, window_bounds = array<i64: 144, 100>}, {pipeline_mode = #tpu.pipeline_mode<synchronous>, transform_indices = @transform_1, window_bounds = array<i64: 100, 128>}, {transform_indices = @transform_2, window_bounds = array<i64: 1, 2, 128>}]} {
    %c0 = arith.constant 0 : index
    %c0_0 = arith.constant 0 : index
    %0 = vector.load %arg1[%c0, %c0_0] : memref<144x100xbf16, #tpu.memory_space<vmem>>, vector<144x100xbf16>
    %c0_1 = arith.constant 0 : index
    %c0_2 = arith.constant 0 : index
    %1 = vector.load %arg2[%c0_1, %c0_2] : memref<100x128xbf16, #tpu.memory_space<vmem>>, vector<100x128xbf16>
    %cst = arith.constant dense<0.000000e+00> : vector<144x128xf32>
    %2 = tpu.matmul %0, %1, %cst {dimension_numbers = #tpu.dot_dimension_numbers<[1], [0], [0], [1], [0, 0, 1, 1], [], []>} : vector<144x100xbf16>, vector<100x128xbf16>, vector<144x128xf32> -> vector<144x128xf32>
    %cst_3 = arith.constant dense<0.000000e+00> : vector<128xf32>
    %3 = vector.multi_reduction <add>, %2, %cst_3 [0] : vector<144x128xf32> to vector<128xf32>
    %4 = vector.shape_cast %3 : vector<128xf32> to vector<1x128xf32>
    %5 = arith.mulf %2, %2 : vector<144x128xf32>
    %cst_4 = arith.constant dense<0.000000e+00> : vector<128xf32>
    %6 = vector.multi_reduction <add>, %5, %cst_4 [0] : vector<144x128xf32> to vector<128xf32>
    %7 = vector.shape_cast %6 : vector<128xf32> to vector<1x128xf32>
    %8 = tpu.concatenate %4, %7 in 0 : vector<1x128xf32>, vector<1x128xf32> -> vector<2x128xf32>
    %9 = vector.shape_cast %8 : vector<2x128xf32> to vector<1x2x128xf32>
    %c0_5 = arith.constant 0 : index
    %c0_6 = arith.constant 0 : index
    %c0_7 = arith.constant 0 : index
    %10 = vector.load %arg3[%c0_5, %c0_6, %c0_7] : memref<1x2x128xf32, #tpu.memory_space<vmem>>, vector<1x2x128xf32>
    tpu.vector_store %arg3[%c0_5, %c0_6, %c0_7], %9 {strides = array<i32>} : memref<1x2x128xf32, #tpu.memory_space<vmem>>, vector<1x2x128xf32>,
    return
  }
  func.func @transform_0(%arg0: i32) -> (i32, i32) {
    %c0_i32 = arith.constant 0 : i32
    %c0_i32_0 = arith.constant 0 : i32
    return %arg0, %c0_i32 : i32, i32
  }
  func.func @transform_1(%arg0: i32) -> (i32, i32) {
    %c0_i32 = arith.constant 0 : i32
    %c0_i32_0 = arith.constant 0 : i32
    %c0_i32_1 = arith.constant 0 : i32
    return %c0_i32, %c0_i32_0 : i32, i32
  }
  func.func @transform_2(%arg0: i32) -> (i32, i32, i32) {
    %c0_i32 = arith.constant 0 : i32
    %c0_i32_0 = arith.constant 0 : i32
    %c0_i32_1 = arith.constant 0 : i32
    return %arg0, %c0_i32, %c0_i32_0 : i32, i32, i32
  }
}

module attributes {stable_mosaic.version = 11 : i64} {
  func.func @_fused_conv1_pool_conv2_kernel(%arg0: i32, %arg1: memref<144x100xbf16, #tpu.memory_space<vmem>>, %arg2: memref<100x128xbf16, #tpu.memory_space<vmem>>, %arg3: memref<2x128xf32, #tpu.memory_space<vmem>>, %arg4: memref<7x512x128xbf16, #tpu.memory_space<vmem>>, %arg5: memref<64x128xbf16, #tpu.memory_space<vmem>>, %arg6: memref<1x2x128xf32, #tpu.memory_space<vmem>>) attributes {dimension_semantics = [#tpu.dimension_semantics<parallel>], iteration_bounds = array<i64: 2>, scalar_prefetch = 0 : i64, scratch_operands = 0 : i64, tpu.core_type = #tpu.core_type<tc>, window_params = [{transform_indices = @transform_0, window_bounds = array<i64: 144, 100>}, {pipeline_mode = #tpu.pipeline_mode<synchronous>, transform_indices = @transform_1, window_bounds = array<i64: 100, 128>}, {pipeline_mode = #tpu.pipeline_mode<synchronous>, transform_indices = @transform_2, window_bounds = array<i64: 2, 128>}, {pipeline_mode = #tpu.pipeline_mode<synchronous>, transform_indices = @transform_3, window_bounds = array<i64: 7, 512, 128>}, {transform_indices = @transform_4, window_bounds = array<i64: 64, 128>}, {transform_indices = @transform_5, window_bounds = array<i64: 1, 2, 128>}]} {
    %c0 = arith.constant 0 : index
    %c0_0 = arith.constant 0 : index
    %0 = vector.load %arg1[%c0, %c0_0] : memref<144x100xbf16, #tpu.memory_space<vmem>>, vector<144x100xbf16>
    %c0_1 = arith.constant 0 : index
    %c0_2 = arith.constant 0 : index
    %1 = vector.load %arg2[%c0_1, %c0_2] : memref<100x128xbf16, #tpu.memory_space<vmem>>, vector<100x128xbf16>
    %cst = arith.constant dense<0.000000e+00> : vector<144x128xf32>
    %2 = tpu.matmul %0, %1, %cst {dimension_numbers = #tpu.dot_dimension_numbers<[1], [0], [0], [1], [0, 0, 1, 1], [], []>} : vector<144x100xbf16>, vector<100x128xbf16>, vector<144x128xf32> -> vector<144x128xf32>
    %c0_3 = arith.constant 0 : index
    %c0_4 = arith.constant 0 : index
    %3 = vector.load %arg3[%c0_3, %c0_4] : memref<2x128xf32, #tpu.memory_space<vmem>>, vector<1x128xf32>
    %4 = vector.broadcast %3 : vector<1x128xf32> to vector<144x128xf32>
    %5 = arith.mulf %2, %4 : vector<144x128xf32>
    %c1 = arith.constant 1 : index
    %c0_5 = arith.constant 0 : index
    %6 = vector.load %arg3[%c1, %c0_5] : memref<2x128xf32, #tpu.memory_space<vmem>>, vector<1x128xf32>
    %7 = vector.broadcast %6 : vector<1x128xf32> to vector<144x128xf32>
    %8 = arith.addf %5, %7 : vector<144x128xf32>
    %cst_6 = arith.constant 0.000000e+00 : f32
    %9 = vector.broadcast %cst_6 : f32 to vector<144x128xf32>
    %10 = arith.maximumf %8, %9 : vector<144x128xf32>
    %c32_i32 = arith.constant 32 : i32
    %11 = tpu.dynamic_rotate %10 by %c32_i32 dim 1 : vector<144x128xf32>, i32 -> vector<144x128xf32>
    %12 = arith.maximumf %10, %11 : vector<144x128xf32>
    %c64_i32 = arith.constant 64 : i32
    %13 = tpu.dynamic_rotate %12 by %c64_i32 dim 1 : vector<144x128xf32>, i32 -> vector<144x128xf32>
    %14 = arith.maximumf %12, %13 : vector<144x128xf32>
    %15 = arith.truncf %14 : vector<144x128xf32> to vector<144x128xbf16>
    %16 = vector.shape_cast %15 : vector<144x128xbf16> to vector<1x12x12x128xbf16>
    %cst_7 = arith.constant 0.000000e+00 : f32
    %17 = vector.broadcast %cst_7 : f32 to vector<64x128xf32>
    %18 = vector.extract_strided_slice %16 {offsets = [0, 0, 0, 0], sizes = [1, 8, 8, 128], strides = [1, 1, 1, 1]} : vector<1x12x12x128xbf16> to vector<1x8x8x128xbf16>
    %19 = vector.shape_cast %18 : vector<1x8x8x128xbf16> to vector<64x128xbf16>
    %20 = vector.extract_strided_slice %16 {offsets = [0, 0, 1, 0], sizes = [1, 8, 8, 128], strides = [1, 1, 1, 1]} : vector<1x12x12x128xbf16> to vector<1x8x8x128xbf16>
    %21 = vector.shape_cast %20 : vector<1x8x8x128xbf16> to vector<64x128xbf16>
    %22 = vector.extract_strided_slice %16 {offsets = [0, 0, 2, 0], sizes = [1, 8, 8, 128], strides = [1, 1, 1, 1]} : vector<1x12x12x128xbf16> to vector<1x8x8x128xbf16>
    %23 = vector.shape_cast %22 : vector<1x8x8x128xbf16> to vector<64x128xbf16>
    %24 = vector.extract_strided_slice %16 {offsets = [0, 0, 3, 0], sizes = [1, 8, 8, 128], strides = [1, 1, 1, 1]} : vector<1x12x12x128xbf16> to vector<1x8x8x128xbf16>
    %25 = vector.shape_cast %24 : vector<1x8x8x128xbf16> to vector<64x128xbf16>
    %26 = tpu.concatenate %19, %21, %23, %25 in 1 : vector<64x128xbf16>, vector<64x128xbf16>, vector<64x128xbf16>, vector<64x128xbf16> -> vector<64x512xbf16>
    %c0_8 = arith.constant 0 : index
    %c0_9 = arith.constant 0 : index
    %c0_10 = arith.constant 0 : index
    %27 = vector.load %arg4[%c0_8, %c0_9, %c0_10] : memref<7x512x128xbf16, #tpu.memory_space<vmem>>, vector<1x512x128xbf16>
    %28 = vector.shape_cast %27 : vector<1x512x128xbf16> to vector<512x128xbf16>
    %cst_11 = arith.constant dense<0.000000e+00> : vector<64x128xf32>
    %29 = tpu.matmul %26, %28, %cst_11 {dimension_numbers = #tpu.dot_dimension_numbers<[1], [0], [0], [1], [0, 0, 1, 1], [], []>} : vector<64x512xbf16>, vector<512x128xbf16>, vector<64x128xf32> -> vector<64x128xf32>
    %30 = arith.addf %17, %29 : vector<64x128xf32>
    %31 = vector.extract_strided_slice %16 {offsets = [0, 0, 4, 0], sizes = [1, 8, 8, 128], strides = [1, 1, 1, 1]} : vector<1x12x12x128xbf16> to vector<1x8x8x128xbf16>
    %32 = vector.shape_cast %31 : vector<1x8x8x128xbf16> to vector<64x128xbf16>
    %33 = vector.extract_strided_slice %16 {offsets = [0, 1, 0, 0], sizes = [1, 8, 8, 128], strides = [1, 1, 1, 1]} : vector<1x12x12x128xbf16> to vector<1x8x8x128xbf16>
    %34 = vector.shape_cast %33 : vector<1x8x8x128xbf16> to vector<64x128xbf16>
    %35 = vector.extract_strided_slice %16 {offsets = [0, 1, 1, 0], sizes = [1, 8, 8, 128], strides = [1, 1, 1, 1]} : vector<1x12x12x128xbf16> to vector<1x8x8x128xbf16>
    %36 = vector.shape_cast %35 : vector<1x8x8x128xbf16> to vector<64x128xbf16>
    %37 = vector.extract_strided_slice %16 {offsets = [0, 1, 2, 0], sizes = [1, 8, 8, 128], strides = [1, 1, 1, 1]} : vector<1x12x12x128xbf16> to vector<1x8x8x128xbf16>
    %38 = vector.shape_cast %37 : vector<1x8x8x128xbf16> to vector<64x128xbf16>
    %39 = tpu.concatenate %32, %34, %36, %38 in 1 : vector<64x128xbf16>, vector<64x128xbf16>, vector<64x128xbf16>, vector<64x128xbf16> -> vector<64x512xbf16>
    %c1_12 = arith.constant 1 : index
    %c0_13 = arith.constant 0 : index
    %c0_14 = arith.constant 0 : index
    %40 = vector.load %arg4[%c1_12, %c0_13, %c0_14] : memref<7x512x128xbf16, #tpu.memory_space<vmem>>, vector<1x512x128xbf16>
    %41 = vector.shape_cast %40 : vector<1x512x128xbf16> to vector<512x128xbf16>
    %cst_15 = arith.constant dense<0.000000e+00> : vector<64x128xf32>
    %42 = tpu.matmul %39, %41, %cst_15 {dimension_numbers = #tpu.dot_dimension_numbers<[1], [0], [0], [1], [0, 0, 1, 1], [], []>} : vector<64x512xbf16>, vector<512x128xbf16>, vector<64x128xf32> -> vector<64x128xf32>
    %43 = arith.addf %30, %42 : vector<64x128xf32>
    %44 = vector.extract_strided_slice %16 {offsets = [0, 1, 3, 0], sizes = [1, 8, 8, 128], strides = [1, 1, 1, 1]} : vector<1x12x12x128xbf16> to vector<1x8x8x128xbf16>
    %45 = vector.shape_cast %44 : vector<1x8x8x128xbf16> to vector<64x128xbf16>
    %46 = vector.extract_strided_slice %16 {offsets = [0, 1, 4, 0], sizes = [1, 8, 8, 128], strides = [1, 1, 1, 1]} : vector<1x12x12x128xbf16> to vector<1x8x8x128xbf16>
    %47 = vector.shape_cast %46 : vector<1x8x8x128xbf16> to vector<64x128xbf16>
    %48 = vector.extract_strided_slice %16 {offsets = [0, 2, 0, 0], sizes = [1, 8, 8, 128], strides = [1, 1, 1, 1]} : vector<1x12x12x128xbf16> to vector<1x8x8x128xbf16>
    %49 = vector.shape_cast %48 : vector<1x8x8x128xbf16> to vector<64x128xbf16>
    %50 = vector.extract_strided_slice %16 {offsets = [0, 2, 1, 0], sizes = [1, 8, 8, 128], strides = [1, 1, 1, 1]} : vector<1x12x12x128xbf16> to vector<1x8x8x128xbf16>
    %51 = vector.shape_cast %50 : vector<1x8x8x128xbf16> to vector<64x128xbf16>
    %52 = tpu.concatenate %45, %47, %49, %51 in 1 : vector<64x128xbf16>, vector<64x128xbf16>, vector<64x128xbf16>, vector<64x128xbf16> -> vector<64x512xbf16>
    %c2 = arith.constant 2 : index
    %c0_16 = arith.constant 0 : index
    %c0_17 = arith.constant 0 : index
    %53 = vector.load %arg4[%c2, %c0_16, %c0_17] : memref<7x512x128xbf16, #tpu.memory_space<vmem>>, vector<1x512x128xbf16>
    %54 = vector.shape_cast %53 : vector<1x512x128xbf16> to vector<512x128xbf16>
    %cst_18 = arith.constant dense<0.000000e+00> : vector<64x128xf32>
    %55 = tpu.matmul %52, %54, %cst_18 {dimension_numbers = #tpu.dot_dimension_numbers<[1], [0], [0], [1], [0, 0, 1, 1], [], []>} : vector<64x512xbf16>, vector<512x128xbf16>, vector<64x128xf32> -> vector<64x128xf32>
    %56 = arith.addf %43, %55 : vector<64x128xf32>
    %57 = vector.extract_strided_slice %16 {offsets = [0, 2, 2, 0], sizes = [1, 8, 8, 128], strides = [1, 1, 1, 1]} : vector<1x12x12x128xbf16> to vector<1x8x8x128xbf16>
    %58 = vector.shape_cast %57 : vector<1x8x8x128xbf16> to vector<64x128xbf16>
    %59 = vector.extract_strided_slice %16 {offsets = [0, 2, 3, 0], sizes = [1, 8, 8, 128], strides = [1, 1, 1, 1]} : vector<1x12x12x128xbf16> to vector<1x8x8x128xbf16>
    %60 = vector.shape_cast %59 : vector<1x8x8x128xbf16> to vector<64x128xbf16>
    %61 = vector.extract_strided_slice %16 {offsets = [0, 2, 4, 0], sizes = [1, 8, 8, 128], strides = [1, 1, 1, 1]} : vector<1x12x12x128xbf16> to vector<1x8x8x128xbf16>
    %62 = vector.shape_cast %61 : vector<1x8x8x128xbf16> to vector<64x128xbf16>
    %63 = vector.extract_strided_slice %16 {offsets = [0, 3, 0, 0], sizes = [1, 8, 8, 128], strides = [1, 1, 1, 1]} : vector<1x12x12x128xbf16> to vector<1x8x8x128xbf16>
    %64 = vector.shape_cast %63 : vector<1x8x8x128xbf16> to vector<64x128xbf16>
    %65 = tpu.concatenate %58, %60, %62, %64 in 1 : vector<64x128xbf16>, vector<64x128xbf16>, vector<64x128xbf16>, vector<64x128xbf16> -> vector<64x512xbf16>
    %c3 = arith.constant 3 : index
    %c0_19 = arith.constant 0 : index
    %c0_20 = arith.constant 0 : index
    %66 = vector.load %arg4[%c3, %c0_19, %c0_20] : memref<7x512x128xbf16, #tpu.memory_space<vmem>>, vector<1x512x128xbf16>
    %67 = vector.shape_cast %66 : vector<1x512x128xbf16> to vector<512x128xbf16>
    %cst_21 = arith.constant dense<0.000000e+00> : vector<64x128xf32>
    %68 = tpu.matmul %65, %67, %cst_21 {dimension_numbers = #tpu.dot_dimension_numbers<[1], [0], [0], [1], [0, 0, 1, 1], [], []>} : vector<64x512xbf16>, vector<512x128xbf16>, vector<64x128xf32> -> vector<64x128xf32>
    %69 = arith.addf %56, %68 : vector<64x128xf32>
    %70 = vector.extract_strided_slice %16 {offsets = [0, 3, 1, 0], sizes = [1, 8, 8, 128], strides = [1, 1, 1, 1]} : vector<1x12x12x128xbf16> to vector<1x8x8x128xbf16>
    %71 = vector.shape_cast %70 : vector<1x8x8x128xbf16> to vector<64x128xbf16>
    %72 = vector.extract_strided_slice %16 {offsets = [0, 3, 2, 0], sizes = [1, 8, 8, 128], strides = [1, 1, 1, 1]} : vector<1x12x12x128xbf16> to vector<1x8x8x128xbf16>
    %73 = vector.shape_cast %72 : vector<1x8x8x128xbf16> to vector<64x128xbf16>
    %74 = vector.extract_strided_slice %16 {offsets = [0, 3, 3, 0], sizes = [1, 8, 8, 128], strides = [1, 1, 1, 1]} : vector<1x12x12x128xbf16> to vector<1x8x8x128xbf16>
    %75 = vector.shape_cast %74 : vector<1x8x8x128xbf16> to vector<64x128xbf16>
    %76 = vector.extract_strided_slice %16 {offsets = [0, 3, 4, 0], sizes = [1, 8, 8, 128], strides = [1, 1, 1, 1]} : vector<1x12x12x128xbf16> to vector<1x8x8x128xbf16>
    %77 = vector.shape_cast %76 : vector<1x8x8x128xbf16> to vector<64x128xbf16>
    %78 = tpu.concatenate %71, %73, %75, %77 in 1 : vector<64x128xbf16>, vector<64x128xbf16>, vector<64x128xbf16>, vector<64x128xbf16> -> vector<64x512xbf16>
    %c4 = arith.constant 4 : index
    %c0_22 = arith.constant 0 : index
    %c0_23 = arith.constant 0 : index
    %79 = vector.load %arg4[%c4, %c0_22, %c0_23] : memref<7x512x128xbf16, #tpu.memory_space<vmem>>, vector<1x512x128xbf16>
    %80 = vector.shape_cast %79 : vector<1x512x128xbf16> to vector<512x128xbf16>
    %cst_24 = arith.constant dense<0.000000e+00> : vector<64x128xf32>
    %81 = tpu.matmul %78, %80, %cst_24 {dimension_numbers = #tpu.dot_dimension_numbers<[1], [0], [0], [1], [0, 0, 1, 1], [], []>} : vector<64x512xbf16>, vector<512x128xbf16>, vector<64x128xf32> -> vector<64x128xf32>
    %82 = arith.addf %69, %81 : vector<64x128xf32>
    %83 = vector.extract_strided_slice %16 {offsets = [0, 4, 0, 0], sizes = [1, 8, 8, 128], strides = [1, 1, 1, 1]} : vector<1x12x12x128xbf16> to vector<1x8x8x128xbf16>
    %84 = vector.shape_cast %83 : vector<1x8x8x128xbf16> to vector<64x128xbf16>
    %85 = vector.extract_strided_slice %16 {offsets = [0, 4, 1, 0], sizes = [1, 8, 8, 128], strides = [1, 1, 1, 1]} : vector<1x12x12x128xbf16> to vector<1x8x8x128xbf16>
    %86 = vector.shape_cast %85 : vector<1x8x8x128xbf16> to vector<64x128xbf16>
    %87 = vector.extract_strided_slice %16 {offsets = [0, 4, 2, 0], sizes = [1, 8, 8, 128], strides = [1, 1, 1, 1]} : vector<1x12x12x128xbf16> to vector<1x8x8x128xbf16>
    %88 = vector.shape_cast %87 : vector<1x8x8x128xbf16> to vector<64x128xbf16>
    %89 = vector.extract_strided_slice %16 {offsets = [0, 4, 3, 0], sizes = [1, 8, 8, 128], strides = [1, 1, 1, 1]} : vector<1x12x12x128xbf16> to vector<1x8x8x128xbf16>
    %90 = vector.shape_cast %89 : vector<1x8x8x128xbf16> to vector<64x128xbf16>
    %91 = tpu.concatenate %84, %86, %88, %90 in 1 : vector<64x128xbf16>, vector<64x128xbf16>, vector<64x128xbf16>, vector<64x128xbf16> -> vector<64x512xbf16>
    %c5 = arith.constant 5 : index
    %c0_25 = arith.constant 0 : index
    %c0_26 = arith.constant 0 : index
    %92 = vector.load %arg4[%c5, %c0_25, %c0_26] : memref<7x512x128xbf16, #tpu.memory_space<vmem>>, vector<1x512x128xbf16>
    %93 = vector.shape_cast %92 : vector<1x512x128xbf16> to vector<512x128xbf16>
    %cst_27 = arith.constant dense<0.000000e+00> : vector<64x128xf32>
    %94 = tpu.matmul %91, %93, %cst_27 {dimension_numbers = #tpu.dot_dimension_numbers<[1], [0], [0], [1], [0, 0, 1, 1], [], []>} : vector<64x512xbf16>, vector<512x128xbf16>, vector<64x128xf32> -> vector<64x128xf32>
    %95 = arith.addf %82, %94 : vector<64x128xf32>
    %96 = vector.extract_strided_slice %16 {offsets = [0, 4, 4, 0], sizes = [1, 8, 8, 128], strides = [1, 1, 1, 1]} : vector<1x12x12x128xbf16> to vector<1x8x8x128xbf16>
    %97 = vector.shape_cast %96 : vector<1x8x8x128xbf16> to vector<64x128xbf16>
    %c6 = arith.constant 6 : index
    %c0_28 = arith.constant 0 : index
    %c0_29 = arith.constant 0 : index
    %98 = vector.load %arg4[%c6, %c0_28, %c0_29] : memref<7x512x128xbf16, #tpu.memory_space<vmem>>, vector<1x128x128xbf16>
    %99 = vector.shape_cast %98 : vector<1x128x128xbf16> to vector<128x128xbf16>
    %cst_30 = arith.constant dense<0.000000e+00> : vector<64x128xf32>
    %100 = tpu.matmul %97, %99, %cst_30 {dimension_numbers = #tpu.dot_dimension_numbers<[1], [0], [0], [1], [0, 0, 1, 1], [], []>} : vector<64x128xbf16>, vector<128x128xbf16>, vector<64x128xf32> -> vector<64x128xf32>
    %101 = arith.addf %95, %100 : vector<64x128xf32>
    %102 = arith.truncf %101 : vector<64x128xf32> to vector<64x128xbf16>
    %c0_31 = arith.constant 0 : index
    %c0_32 = arith.constant 0 : index
    %103 = vector.load %arg5[%c0_31, %c0_32] : memref<64x128xbf16, #tpu.memory_space<vmem>>, vector<64x128xbf16>
    tpu.vector_store %arg5[%c0_31, %c0_32], %102 {strides = array<i32>} : memref<64x128xbf16, #tpu.memory_space<vmem>>, vector<64x128xbf16>,
    %cst_33 = arith.constant dense<0.000000e+00> : vector<128xf32>
    %104 = vector.multi_reduction <add>, %101, %cst_33 [0] : vector<64x128xf32> to vector<128xf32>
    %105 = vector.shape_cast %104 : vector<128xf32> to vector<1x128xf32>
    %106 = arith.mulf %101, %101 : vector<64x128xf32>
    %cst_34 = arith.constant dense<0.000000e+00> : vector<128xf32>
    %107 = vector.multi_reduction <add>, %106, %cst_34 [0] : vector<64x128xf32> to vector<128xf32>
    %108 = vector.shape_cast %107 : vector<128xf32> to vector<1x128xf32>
    %109 = tpu.concatenate %105, %108 in 0 : vector<1x128xf32>, vector<1x128xf32> -> vector<2x128xf32>
    %110 = vector.shape_cast %109 : vector<2x128xf32> to vector<1x2x128xf32>
    %c0_35 = arith.constant 0 : index
    %c0_36 = arith.constant 0 : index
    %c0_37 = arith.constant 0 : index
    %111 = vector.load %arg6[%c0_35, %c0_36, %c0_37] : memref<1x2x128xf32, #tpu.memory_space<vmem>>, vector<1x2x128xf32>
    tpu.vector_store %arg6[%c0_35, %c0_36, %c0_37], %110 {strides = array<i32>} : memref<1x2x128xf32, #tpu.memory_space<vmem>>, vector<1x2x128xf32>,
    return
  }
  func.func @transform_0(%arg0: i32) -> (i32, i32) {
    %c0_i32 = arith.constant 0 : i32
    %c0_i32_0 = arith.constant 0 : i32
    return %arg0, %c0_i32 : i32, i32
  }
  func.func @transform_1(%arg0: i32) -> (i32, i32) {
    %c0_i32 = arith.constant 0 : i32
    %c0_i32_0 = arith.constant 0 : i32
    %c0_i32_1 = arith.constant 0 : i32
    return %c0_i32, %c0_i32_0 : i32, i32
  }
  func.func @transform_2(%arg0: i32) -> (i32, i32) {
    %c0_i32 = arith.constant 0 : i32
    %c0_i32_0 = arith.constant 0 : i32
    %c0_i32_1 = arith.constant 0 : i32
    return %c0_i32, %c0_i32_0 : i32, i32
  }
  func.func @transform_3(%arg0: i32) -> (i32, i32, i32) {
    %c0_i32 = arith.constant 0 : i32
    %c0_i32_0 = arith.constant 0 : i32
    %c0_i32_1 = arith.constant 0 : i32
    %c0_i32_2 = arith.constant 0 : i32
    return %c0_i32, %c0_i32_0, %c0_i32_1 : i32, i32, i32
  }
  func.func @transform_4(%arg0: i32) -> (i32, i32) {
    %c0_i32 = arith.constant 0 : i32
    %c0_i32_0 = arith.constant 0 : i32
    return %arg0, %c0_i32 : i32, i32
  }
  func.func @transform_5(%arg0: i32) -> (i32, i32, i32) {
    %c0_i32 = arith.constant 0 : i32
    %c0_i32_0 = arith.constant 0 : i32
    %c0_i32_1 = arith.constant 0 : i32
    return %arg0, %c0_i32, %c0_i32_0 : i32, i32, i32
  }
}

module attributes {stable_mosaic.version = 11 : i64} {
  func.func @_bn2_relu_pool_kernel(%arg0: i32, %arg1: memref<64x128xbf16, #tpu.memory_space<vmem>>, %arg2: memref<2x128xf32, #tpu.memory_space<vmem>>, %arg3: memref<1x4x4x128xf32, #tpu.memory_space<vmem>>) attributes {dimension_semantics = [#tpu.dimension_semantics<parallel>], iteration_bounds = array<i64: 2>, scalar_prefetch = 0 : i64, scratch_operands = 0 : i64, tpu.core_type = #tpu.core_type<tc>, window_params = [{transform_indices = @transform_0, window_bounds = array<i64: 64, 128>}, {pipeline_mode = #tpu.pipeline_mode<synchronous>, transform_indices = @transform_1, window_bounds = array<i64: 2, 128>}, {transform_indices = @transform_2, window_bounds = array<i64: 1, 4, 4, 128>}]} {
    %c0 = arith.constant 0 : index
    %c0_0 = arith.constant 0 : index
    %0 = vector.load %arg1[%c0, %c0_0] : memref<64x128xbf16, #tpu.memory_space<vmem>>, vector<64x128xbf16>
    %1 = arith.extf %0 : vector<64x128xbf16> to vector<64x128xf32>
    %c0_1 = arith.constant 0 : index
    %c0_2 = arith.constant 0 : index
    %2 = vector.load %arg2[%c0_1, %c0_2] : memref<2x128xf32, #tpu.memory_space<vmem>>, vector<1x128xf32>
    %3 = vector.broadcast %2 : vector<1x128xf32> to vector<64x128xf32>
    %4 = arith.mulf %1, %3 : vector<64x128xf32>
    %c1 = arith.constant 1 : index
    %c0_3 = arith.constant 0 : index
    %5 = vector.load %arg2[%c1, %c0_3] : memref<2x128xf32, #tpu.memory_space<vmem>>, vector<1x128xf32>
    %6 = vector.broadcast %5 : vector<1x128xf32> to vector<64x128xf32>
    %7 = arith.addf %4, %6 : vector<64x128xf32>
    %cst = arith.constant 0.000000e+00 : f32
    %8 = vector.broadcast %cst : f32 to vector<64x128xf32>
    %9 = arith.maximumf %7, %8 : vector<64x128xf32>
    %10 = vector.shape_cast %9 : vector<64x128xf32> to vector<1x4x2x8x128xf32>
    %cst_4 = arith.constant dense<0xFF800000> : vector<1x4x8x128xf32>
    %11 = vector.multi_reduction <maximumf>, %10, %cst_4 [2] : vector<1x4x2x8x128xf32> to vector<1x4x8x128xf32>
    %12 = vector.shape_cast %11 : vector<1x4x8x128xf32> to vector<1x4x4x2x128xf32>
    %cst_5 = arith.constant dense<0xFF800000> : vector<1x4x4x128xf32>
    %13 = vector.multi_reduction <maximumf>, %12, %cst_5 [3] : vector<1x4x4x2x128xf32> to vector<1x4x4x128xf32>
    %c0_6 = arith.constant 0 : index
    %c0_7 = arith.constant 0 : index
    %c0_8 = arith.constant 0 : index
    %c0_9 = arith.constant 0 : index
    %14 = vector.load %arg3[%c0_6, %c0_7, %c0_8, %c0_9] : memref<1x4x4x128xf32, #tpu.memory_space<vmem>>, vector<1x4x4x128xf32>
    tpu.vector_store %arg3[%c0_6, %c0_7, %c0_8, %c0_9], %13 {strides = array<i32>} : memref<1x4x4x128xf32, #tpu.memory_space<vmem>>, vector<1x4x4x128xf32>,
    return
  }
  func.func @transform_0(%arg0: i32) -> (i32, i32) {
    %c0_i32 = arith.constant 0 : i32
    %c0_i32_0 = arith.constant 0 : i32
    return %arg0, %c0_i32 : i32, i32
  }
  func.func @transform_1(%arg0: i32) -> (i32, i32) {
    %c0_i32 = arith.constant 0 : i32
    %c0_i32_0 = arith.constant 0 : i32
    %c0_i32_1 = arith.constant 0 : i32
    return %c0_i32, %c0_i32_0 : i32, i32
  }
  func.func @transform_2(%arg0: i32) -> (i32, i32, i32, i32) {
    %c0_i32 = arith.constant 0 : i32
    %c0_i32_0 = arith.constant 0 : i32
    %c0_i32_1 = arith.constant 0 : i32
    %c0_i32_2 = arith.constant 0 : i32
    return %arg0, %c0_i32, %c0_i32_0, %c0_i32_1 : i32, i32, i32, i32
  }
}

</mosaic_0001>

<llo_original>
// kernel: netf_forward.3
$region0: #{netf_forward.3}
  #allocation0 [shape = 'u32[]', space=smem, size = 0x4, offset = 0x4, fixed_abs, tag = 'smem constant byte address 0x4 - core index']
  #allocation1 [shape = 'u32[144,128]{1,0:T(1,128)}', space=vmem, size = 0x12000, scoped, tag = 'internal scratch']
  %s0 = inlined_call_operand.vmem [shape: bf16[288,100], index: 0, kind: input, shape index: {}]
  %s1 = inlined_call_operand.vmem [shape: bf16[100,128], index: 1, kind: input, shape index: {}]
  %s2 = inlined_call_operand.vmem [shape: f32[2,2,128], index: 2, kind: output, shape index: {}]
  %s3 = sld [smem:[#allocation0]]
  $region41: #{netf_forward.3} parent=0
    _
  %s5 = ssub.s32 1, %s3
  %s6 = scalar_select 0, %s5, %s3
  loop: start=0, step=1, limit=4
  $region2: #{netf_forward.3} parent=0 // loop_pre_header
    _
  $region3: #{netf_forward.3} parent=0 // loop_header
    %s8 = sphi 0, %s12
    %p9 = scmp.ge.s32.totalorder %s8, 4
    %s18 = sphi 0, %s20
    %s21 = sphi 0, %s18
    %s22 = sphi 0, %s21
    %s38 = sphi 0, %s22
    %s42 = sphi 0, %s42
    %s44 = sphi 0, %s42
    %s45 = sphi 0, %s44
    %s59 = sphi 0, %s45
    %s65 = sphi 0, %s67
    %s68 = sphi 0, %s65
    %s69 = sphi 0, %s68
    %s85 = sphi 0, %s69
  $region4: #{netf_forward.3} parent=0 // loop_header_branch
    %11 = sbr.rel (%p9) target = $region8
  $region5: #{netf_forward.3} parent=0 // loop_body
    %s13 = ssub.s32 %s8, 1
    %s14 = ssub.s32 %s8, 2
    %s15 = sadd.s32 %s8, 1
    %s16 = ssub.s32 %s8, %s15
    %p17 = scmp.eq.s32.totalorder %s16, 0
    %s19 = sadd.s32 %s18, 1
    %s20 = scalar_select %p17, %s18, %s19
    %p23 = pneg %p17
    %p24 = scmp.eq.s32.totalorder %s8, 1
    %p25 = por %p23, %p24
    %p26 = scmp.ne.s32.totalorder %s18, %s21
    %p27 = scmp.eq.s32.totalorder %s8, 0
    %p28 = por %p26, %p27
    %p29 = scmp.ne.s32.totalorder %s18, %s21
    %p30 = scmp.eq.s32.totalorder %s13, 1
    %p31 = por %p29, %p30
    %p32 = scmp.ne.s32.totalorder %s21, %s22
    %p33 = scmp.eq.s32.totalorder %s13, 0
    %p34 = por %p32, %p33
    %p35 = scmp.ne.s32.totalorder %s21, %s22
    %p36 = scmp.eq.s32.totalorder %s14, 1
    %p37 = por %p35, %p36
    %p39 = scmp.ne.s32.totalorder %s22, %s38
    %p40 = scmp.eq.s32.totalorder %s14, 0
    %p41 = por %p39, %p40
    %s43 = sadd.s32 %s42, 1
    %p46 = scmp.eq.s32.totalorder %s8, 1
    %p47 = scmp.ne.s32.totalorder %s42, %s44
    %p48 = scmp.eq.s32.totalorder %s8, 0
    %p49 = por %p47, %p48
    %p50 = scmp.ne.s32.totalorder %s42, %s44
    %p51 = scmp.eq.s32.totalorder %s13, 1
    %p52 = por %p50, %p51
    %p53 = scmp.ne.s32.totalorder %s44, %s45
    %p54 = scmp.eq.s32.totalorder %s13, 0
    %p55 = por %p53, %p54
    %p56 = scmp.ne.s32.totalorder %s44, %s45
    %p57 = scmp.eq.s32.totalorder %s14, 1
    %p58 = por %p56, %p57
    %p60 = scmp.ne.s32.totalorder %s45, %s59
    %p61 = scmp.eq.s32.totalorder %s14, 0
    %p62 = por %p60, %p61
    %s63 = ssub.s32 %s8, %s15
    %p64 = scmp.eq.s32.totalorder %s63, 0
    %s66 = sadd.s32 %s65, 1
    %s67 = scalar_select %p64, %s65, %s66
    %p70 = pneg %p64
    %p71 = scmp.eq.s32.totalorder %s8, 1
    %p72 = por %p70, %p71
    %p73 = scmp.ne.s32.totalorder %s65, %s68
    %p74 = scmp.eq.s32.totalorder %s8, 0
    %p75 = por %p73, %p74
    %p76 = scmp.ne.s32.totalorder %s65, %s68
    %p77 = scmp.eq.s32.totalorder %s13, 1
    %p78 = por %p76, %p77
    %p79 = scmp.ne.s32.totalorder %s68, %s69
    %p80 = scmp.eq.s32.totalorder %s13, 0
    %p81 = por %p79, %p80
    %p82 = scmp.ne.s32.totalorder %s68, %s69
    %p83 = scmp.eq.s32.totalorder %s14, 1
    %p84 = por %p82, %p83
    %p86 = scmp.ne.s32.totalorder %s69, %s85
    %p87 = scmp.eq.s32.totalorder %s14, 0
    %p88 = por %p86, %p87
    %p89 = scmp.le.s32.totalorder 1, %s8
    %p90 = scmp.lt.s32.totalorder %s8, 3
    %p91 = pnand %p89, %p90
    %p92 = pneg %p91
    // Predicated region
    $region9: #{netf_forward.3} parent=5 // pred_check
      _
    $region10: #{netf_forward.3} parent=5 // pred_check_branch
      %94 = sbr.rel (%p91) target = $region12
    $region11: #{netf_forward.3} parent=5 // pred_region
      %s95 = ssub.s32 %s8, 1
      // Predicated region
      $region13: #{netf_forward.3} parent=11 // pred_check
        %p96 = pneg %p55
      $region14: #{netf_forward.3} parent=11 // pred_check_branch
        %98 = sbr.rel (%p96) target = $region16
      $region15: #{netf_forward.3} parent=11 // pred_region
        _
      $region16: #{netf_forward.3} parent=11 // pred_fallthru
        _
    $region12: #{netf_forward.3} parent=5 // pred_fallthru
      _
    %p99 = scmp.lt.s32.totalorder %s8, 2
    // Predicated region
    $region17: #{netf_forward.3} parent=5 // pred_check
      %p100 = pneg %p99
    $region18: #{netf_forward.3} parent=5 // pred_check_branch
      %102 = sbr.rel (%p100) target = $region20
    $region19: #{netf_forward.3} parent=5 // pred_region
      // Predicated region
      $region21: #{netf_forward.3} parent=19 // pred_check
        %p103 = pneg %p28
      $region22: #{netf_forward.3} parent=19 // pred_check_branch
        %105 = sbr.rel (%p103) target = $region24
      $region23: #{netf_forward.3} parent=19 // pred_region
        %s106 = smul.u32 18, %s8
        %p107 = scmp.lt.s32.totalorder %s106, 35
        %s108 = scalar_select %p107, %s106, 35
        %s109 = smul.addr %s108, 4
        %s110 = scalar_lea.vmem %s0, %s109
        %s111 = smul.u32 18, %s8
      $region24: #{netf_forward.3} parent=19 // pred_fallthru
        _
    $region20: #{netf_forward.3} parent=5 // pred_fallthru
      _
    %p112 = scmp.le.s32.totalorder 1, %s8
    %p113 = scmp.lt.s32.totalorder %s8, 3
    %p114 = pnand %p112, %p113
    %p115 = pneg %p114
    // Predicated region
    $region25: #{netf_forward.3} parent=5 // pred_check
      _
    $region26: #{netf_forward.3} parent=5 // pred_check_branch
      %117 = sbr.rel (%p114) target = $region28
    $region27: #{netf_forward.3} parent=5 // pred_region
      %s118 = ssub.s32 %s8, 1
      %s119 = smul.u32 18, %s13
      %p120 = scmp.lt.s32.totalorder %s119, 35
      %s121 = scalar_select %p120, %s119, 35
      %s122 = smul.addr %s121, 4
      %s123 = scalar_lea.vmem %s0, %s122
      %p124 = pneg %p34
      %p125 = pneg %p31
      %p126 = pneg %p55
      %p127 = pneg %p52
      %p128 = pneg %p81
      %p129 = pneg %p78
      %p130 = scmp.lt.s32.totalorder %s13, 1
      %s131 = scalar_select %p130, %s13, 1
      %s132 = smul.addr %s131, 2
      %s133 = scalar_lea.vmem %s2, %s132
      %s134 = smul.u32 18, %s13
      %p135 = scmp.lt.s32.totalorder %s134, 35
      %s136 = scalar_select %p135, %s134, 35
      %s137 = smul.addr %s136, 4
      %s138 = scalar_lea.vmem %s0, %s137
      %s139 = smul.u32 18, %s13
      %p140 = scmp.lt.s32.totalorder %s13, 1
      %s141 = scalar_select %p140, %s13, 1
      %s142 = smul.addr %s141, 2
      %s143 = scalar_lea.vmem %s2, %s142
      %v145 = vld [vmem:[%s138] sm:$0xf]
      %v146 = vld [vmem:[%s138 + $0x4] sm:$0xf]
      %v147 = vld [vmem:[%s138 + $0x8] sm:$0xf]
      %v148 = vld [vmem:[%s138 + $0xc] sm:$0xf]
      %v149 = vld [vmem:[%s138 + $0x10] sm:$0xf]
      %v150 = vld [vmem:[%s138 + $0x14] sm:$0xf]
      %v151 = vld [vmem:[%s138 + $0x18] sm:$0xf]
      %v152 = vld [vmem:[%s138 + $0x1c] sm:$0xf]
      %v153 = vld [vmem:[%s138 + $0x20] sm:$0xf]
      %v154 = vld [vmem:[%s138 + $0x24] sm:$0xf]
      %v155 = vld [vmem:[%s138 + $0x28] sm:$0xf]
      %v156 = vld [vmem:[%s138 + $0x2c] sm:$0xf]
      %v157 = vld [vmem:[%s138 + $0x30] sm:$0xf]
      %v158 = vld [vmem:[%s138 + $0x34] sm:$0xf]
      %v159 = vld [vmem:[%s138 + $0x38] sm:$0xf]
      %v160 = vld [vmem:[%s138 + $0x3c] sm:$0xf]
      %v161 = vld [vmem:[%s138 + $0x40] sm:$0xf]
      %v162 = vld [vmem:[%s138 + $0x44] sm:$0xf]
      %v163 = vld [vmem:[%s1] sm:$0xf]
      %v164 = vld [vmem:[%s1 + $0x4] sm:$0xf]
      %v165 = vld [vmem:[%s1 + $0x8] sm:$0xf]
      %v166 = vld [vmem:[%s1 + $0xc] sm:$0xf]
      %v167 = vld [vmem:[%s1 + $0x10] sm:$0xf]
      %v168 = vld [vmem:[%s1 + $0x14] sm:$0xf]
      %v169 = vld [vmem:[%s1 + $0x18] sm:$0xf]
      %v170 = vld [vmem:[%s1 + $0x1c] sm:$0xf]
      %v171 = vld [vmem:[%s1 + $0x20] sm:$0xf]
      %v172 = vld [vmem:[%s1 + $0x24] sm:$0xf]
      %v173 = vld [vmem:[%s1 + $0x28] sm:$0xf]
      %v174 = vld [vmem:[%s1 + $0x2c] sm:$0xf]
      %v175 = vld [vmem:[%s1 + $0x30] sm:$0x3]
      %v194 = vunpack.c.l.b16 %v145
      %v195 = vunpack.c.l.b16 %v146
      %v196 = vunpack.c.l.b16 %v147
      %v197 = vunpack.c.l.b16 %v148
      %v198 = vunpack.c.l.b16 %v149
      %v199 = vunpack.c.l.b16 %v150
      %v200 = vunpack.c.l.b16 %v151
      %v201 = vunpack.c.l.b16 %v152
      %v202 = vunpack.c.l.b16 %v153
      %v203 = vunpack.c.l.b16 %v154
      %v204 = vunpack.c.l.b16 %v155
      %v205 = vunpack.c.l.b16 %v156
      %v206 = vunpack.c.l.b16 %v157
      %v207 = vunpack.c.l.b16 %v158
      %v208 = vunpack.c.l.b16 %v159
      %v209 = vunpack.c.l.b16 %v160
      %v210 = vunpack.c.l.b16 %v161
      %v211 = vunpack.c.l.b16 %v162
      %v212 = vpack.c.b16 %v195, %v194
      %v213 = vpack.c.b16 %v197, %v196
      %v214 = vpack.c.b16 %v199, %v198
      %v215 = vpack.c.b16 %v201, %v200
      %v216 = vpack.c.b16 %v203, %v202
      %v217 = vpack.c.b16 %v205, %v204
      %v218 = vpack.c.b16 %v207, %v206
      %v219 = vpack.c.b16 %v209, %v208
      %v220 = vpack.c.b16 %v211, %v210
      %v234 = vunpack.c.l.b16 %v163
      %v235 = vunpack.c.l.b16 %v164
      %v236 = vunpack.c.l.b16 %v165
      %v237 = vunpack.c.l.b16 %v166
      %v238 = vunpack.c.l.b16 %v167
      %v239 = vunpack.c.l.b16 %v168
      %v240 = vunpack.c.l.b16 %v169
      %v241 = vunpack.c.l.b16 %v170
      %v242 = vunpack.c.l.b16 %v171
      %v243 = vunpack.c.l.b16 %v172
      %v244 = vunpack.c.l.b16 %v173
      %v245 = vunpack.c.l.b16 %v174
      %v246 = vunpack.c.l.b16 %v175
      %v247 = vpack.c.b16 %v235, %v234
      %v248 = vpack.c.b16 %v237, %v236
      %v249 = vpack.c.b16 %v239, %v238
      %v250 = vpack.c.b16 %v241, %v240
      %v251 = vpack.c.b16 %v243, %v242
      %v252 = vpack.c.b16 %v245, %v244
      %v253 = vpack.c.b16 %v246, %v246
      %vm260 = vcmask 818176
      %v262 = vsel %vm260, %v212, 0
      %v265 = vsel %vm260, %v213, 0
      %v268 = vsel %vm260, %v214, 0
      %v271 = vsel %vm260, %v215, 0
      %v274 = vsel %vm260, %v216, 0
      %v277 = vsel %vm260, %v217, 0
      %v280 = vsel %vm260, %v218, 0
      %v283 = vsel %vm260, %v219, 0
      %v286 = vsel %vm260, %v220, 0
      %vm288 = vcmask 1041408
      %v290 = vsel %vm288, %v253, 0
      %292 = vmatprep.subr.bf16.mxu0 0
      %293 = vmatpush1.bf16.msra.mxu0 %v247
      %294 = vmatprep.subr.bf16.mxu0 0
      %295 = vmatpush1.bf16.msra.mxu0 %v248
      %296 = vmatprep.subr.bf16.mxu0 0
      %297 = vmatpush1.bf16.msra.mxu0 %v249
      %298 = vmatprep.subr.bf16.mxu0 0
      %299 = vmatpush1.bf16.msra.mxu0 %v250
      %300 = vmatprep.subr.bf16.mxu0 0
      %301 = vmatpush1.bf16.msra.mxu0 %v251
      %302 = vmatprep.subr.bf16.mxu0 0
      %303 = vmatpush1.bf16.msra.mxu0 %v252
      %304 = vmatprep.subr.bf16.mxu0 0
      %305 = vmatpush1.bf16.msra.mxu0 %v290
      %306 = vmatprep.subr.bf16.mxu0 0
      %307 = vmatpush1.bf16.msra.mxu0 0
      %308 = vmatprep.subr.bf16.mxu0 0
      %309 = vmatpush1.bf16.msra.mxu0 0
      %310 = vmatprep.subr.bf16.mxu0 0
      %311 = vmatpush1.bf16.msra.mxu0 0
      %312 = vmatprep.subr.bf16.mxu0 0
      %313 = vmatpush1.bf16.msra.mxu0 0
      %314 = vmatprep.subr.bf16.mxu0 0
      %315 = vmatpush1.bf16.msra.mxu0 0
      %316 = vmatprep.subr.bf16.mxu0 0
      %317 = vmatpush1.bf16.msra.mxu0 0
      %318 = vmatprep.subr.bf16.mxu0 0
      %319 = vmatpush1.bf16.msra.mxu0 0
      %320 = vmatprep.subr.bf16.mxu0 0
      %321 = vmatpush1.bf16.msra.mxu0 0
      %322 = vmatprep.subr.bf16.mxu0 0
      %323 = vmatpush1.bf16.msra.mxu0 0
      %324 = vmatprep.mubr.bf16.mxu0 0
      %325 = vmatmul.mubr.bf16.gmra.mrb[0].mxu0 %v262
      %v326 = vpop.f32.mrb[0].mxu0
      %v327 = vadd.f32 0.0, %v326
      %v328 = vpop.f32.mrb[0].mxu0
      %v329 = vpop.f32.mrb[0].mxu0
      %v330 = vadd.f32 0.0, %v329
      %v331 = vpop.f32.mrb[0].mxu0
      %332 = vmatprep.mubr.bf16.mxu0 0
      %333 = vmatmul.mubr.bf16.gmra.mrb[0].mxu0 %v265
      %v334 = vpop.f32.mrb[0].mxu0
      %v335 = vadd.f32 0.0, %v334
      %v336 = vpop.f32.mrb[0].mxu0
      %v337 = vpop.f32.mrb[0].mxu0
      %v338 = vadd.f32 0.0, %v337
      %v339 = vpop.f32.mrb[0].mxu0
      %340 = vmatprep.mubr.bf16.mxu0 0
      %341 = vmatmul.mubr.bf16.gmra.mrb[0].mxu0 %v268
      %v342 = vpop.f32.mrb[0].mxu0
      %v343 = vadd.f32 0.0, %v342
      %v344 = vpop.f32.mrb[0].mxu0
      %v345 = vpop.f32.mrb[0].mxu0
      %v346 = vadd.f32 0.0, %v345
      %v347 = vpop.f32.mrb[0].mxu0
      %348 = vmatprep.mubr.bf16.mxu0 0
      %349 = vmatmul.mubr.bf16.gmra.mrb[0].mxu0 %v271
      %v350 = vpop.f32.mrb[0].mxu0
      %v351 = vadd.f32 0.0, %v350
      %v352 = vpop.f32.mrb[0].mxu0
      %v353 = vpop.f32.mrb[0].mxu0
      %v354 = vadd.f32 0.0, %v353
      %v355 = vpop.f32.mrb[0].mxu0
      %356 = vmatprep.mubr.bf16.mxu0 0
      %357 = vmatmul.mubr.bf16.gmra.mrb[0].mxu0 %v274
      %v358 = vpop.f32.mrb[0].mxu0
      %v359 = vadd.f32 0.0, %v358
      %v360 = vpop.f32.mrb[0].mxu0
      %v361 = vpop.f32.mrb[0].mxu0
      %v362 = vadd.f32 0.0, %v361
      %v363 = vpop.f32.mrb[0].mxu0
      %364 = vmatprep.mubr.bf16.mxu0 0
      %365 = vmatmul.mubr.bf16.gmra.mrb[0].mxu0 %v277
      %v366 = vpop.f32.mrb[0].mxu0
      %v367 = vadd.f32 0.0, %v366
      %v368 = vpop.f32.mrb[0].mxu0
      %v369 = vpop.f32.mrb[0].mxu0
      %v370 = vadd.f32 0.0, %v369
      %v371 = vpop.f32.mrb[0].mxu0
      %372 = vmatprep.mubr.bf16.mxu0 0
      %373 = vmatmul.mubr.bf16.gmra.mrb[0].mxu0 %v280
      %v374 = vpop.f32.mrb[0].mxu0
      %v375 = vadd.f32 0.0, %v374
      %v376 = vpop.f32.mrb[0].mxu0
      %v377 = vpop.f32.mrb[0].mxu0
      %v378 = vadd.f32 0.0, %v377
      %v379 = vpop.f32.mrb[0].mxu0
      %380 = vmatprep.mubr.bf16.mxu0 0
      %381 = vmatmul.mubr.bf16.gmra.mrb[0].mxu0 %v283
      %v382 = vpop.f32.mrb[0].mxu0
      %v383 = vadd.f32 0.0, %v382
      %v384 = vpop.f32.mrb[0].mxu0
      %v385 = vpop.f32.mrb[0].mxu0
      %v386 = vadd.f32 0.0, %v385
      %v387 = vpop.f32.mrb[0].mxu0
      %388 = vmatprep.mubr.bf16.mxu0 0
      %389 = vmatmul.mubr.bf16.gmra.mrb[0].mxu0 %v286
      %v390 = vpop.f32.mrb[0].mxu0
      %v391 = vadd.f32 0.0, %v390
      %v392 = vpop.f32.mrb[0].mxu0
      %v393 = vpop.f32.mrb[0].mxu0
      %v394 = vadd.f32 0.0, %v393
      %v395 = vpop.f32.mrb[0].mxu0
      %396 = vdwg.mxu0
      %v397 = vadd.f32 %v327, %v330
      %v398 = vadd.f32 %v397, %v335
      %v399 = vadd.f32 %v398, %v338
      %v400 = vadd.f32 %v399, %v343
      %v401 = vadd.f32 %v400, %v346
      %v402 = vadd.f32 %v401, %v351
      %v403 = vadd.f32 %v402, %v354
      %v404 = vadd.f32 %v403, %v359
      %v405 = vadd.f32 %v404, %v362
      %v406 = vadd.f32 %v405, %v367
      %v407 = vadd.f32 %v406, %v370
      %v408 = vadd.f32 %v407, %v375
      %v409 = vadd.f32 %v408, %v378
      %v410 = vadd.f32 %v409, %v383
      %v411 = vadd.f32 %v410, %v386
      %v412 = vadd.f32 %v411, %v391
      %v413 = vadd.f32 %v412, %v394
      %v414 = vrot.slane %v413, 4
      %v415 = vadd.f32 %v413, %v414
      %v416 = vrot.slane %v415, 2
      %v417 = vadd.f32 %v415, %v416
      %v418 = vrot.slane %v417, 1
      %v419 = vadd.f32 %v417, %v418
      %v420 = vmul.f32 %v327, %v327
      %v421 = vmul.f32 %v330, %v330
      %v422 = vmul.f32 %v335, %v335
      %v423 = vmul.f32 %v338, %v338
      %v424 = vmul.f32 %v343, %v343
      %v425 = vmul.f32 %v346, %v346
      %v426 = vmul.f32 %v351, %v351
      %v427 = vmul.f32 %v354, %v354
      %v428 = vmul.f32 %v359, %v359
      %v429 = vmul.f32 %v362, %v362
      %v430 = vmul.f32 %v367, %v367
      %v431 = vmul.f32 %v370, %v370
      %v432 = vmul.f32 %v375, %v375
      %v433 = vmul.f32 %v378, %v378
      %v434 = vmul.f32 %v383, %v383
      %v435 = vmul.f32 %v386, %v386
      %v436 = vmul.f32 %v391, %v391
      %v437 = vmul.f32 %v394, %v394
      %v438 = vadd.f32 %v420, %v421
      %v439 = vadd.f32 %v438, %v422
      %v440 = vadd.f32 %v439, %v423
      %v441 = vadd.f32 %v440, %v424
      %v442 = vadd.f32 %v441, %v425
      %v443 = vadd.f32 %v442, %v426
      %v444 = vadd.f32 %v443, %v427
      %v445 = vadd.f32 %v444, %v428
      %v446 = vadd.f32 %v445, %v429
      %v447 = vadd.f32 %v446, %v430
      %v448 = vadd.f32 %v447, %v431
      %v449 = vadd.f32 %v448, %v432
      %v450 = vadd.f32 %v449, %v433
      %v451 = vadd.f32 %v450, %v434
      %v452 = vadd.f32 %v451, %v435
      %v453 = vadd.f32 %v452, %v436
      %v454 = vadd.f32 %v453, %v437
      %v455 = vrot.slane %v454, 4
      %v456 = vadd.f32 %v454, %v455
      %v457 = vrot.slane %v456, 2
      %v458 = vadd.f32 %v456, %v457
      %v459 = vrot.slane %v458, 1
      %v460 = vadd.f32 %v458, %v459
      %vm461 = vcmask 1040384
      %v462 = vsel %vm461, %v419, %v460
      %463 = vst [vmem:[%s143] sm:$0x3] %v462
      %p464 = scmp.lt.s32.totalorder %s13, 1
      %s465 = scalar_select %p464, %s13, 1
      %s466 = smul.addr %s465, 2
      %s467 = scalar_lea.vmem %s2, %s466
      // Predicated region
      $region29: #{netf_forward.3} parent=27 // pred_check
        %p468 = pneg %p78
      $region30: #{netf_forward.3} parent=27 // pred_check_branch
        %470 = sbr.rel (%p468) target = $region32
      $region31: #{netf_forward.3} parent=27 // pred_region
        _
      $region32: #{netf_forward.3} parent=27 // pred_fallthru
        _
    $region28: #{netf_forward.3} parent=5 // pred_fallthru
      _
    %p471 = scmp.le.s32.totalorder 2, %s8
    // Predicated region
    $region33: #{netf_forward.3} parent=5 // pred_check
      %p472 = pneg %p471
    $region34: #{netf_forward.3} parent=5 // pred_check_branch
      %474 = sbr.rel (%p472) target = $region36
    $region35: #{netf_forward.3} parent=5 // pred_region
      %s475 = ssub.s32 %s8, 2
      // Predicated region
      $region37: #{netf_forward.3} parent=35 // pred_check
        %p476 = pneg %p84
      $region38: #{netf_forward.3} parent=35 // pred_check_branch
        %478 = sbr.rel (%p476) target = $region40
      $region39: #{netf_forward.3} parent=35 // pred_region
        %p479 = scmp.lt.s32.totalorder %s14, 1
        %s480 = scalar_select %p479, %s14, 1
        %s481 = smul.addr %s480, 2
        %s482 = scalar_lea.vmem %s2, %s481
      $region40: #{netf_forward.3} parent=35 // pred_fallthru
        _
    $region36: #{netf_forward.3} parent=5 // pred_fallthru
      _
  $region6: #{netf_forward.3} parent=0 // loop_footer
    %s12 = sadd.s32 1, %s8
  $region7: #{netf_forward.3} parent=0 // loop_footer_branch
    %7 = sbr.rel target = $region3
  $region8: #{netf_forward.3} parent=0 // loop_exit
    _

// kernel: tile.9
$region0: #{tile.9}
  %s0 = inlined_call_operand.vmem [shape: f32[2,4,32], index: 0, kind: input, shape index: {}]
  %s1 = inlined_call_operand.vmem [shape: f32[2,128], index: 1, kind: output, shape index: {}]
  $region1: #{tile.9} parent=0
    #allocation0 [shape = 'u8[4096]{0}', space=vmem, size = 0x1000, scoped, tag = 'scoped mem for output reshape']
    #allocation1 [shape = 'u8[8192]{0}', space=vmem, size = 0x2000, scoped, tag = 'scoped mem for input reshape']
    %s3 = sshllo.u32 0, 4
    %s4 = scalar_lea.vmem %s0, 4
    %v5 = vld [vmem:[%s4] sm:%s3]
    %s6 = scalar_lea.vmem [#allocation1], 8
    %7 = vst [vmem:[%s6] sm:%s3] %v5
    %v8 = vld [vmem:[%s0] sm:%s3]
    %9 = vst [vmem:[#allocation1] sm:%s3] %v8
    %s10 = smov 3
    %v11 = vld [vmem:[#allocation1] ss:$8 sm:%s10]
    %vm12 = vcmask 261120
    %13 = vst.msk [vmem:[#allocation0] sm:$0x3] %vm12, %v11
    %s14 = scalar_lea.vmem [#allocation1], 3
    %s15 = smov 3
    %v16 = vld [vmem:[%s14] ss:$8 sm:%s15]
    %17 = vrot.lane.b32.xlu0 %v16, 96
    %v18 = vpop.permute.xlu0 %17
    %vm19 = vcmask 1048320
    %20 = vst.msk [vmem:[#allocation0] sm:$0x3] %vm19, %v18
    %s21 = scalar_lea.vmem [#allocation1], 2
    %s22 = smov 3
    %v23 = vld [vmem:[%s21] ss:$8 sm:%s22]
    %24 = vrot.lane.b32.xlu0 %v23, 64
    %v25 = vpop.permute.xlu0 %24
    %vm26 = vcmask 785920
    %27 = vst.msk [vmem:[#allocation0] sm:$0x3] %vm26, %v25
    %s28 = scalar_lea.vmem [#allocation1], 1
    %s29 = smov 3
    %v30 = vld [vmem:[%s28] ss:$8 sm:%s29]
    %31 = vrot.lane.b32.xlu0 %v30, 32
    %v32 = vpop.permute.xlu0 %31
    %vm33 = vcmask 523520
    %34 = vst.msk [vmem:[#allocation0] sm:$0x3] %vm33, %v32
    %s36 = sshllo.u32 0, 2
    %v38 = vld [vmem:[#allocation0] sm:%s36]
    %s39 = sshllo.u32 0, 2
    %40 = vst [vmem:[%s1] sm:%s39] %v38

// kernel: netf_forward.5
$region0: #{netf_forward.5}
  #allocation0 [shape = 'u32[]', space=smem, size = 0x4, offset = 0x4, fixed_abs, tag = 'smem constant byte address 0x4 - core index']
  #allocation1 [shape = 'u32[144,128]{1,0:T(1,128)}', space=vmem, size = 0x12000, scoped, tag = 'internal scratch']
  %s0 = inlined_call_operand.vmem [shape: bf16[128,128], index: 0, kind: input, shape index: {}]
  %s1 = inlined_call_operand.vmem [shape: f32[2,128], index: 1, kind: input, shape index: {}]
  %s2 = inlined_call_operand.vmem [shape: f32[2,4,4,128], index: 2, kind: output, shape index: {}]
  %s3 = sld [smem:[#allocation0]]
  $region41: #{netf_forward.5} parent=0
    _
  %s5 = ssub.s32 1, %s3
  %s6 = scalar_select 0, %s5, %s3
  loop: start=0, step=1, limit=4
  $region2: #{netf_forward.5} parent=0 // loop_pre_header
    _
  $region3: #{netf_forward.5} parent=0 // loop_header
    %s8 = sphi 0, %s12
    %p9 = scmp.ge.s32.totalorder %s8, 4
    %s18 = sphi 0, %s20
    %s21 = sphi 0, %s18
    %s22 = sphi 0, %s21
    %s38 = sphi 0, %s22
    %s42 = sphi 0, %s42
    %s44 = sphi 0, %s42
    %s45 = sphi 0, %s44
    %s59 = sphi 0, %s45
    %s65 = sphi 0, %s67
    %s68 = sphi 0, %s65
    %s69 = sphi 0, %s68
    %s85 = sphi 0, %s69
  $region4: #{netf_forward.5} parent=0 // loop_header_branch
    %11 = sbr.rel (%p9) target = $region8
  $region5: #{netf_forward.5} parent=0 // loop_body
    %s13 = ssub.s32 %s8, 1
    %s14 = ssub.s32 %s8, 2
    %s15 = sadd.s32 %s8, 1
    %s16 = ssub.s32 %s8, %s15
    %p17 = scmp.eq.s32.totalorder %s16, 0
    %s19 = sadd.s32 %s18, 1
    %s20 = scalar_select %p17, %s18, %s19
    %p23 = pneg %p17
    %p24 = scmp.eq.s32.totalorder %s8, 1
    %p25 = por %p23, %p24
    %p26 = scmp.ne.s32.totalorder %s18, %s21
    %p27 = scmp.eq.s32.totalorder %s8, 0
    %p28 = por %p26, %p27
    %p29 = scmp.ne.s32.totalorder %s18, %s21
    %p30 = scmp.eq.s32.totalorder %s13, 1
    %p31 = por %p29, %p30
    %p32 = scmp.ne.s32.totalorder %s21, %s22
    %p33 = scmp.eq.s32.totalorder %s13, 0
    %p34 = por %p32, %p33
    %p35 = scmp.ne.s32.totalorder %s21, %s22
    %p36 = scmp.eq.s32.totalorder %s14, 1
    %p37 = por %p35, %p36
    %p39 = scmp.ne.s32.totalorder %s22, %s38
    %p40 = scmp.eq.s32.totalorder %s14, 0
    %p41 = por %p39, %p40
    %s43 = sadd.s32 %s42, 1
    %p46 = scmp.eq.s32.totalorder %s8, 1
    %p47 = scmp.ne.s32.totalorder %s42, %s44
    %p48 = scmp.eq.s32.totalorder %s8, 0
    %p49 = por %p47, %p48
    %p50 = scmp.ne.s32.totalorder %s42, %s44
    %p51 = scmp.eq.s32.totalorder %s13, 1
    %p52 = por %p50, %p51
    %p53 = scmp.ne.s32.totalorder %s44, %s45
    %p54 = scmp.eq.s32.totalorder %s13, 0
    %p55 = por %p53, %p54
    %p56 = scmp.ne.s32.totalorder %s44, %s45
    %p57 = scmp.eq.s32.totalorder %s14, 1
    %p58 = por %p56, %p57
    %p60 = scmp.ne.s32.totalorder %s45, %s59
    %p61 = scmp.eq.s32.totalorder %s14, 0
    %p62 = por %p60, %p61
    %s63 = ssub.s32 %s8, %s15
    %p64 = scmp.eq.s32.totalorder %s63, 0
    %s66 = sadd.s32 %s65, 1
    %s67 = scalar_select %p64, %s65, %s66
    %p70 = pneg %p64
    %p71 = scmp.eq.s32.totalorder %s8, 1
    %p72 = por %p70, %p71
    %p73 = scmp.ne.s32.totalorder %s65, %s68
    %p74 = scmp.eq.s32.totalorder %s8, 0
    %p75 = por %p73, %p74
    %p76 = scmp.ne.s32.totalorder %s65, %s68
    %p77 = scmp.eq.s32.totalorder %s13, 1
    %p78 = por %p76, %p77
    %p79 = scmp.ne.s32.totalorder %s68, %s69
    %p80 = scmp.eq.s32.totalorder %s13, 0
    %p81 = por %p79, %p80
    %p82 = scmp.ne.s32.totalorder %s68, %s69
    %p83 = scmp.eq.s32.totalorder %s14, 1
    %p84 = por %p82, %p83
    %p86 = scmp.ne.s32.totalorder %s69, %s85
    %p87 = scmp.eq.s32.totalorder %s14, 0
    %p88 = por %p86, %p87
    %p89 = scmp.le.s32.totalorder 1, %s8
    %p90 = scmp.lt.s32.totalorder %s8, 3
    %p91 = pnand %p89, %p90
    %p92 = pneg %p91
    // Predicated region
    $region9: #{netf_forward.5} parent=5 // pred_check
      _
    $region10: #{netf_forward.5} parent=5 // pred_check_branch
      %94 = sbr.rel (%p91) target = $region12
    $region11: #{netf_forward.5} parent=5 // pred_region
      %s95 = ssub.s32 %s8, 1
      // Predicated region
      $region13: #{netf_forward.5} parent=11 // pred_check
        %p96 = pneg %p55
      $region14: #{netf_forward.5} parent=11 // pred_check_branch
        %98 = sbr.rel (%p96) target = $region16
      $region15: #{netf_forward.5} parent=11 // pred_region
        _
      $region16: #{netf_forward.5} parent=11 // pred_fallthru
        _
    $region12: #{netf_forward.5} parent=5 // pred_fallthru
      _
    %p99 = scmp.lt.s32.totalorder %s8, 2
    // Predicated region
    $region17: #{netf_forward.5} parent=5 // pred_check
      %p100 = pneg %p99
    $region18: #{netf_forward.5} parent=5 // pred_check_branch
      %102 = sbr.rel (%p100) target = $region20
    $region19: #{netf_forward.5} parent=5 // pred_region
      // Predicated region
      $region21: #{netf_forward.5} parent=19 // pred_check
        %p103 = pneg %p28
      $region22: #{netf_forward.5} parent=19 // pred_check_branch
        %105 = sbr.rel (%p103) target = $region24
      $region23: #{netf_forward.5} parent=19 // pred_region
        %s106 = smul.u32 8, %s8
        %p107 = scmp.lt.s32.totalorder %s106, 15
        %s108 = scalar_select %p107, %s106, 15
        %s109 = smul.addr %s108, 4
        %s110 = scalar_lea.vmem %s0, %s109
        %s111 = smul.u32 8, %s8
      $region24: #{netf_forward.5} parent=19 // pred_fallthru
        _
    $region20: #{netf_forward.5} parent=5 // pred_fallthru
      _
    %p112 = scmp.le.s32.totalorder 1, %s8
    %p113 = scmp.lt.s32.totalorder %s8, 3
    %p114 = pnand %p112, %p113
    %p115 = pneg %p114
    // Predicated region
    $region25: #{netf_forward.5} parent=5 // pred_check
      _
    $region26: #{netf_forward.5} parent=5 // pred_check_branch
      %117 = sbr.rel (%p114) target = $region28
    $region27: #{netf_forward.5} parent=5 // pred_region
      %s118 = ssub.s32 %s8, 1
      %s119 = smul.u32 8, %s13
      %p120 = scmp.lt.s32.totalorder %s119, 15
      %s121 = scalar_select %p120, %s119, 15
      %s122 = smul.addr %s121, 4
      %s123 = scalar_lea.vmem %s0, %s122
      %p124 = pneg %p34
      %p125 = pneg %p31
      %p126 = pneg %p55
      %p127 = pneg %p52
      %p128 = pneg %p81
      %p129 = pneg %p78
      %p130 = scmp.lt.s32.totalorder %s13, 1
      %s131 = scalar_select %p130, %s13, 1
      %s132 = smul.addr %s131, 4
      %s133 = smul.addr %s132, 4
      %s134 = scalar_lea.vmem %s2, %s133
      %s135 = smul.u32 8, %s13
      %p136 = scmp.lt.s32.totalorder %s135, 15
      %s137 = scalar_select %p136, %s135, 15
      %s138 = smul.addr %s137, 4
      %s139 = scalar_lea.vmem %s0, %s138
      %s140 = smul.u32 8, %s13
      %p141 = scmp.lt.s32.totalorder %s13, 1
      %s142 = scalar_select %p141, %s13, 1
      %s143 = smul.addr %s142, 4
      %s144 = smul.addr %s143, 4
      %s145 = scalar_lea.vmem %s2, %s144
      %v146 = vld [vmem:[%s139] sm:$0xf]
      %v147 = vld [vmem:[%s139 + $0x4] sm:$0xf]
      %v148 = vld [vmem:[%s139 + $0x8] sm:$0xf]
      %v149 = vld [vmem:[%s139 + $0xc] sm:$0xf]
      %v150 = vld [vmem:[%s139 + $0x10] sm:$0xf]
      %v151 = vld [vmem:[%s139 + $0x14] sm:$0xf]
      %v152 = vld [vmem:[%s139 + $0x18] sm:$0xf]
      %v153 = vld [vmem:[%s139 + $0x1c] sm:$0xf]
      %v154 = vunpack.c.l.bf16 %v146
      %v155 = vunpack.c.l.bf16 %v147
      %v156 = vunpack.c.l.bf16 %v148
      %v157 = vunpack.c.l.bf16 %v149
      %v158 = vunpack.c.l.bf16 %v150
      %v159 = vunpack.c.l.bf16 %v151
      %v160 = vunpack.c.l.bf16 %v152
      %v161 = vunpack.c.l.bf16 %v153
      %v162 = vld [vmem:[%s1] sm:$0x1]
      %v163 = vlaneseq
      %v164 = vshrl.u32 %v163, 7
      %v165 = vsub.s32 0, %v164
      %v166 = vrot.slane %v162, %v165
      %v167 = vmul.f32 %v154, %v166
      %v168 = vmul.f32 %v155, %v166
      %v169 = vmul.f32 %v156, %v166
      %v170 = vmul.f32 %v157, %v166
      %v171 = vmul.f32 %v158, %v166
      %v172 = vmul.f32 %v159, %v166
      %v173 = vmul.f32 %v160, %v166
      %v174 = vmul.f32 %v161, %v166
      %v175 = vld [vmem:[%s1 + $0x1] sm:$0x1]
      %v176 = vlaneseq
      %v177 = vshrl.u32 %v176, 7
      %v178 = vsub.s32 0, %v177
      %v179 = vrot.slane %v175, %v178
      %v180 = vadd.f32 %v167, %v179
      %v181 = vadd.f32 %v168, %v179
      %v182 = vadd.f32 %v169, %v179
      %v183 = vadd.f32 %v170, %v179
      %v184 = vadd.f32 %v171, %v179
      %v185 = vadd.f32 %v172, %v179
      %v186 = vadd.f32 %v173, %v179
      %v187 = vadd.f32 %v174, %v179
      %v188 = vmax.f32 %v180, 0.0
      %v189 = vmax.f32 %v181, 0.0
      %v190 = vmax.f32 %v182, 0.0
      %v191 = vmax.f32 %v183, 0.0
      %v192 = vmax.f32 %v184, 0.0
      %v193 = vmax.f32 %v185, 0.0
      %v194 = vmax.f32 %v186, 0.0
      %v195 = vmax.f32 %v187, 0.0
      %v196 = vmax.f32 %v188, %v189
      %v197 = vmax.f32 %v190, %v191
      %v198 = vmax.f32 %v192, %v193
      %v199 = vmax.f32 %v194, %v195
      %v204 = vcombine.high %v196, %v196
      %v206 = vunpack.c.l.s4 1983009808
      %v207 = vunpack.c.0.s8 %v206
      %v208 = vlaneseq
      %v209 = vshrl.u32 %v208, 7
      %v210 = vsub.s32 %v207, %v209
      %v211 = vrot.slane %v196, %v210
      %v213 = vunpack.c.l.s4 1983009808
      %v214 = vunpack.c.0.s8 %v213
      %v215 = vlaneseq
      %v216 = vshrl.u32 %v215, 7
      %v217 = vsub.s32 %v214, %v216
      %v218 = vrot.slane %v204, %v217
      %v219 = vcombine.high %v211, %v211
      %v220 = vcombine.high %v218, %v218
      %v221 = vcombine.high %v197, %v197
      %v223 = vunpack.c.l.s4 1983009808
      %v224 = vunpack.c.0.s8 %v223
      %v225 = vlaneseq
      %v226 = vshrl.u32 %v225, 7
      %v227 = vsub.s32 %v224, %v226
      %v228 = vrot.slane %v197, %v227
      %v230 = vunpack.c.l.s4 1983009808
      %v231 = vunpack.c.0.s8 %v230
      %v232 = vlaneseq
      %v233 = vshrl.u32 %v232, 7
      %v234 = vsub.s32 %v231, %v233
      %v235 = vrot.slane %v221, %v234
      %v236 = vcombine.high %v228, %v228
      %v237 = vcombine.high %v235, %v235
      %v238 = vcombine.high %v198, %v198
      %v240 = vunpack.c.l.s4 1983009808
      %v241 = vunpack.c.0.s8 %v240
      %v242 = vlaneseq
      %v243 = vshrl.u32 %v242, 7
      %v244 = vsub.s32 %v241, %v243
      %v245 = vrot.slane %v198, %v244
      %v247 = vunpack.c.l.s4 1983009808
      %v248 = vunpack.c.0.s8 %v247
      %v249 = vlaneseq
      %v250 = vshrl.u32 %v249, 7
      %v251 = vsub.s32 %v248, %v250
      %v252 = vrot.slane %v238, %v251
      %v253 = vcombine.high %v245, %v245
      %v254 = vcombine.high %v252, %v252
      %v255 = vcombine.high %v199, %v199
      %v257 = vunpack.c.l.s4 1983009808
      %v258 = vunpack.c.0.s8 %v257
      %v259 = vlaneseq
      %v260 = vshrl.u32 %v259, 7
      %v261 = vsub.s32 %v258, %v260
      %v262 = vrot.slane %v199, %v261
      %v264 = vunpack.c.l.s4 1983009808
      %v265 = vunpack.c.0.s8 %v264
      %v266 = vlaneseq
      %v267 = vshrl.u32 %v266, 7
      %v268 = vsub.s32 %v265, %v267
      %v269 = vrot.slane %v255, %v268
      %v270 = vcombine.high %v262, %v262
      %v271 = vcombine.high %v269, %v269
      %vm288 = vcmask 1041408
      %v289 = vsel %vm288, %v211, -inf
      %v290 = vrot.slane %v289, 4
      %v291 = vmax.f32 %v289, %v290
      %v292 = vrot.slane %v291, 2
      %v293 = vmax.f32 %v291, %v292
      %v294 = vrot.slane %v293, 1
      %v295 = vmax.f32 %v293, %v294
      %v296 = vsel %vm288, %v219, -inf
      %v297 = vrot.slane %v296, 4
      %v298 = vmax.f32 %v296, %v297
      %v299 = vrot.slane %v298, 2
      %v300 = vmax.f32 %v298, %v299
      %v301 = vrot.slane %v300, 1
      %v302 = vmax.f32 %v300, %v301
      %v303 = vsel %vm288, %v218, -inf
      %v304 = vrot.slane %v303, 4
      %v305 = vmax.f32 %v303, %v304
      %v306 = vrot.slane %v305, 2
      %v307 = vmax.f32 %v305, %v306
      %v308 = vrot.slane %v307, 1
      %v309 = vmax.f32 %v307, %v308
      %v310 = vsel %vm288, %v220, -inf
      %v311 = vrot.slane %v310, 4
      %v312 = vmax.f32 %v310, %v311
      %v313 = vrot.slane %v312, 2
      %v314 = vmax.f32 %v312, %v313
      %v315 = vrot.slane %v314, 1
      %v316 = vmax.f32 %v314, %v315
      %v317 = vsel %vm288, %v228, -inf
      %v318 = vrot.slane %v317, 4
      %v319 = vmax.f32 %v317, %v318
      %v320 = vrot.slane %v319, 2
      %v321 = vmax.f32 %v319, %v320
      %v322 = vrot.slane %v321, 1
      %v323 = vmax.f32 %v321, %v322
      %v324 = vsel %vm288, %v236, -inf
      %v325 = vrot.slane %v324, 4
      %v326 = vmax.f32 %v324, %v325
      %v327 = vrot.slane %v326, 2
      %v328 = vmax.f32 %v326, %v327
      %v329 = vrot.slane %v328, 1
      %v330 = vmax.f32 %v328, %v329
      %v331 = vsel %vm288, %v235, -inf
      %v332 = vrot.slane %v331, 4
      %v333 = vmax.f32 %v331, %v332
      %v334 = vrot.slane %v333, 2
      %v335 = vmax.f32 %v333, %v334
      %v336 = vrot.slane %v335, 1
      %v337 = vmax.f32 %v335, %v336
      %v338 = vsel %vm288, %v237, -inf
      %v339 = vrot.slane %v338, 4
      %v340 = vmax.f32 %v338, %v339
      %v341 = vrot.slane %v340, 2
      %v342 = vmax.f32 %v340, %v341
      %v343 = vrot.slane %v342, 1
      %v344 = vmax.f32 %v342, %v343
      %v345 = vsel %vm288, %v245, -inf
      %v346 = vrot.slane %v345, 4
      %v347 = vmax.f32 %v345, %v346
      %v348 = vrot.slane %v347, 2
      %v349 = vmax.f32 %v347, %v348
      %v350 = vrot.slane %v349, 1
      %v351 = vmax.f32 %v349, %v350
      %v352 = vsel %vm288, %v253, -inf
      %v353 = vrot.slane %v352, 4
      %v354 = vmax.f32 %v352, %v353
      %v355 = vrot.slane %v354, 2
      %v356 = vmax.f32 %v354, %v355
      %v357 = vrot.slane %v356, 1
      %v358 = vmax.f32 %v356, %v357
      %v359 = vsel %vm288, %v252, -inf
      %v360 = vrot.slane %v359, 4
      %v361 = vmax.f32 %v359, %v360
      %v362 = vrot.slane %v361, 2
      %v363 = vmax.f32 %v361, %v362
      %v364 = vrot.slane %v363, 1
      %v365 = vmax.f32 %v363, %v364
      %v366 = vsel %vm288, %v254, -inf
      %v367 = vrot.slane %v366, 4
      %v368 = vmax.f32 %v366, %v367
      %v369 = vrot.slane %v368, 2
      %v370 = vmax.f32 %v368, %v369
      %v371 = vrot.slane %v370, 1
      %v372 = vmax.f32 %v370, %v371
      %v373 = vsel %vm288, %v262, -inf
      %v374 = vrot.slane %v373, 4
      %v375 = vmax.f32 %v373, %v374
      %v376 = vrot.slane %v375, 2
      %v377 = vmax.f32 %v375, %v376
      %v378 = vrot.slane %v377, 1
      %v379 = vmax.f32 %v377, %v378
      %v380 = vsel %vm288, %v270, -inf
      %v381 = vrot.slane %v380, 4
      %v382 = vmax.f32 %v380, %v381
      %v383 = vrot.slane %v382, 2
      %v384 = vmax.f32 %v382, %v383
      %v385 = vrot.slane %v384, 1
      %v386 = vmax.f32 %v384, %v385
      %v387 = vsel %vm288, %v269, -inf
      %v388 = vrot.slane %v387, 4
      %v389 = vmax.f32 %v387, %v388
      %v390 = vrot.slane %v389, 2
      %v391 = vmax.f32 %v389, %v390
      %v392 = vrot.slane %v391, 1
      %v393 = vmax.f32 %v391, %v392
      %v394 = vsel %vm288, %v271, -inf
      %v395 = vrot.slane %v394, 4
      %v396 = vmax.f32 %v394, %v395
      %v397 = vrot.slane %v396, 2
      %v398 = vmax.f32 %v396, %v397
      %v399 = vrot.slane %v398, 1
      %v400 = vmax.f32 %v398, %v399
      %vm417 = vcmask 1041409
      %v418 = vsel %vm417, %v302, %v295
      %vm419 = vcmask 1042434
      %v420 = vsel %vm419, %v309, %v418
      %vm421 = vcmask 1043459
      %v422 = vsel %vm421, %v316, %v420
      %v423 = vsel %vm417, %v330, %v323
      %v424 = vsel %vm419, %v337, %v423
      %v425 = vsel %vm421, %v344, %v424
      %v426 = vsel %vm417, %v358, %v351
      %v427 = vsel %vm419, %v365, %v426
      %v428 = vsel %vm421, %v372, %v427
      %v429 = vsel %vm417, %v386, %v379
      %v430 = vsel %vm419, %v393, %v429
      %v431 = vsel %vm421, %v400, %v430
      %436 = vst [vmem:[%s145] sm:$0xf] %v422
      %437 = vst [vmem:[%s145 + $0x4] sm:$0xf] %v425
      %438 = vst [vmem:[%s145 + $0x8] sm:$0xf] %v428
      %439 = vst [vmem:[%s145 + $0xc] sm:$0xf] %v431
      %p440 = scmp.lt.s32.totalorder %s13, 1
      %s441 = scalar_select %p440, %s13, 1
      %s442 = smul.addr %s441, 4
      %s443 = smul.addr %s442, 4
      %s444 = scalar_lea.vmem %s2, %s443
      // Predicated region
      $region29: #{netf_forward.5} parent=27 // pred_check
        %p445 = pneg %p78
      $region30: #{netf_forward.5} parent=27 // pred_check_branch
        %447 = sbr.rel (%p445) target = $region32
      $region31: #{netf_forward.5} parent=27 // pred_region
        _
      $region32: #{netf_forward.5} parent=27 // pred_fallthru
        _
    $region28: #{netf_forward.5} parent=5 // pred_fallthru
      _
    %p448 = scmp.le.s32.totalorder 2, %s8
    // Predicated region
    $region33: #{netf_forward.5} parent=5 // pred_check
      %p449 = pneg %p448
    $region34: #{netf_forward.5} parent=5 // pred_check_branch
      %451 = sbr.rel (%p449) target = $region36
    $region35: #{netf_forward.5} parent=5 // pred_region
      %s452 = ssub.s32 %s8, 2
      // Predicated region
      $region37: #{netf_forward.5} parent=35 // pred_check
        %p453 = pneg %p84
      $region38: #{netf_forward.5} parent=35 // pred_check_branch
        %455 = sbr.rel (%p453) target = $region40
      $region39: #{netf_forward.5} parent=35 // pred_region
        %p456 = scmp.lt.s32.totalorder %s14, 1
        %s457 = scalar_select %p456, %s14, 1
        %s458 = smul.addr %s457, 4
        %s459 = smul.addr %s458, 4
        %s460 = scalar_lea.vmem %s2, %s459
      $region40: #{netf_forward.5} parent=35 // pred_fallthru
        _
    $region36: #{netf_forward.5} parent=5 // pred_fallthru
      _
  $region6: #{netf_forward.5} parent=0 // loop_footer
    %s12 = sadd.s32 1, %s8
  $region7: #{netf_forward.5} parent=0 // loop_footer_branch
    %7 = sbr.rel target = $region3
  $region8: #{netf_forward.5} parent=0 // loop_exit
    _

// kernel: netf_forward.4
$region0: #{netf_forward.4}
  #allocation0 [shape = 'u32[]', space=smem, size = 0x4, offset = 0x4, fixed_abs, tag = 'smem constant byte address 0x4 - core index']
  #allocation1 [shape = 'u32[144,128]{1,0:T(1,128)}', space=vmem, size = 0x12000, scoped, tag = 'internal scratch']
  %s0 = inlined_call_operand.vmem [shape: bf16[288,100], index: 0, kind: input, shape index: {}]
  %s1 = inlined_call_operand.vmem [shape: bf16[100,128], index: 1, kind: input, shape index: {}]
  %s2 = inlined_call_operand.vmem [shape: f32[2,128], index: 2, kind: input, shape index: {}]
  %s3 = inlined_call_operand.vmem [shape: bf16[7,512,128], index: 3, kind: input, shape index: {}]
  %s4 = inlined_call_operand.vmem [shape: bf16[128,128], index: 4, kind: output, shape index: {0}]
  %s5 = inlined_call_operand.vmem [shape: f32[2,2,128], index: 5, kind: output, shape index: {1}]
  %6 = xla_tuple %s4, %s5
  %s7 = sld [smem:[#allocation0]]
  $region57: #{netf_forward.4} parent=0
    _
  %s9 = ssub.s32 1, %s7
  %s10 = scalar_select 0, %s9, %s7
  loop: start=0, step=1, limit=4
  $region2: #{netf_forward.4} parent=0 // loop_pre_header
    _
  $region3: #{netf_forward.4} parent=0 // loop_header
    %s12 = sphi 0, %s16
    %p13 = scmp.ge.s32.totalorder %s12, 4
    %s22 = sphi 0, %s24
    %s25 = sphi 0, %s22
    %s26 = sphi 0, %s25
    %s42 = sphi 0, %s26
    %s46 = sphi 0, %s46
    %s48 = sphi 0, %s46
    %s49 = sphi 0, %s48
    %s63 = sphi 0, %s49
    %s67 = sphi 0, %s67
    %s69 = sphi 0, %s67
    %s70 = sphi 0, %s69
    %s84 = sphi 0, %s70
    %s88 = sphi 0, %s88
    %s90 = sphi 0, %s88
    %s91 = sphi 0, %s90
    %s105 = sphi 0, %s91
    %s111 = sphi 0, %s113
    %s114 = sphi 0, %s111
    %s115 = sphi 0, %s114
    %s131 = sphi 0, %s115
    %s137 = sphi 0, %s139
    %s140 = sphi 0, %s137
    %s141 = sphi 0, %s140
    %s157 = sphi 0, %s141
  $region4: #{netf_forward.4} parent=0 // loop_header_branch
    %15 = sbr.rel (%p13) target = $region8
  $region5: #{netf_forward.4} parent=0 // loop_body
    %s17 = ssub.s32 %s12, 1
    %s18 = ssub.s32 %s12, 2
    %s19 = sadd.s32 %s12, 1
    %s20 = ssub.s32 %s12, %s19
    %p21 = scmp.eq.s32.totalorder %s20, 0
    %s23 = sadd.s32 %s22, 1
    %s24 = scalar_select %p21, %s22, %s23
    %p27 = pneg %p21
    %p28 = scmp.eq.s32.totalorder %s12, 1
    %p29 = por %p27, %p28
    %p30 = scmp.ne.s32.totalorder %s22, %s25
    %p31 = scmp.eq.s32.totalorder %s12, 0
    %p32 = por %p30, %p31
    %p33 = scmp.ne.s32.totalorder %s22, %s25
    %p34 = scmp.eq.s32.totalorder %s17, 1
    %p35 = por %p33, %p34
    %p36 = scmp.ne.s32.totalorder %s25, %s26
    %p37 = scmp.eq.s32.totalorder %s17, 0
    %p38 = por %p36, %p37
    %p39 = scmp.ne.s32.totalorder %s25, %s26
    %p40 = scmp.eq.s32.totalorder %s18, 1
    %p41 = por %p39, %p40
    %p43 = scmp.ne.s32.totalorder %s26, %s42
    %p44 = scmp.eq.s32.totalorder %s18, 0
    %p45 = por %p43, %p44
    %s47 = sadd.s32 %s46, 1
    %p50 = scmp.eq.s32.totalorder %s12, 1
    %p51 = scmp.ne.s32.totalorder %s46, %s48
    %p52 = scmp.eq.s32.totalorder %s12, 0
    %p53 = por %p51, %p52
    %p54 = scmp.ne.s32.totalorder %s46, %s48
    %p55 = scmp.eq.s32.totalorder %s17, 1
    %p56 = por %p54, %p55
    %p57 = scmp.ne.s32.totalorder %s48, %s49
    %p58 = scmp.eq.s32.totalorder %s17, 0
    %p59 = por %p57, %p58
    %p60 = scmp.ne.s32.totalorder %s48, %s49
    %p61 = scmp.eq.s32.totalorder %s18, 1
    %p62 = por %p60, %p61
    %p64 = scmp.ne.s32.totalorder %s49, %s63
    %p65 = scmp.eq.s32.totalorder %s18, 0
    %p66 = por %p64, %p65
    %s68 = sadd.s32 %s67, 1
    %p71 = scmp.eq.s32.totalorder %s12, 1
    %p72 = scmp.ne.s32.totalorder %s67, %s69
    %p73 = scmp.eq.s32.totalorder %s12, 0
    %p74 = por %p72, %p73
    %p75 = scmp.ne.s32.totalorder %s67, %s69
    %p76 = scmp.eq.s32.totalorder %s17, 1
    %p77 = por %p75, %p76
    %p78 = scmp.ne.s32.totalorder %s69, %s70
    %p79 = scmp.eq.s32.totalorder %s17, 0
    %p80 = por %p78, %p79
    %p81 = scmp.ne.s32.totalorder %s69, %s70
    %p82 = scmp.eq.s32.totalorder %s18, 1
    %p83 = por %p81, %p82
    %p85 = scmp.ne.s32.totalorder %s70, %s84
    %p86 = scmp.eq.s32.totalorder %s18, 0
    %p87 = por %p85, %p86
    %s89 = sadd.s32 %s88, 1
    %p92 = scmp.eq.s32.totalorder %s12, 1
    %p93 = scmp.ne.s32.totalorder %s88, %s90
    %p94 = scmp.eq.s32.totalorder %s12, 0
    %p95 = por %p93, %p94
    %p96 = scmp.ne.s32.totalorder %s88, %s90
    %p97 = scmp.eq.s32.totalorder %s17, 1
    %p98 = por %p96, %p97
    %p99 = scmp.ne.s32.totalorder %s90, %s91
    %p100 = scmp.eq.s32.totalorder %s17, 0
    %p101 = por %p99, %p100
    %p102 = scmp.ne.s32.totalorder %s90, %s91
    %p103 = scmp.eq.s32.totalorder %s18, 1
    %p104 = por %p102, %p103
    %p106 = scmp.ne.s32.totalorder %s91, %s105
    %p107 = scmp.eq.s32.totalorder %s18, 0
    %p108 = por %p106, %p107
    %s109 = ssub.s32 %s12, %s19
    %p110 = scmp.eq.s32.totalorder %s109, 0
    %s112 = sadd.s32 %s111, 1
    %s113 = scalar_select %p110, %s111, %s112
    %p116 = pneg %p110
    %p117 = scmp.eq.s32.totalorder %s12, 1
    %p118 = por %p116, %p117
    %p119 = scmp.ne.s32.totalorder %s111, %s114
    %p120 = scmp.eq.s32.totalorder %s12, 0
    %p121 = por %p119, %p120
    %p122 = scmp.ne.s32.totalorder %s111, %s114
    %p123 = scmp.eq.s32.totalorder %s17, 1
    %p124 = por %p122, %p123
    %p125 = scmp.ne.s32.totalorder %s114, %s115
    %p126 = scmp.eq.s32.totalorder %s17, 0
    %p127 = por %p125, %p126
    %p128 = scmp.ne.s32.totalorder %s114, %s115
    %p129 = scmp.eq.s32.totalorder %s18, 1
    %p130 = por %p128, %p129
    %p132 = scmp.ne.s32.totalorder %s115, %s131
    %p133 = scmp.eq.s32.totalorder %s18, 0
    %p134 = por %p132, %p133
    %s135 = ssub.s32 %s12, %s19
    %p136 = scmp.eq.s32.totalorder %s135, 0
    %s138 = sadd.s32 %s137, 1
    %s139 = scalar_select %p136, %s137, %s138
    %p142 = pneg %p136
    %p143 = scmp.eq.s32.totalorder %s12, 1
    %p144 = por %p142, %p143
    %p145 = scmp.ne.s32.totalorder %s137, %s140
    %p146 = scmp.eq.s32.totalorder %s12, 0
    %p147 = por %p145, %p146
    %p148 = scmp.ne.s32.totalorder %s137, %s140
    %p149 = scmp.eq.s32.totalorder %s17, 1
    %p150 = por %p148, %p149
    %p151 = scmp.ne.s32.totalorder %s140, %s141
    %p152 = scmp.eq.s32.totalorder %s17, 0
    %p153 = por %p151, %p152
    %p154 = scmp.ne.s32.totalorder %s140, %s141
    %p155 = scmp.eq.s32.totalorder %s18, 1
    %p156 = por %p154, %p155
    %p158 = scmp.ne.s32.totalorder %s141, %s157
    %p159 = scmp.eq.s32.totalorder %s18, 0
    %p160 = por %p158, %p159
    %p161 = scmp.le.s32.totalorder 1, %s12
    %p162 = scmp.lt.s32.totalorder %s12, 3
    %p163 = pnand %p161, %p162
    %p164 = pneg %p163
    // Predicated region
    $region9: #{netf_forward.4} parent=5 // pred_check
      _
    $region10: #{netf_forward.4} parent=5 // pred_check_branch
      %166 = sbr.rel (%p163) target = $region12
    $region11: #{netf_forward.4} parent=5 // pred_region
      %s167 = ssub.s32 %s12, 1
      // Predicated region
      $region13: #{netf_forward.4} parent=11 // pred_check
        %p168 = pneg %p59
      $region14: #{netf_forward.4} parent=11 // pred_check_branch
        %170 = sbr.rel (%p168) target = $region16
      $region15: #{netf_forward.4} parent=11 // pred_region
        _
      $region16: #{netf_forward.4} parent=11 // pred_fallthru
        _
      // Predicated region
      $region17: #{netf_forward.4} parent=11 // pred_check
        %p171 = pneg %p80
      $region18: #{netf_forward.4} parent=11 // pred_check_branch
        %173 = sbr.rel (%p171) target = $region20
      $region19: #{netf_forward.4} parent=11 // pred_region
        _
      $region20: #{netf_forward.4} parent=11 // pred_fallthru
        _
      // Predicated region
      $region21: #{netf_forward.4} parent=11 // pred_check
        %p174 = pneg %p101
      $region22: #{netf_forward.4} parent=11 // pred_check_branch
        %176 = sbr.rel (%p174) target = $region24
      $region23: #{netf_forward.4} parent=11 // pred_region
        _
      $region24: #{netf_forward.4} parent=11 // pred_fallthru
        _
    $region12: #{netf_forward.4} parent=5 // pred_fallthru
      _
    %p177 = scmp.lt.s32.totalorder %s12, 2
    // Predicated region
    $region25: #{netf_forward.4} parent=5 // pred_check
      %p178 = pneg %p177
    $region26: #{netf_forward.4} parent=5 // pred_check_branch
      %180 = sbr.rel (%p178) target = $region28
    $region27: #{netf_forward.4} parent=5 // pred_region
      // Predicated region
      $region29: #{netf_forward.4} parent=27 // pred_check
        %p181 = pneg %p32
      $region30: #{netf_forward.4} parent=27 // pred_check_branch
        %183 = sbr.rel (%p181) target = $region32
      $region31: #{netf_forward.4} parent=27 // pred_region
        %s184 = smul.u32 18, %s12
        %p185 = scmp.lt.s32.totalorder %s184, 35
        %s186 = scalar_select %p185, %s184, 35
        %s187 = smul.addr %s186, 4
        %s188 = scalar_lea.vmem %s0, %s187
        %s189 = smul.u32 18, %s12
      $region32: #{netf_forward.4} parent=27 // pred_fallthru
        _
    $region28: #{netf_forward.4} parent=5 // pred_fallthru
      _
    %p190 = scmp.le.s32.totalorder 1, %s12
    %p191 = scmp.lt.s32.totalorder %s12, 3
    %p192 = pnand %p190, %p191
    %p193 = pneg %p192
    // Predicated region
    $region33: #{netf_forward.4} parent=5 // pred_check
      _
    $region34: #{netf_forward.4} parent=5 // pred_check_branch
      %195 = sbr.rel (%p192) target = $region36
    $region35: #{netf_forward.4} parent=5 // pred_region
      %s196 = ssub.s32 %s12, 1
      %s197 = smul.u32 18, %s17
      %p198 = scmp.lt.s32.totalorder %s197, 35
      %s199 = scalar_select %p198, %s197, 35
      %s200 = smul.addr %s199, 4
      %s201 = scalar_lea.vmem %s0, %s200
      %p202 = pneg %p38
      %p203 = pneg %p35
      %p204 = pneg %p59
      %p205 = pneg %p56
      %p206 = pneg %p80
      %p207 = pneg %p77
      %p208 = pneg %p101
      %p209 = pneg %p98
      %p210 = pneg %p127
      %p211 = pneg %p124
      %s212 = smul.u32 8, %s17
      %p213 = scmp.lt.s32.totalorder %s212, 15
      %s214 = scalar_select %p213, %s212, 15
      %s215 = smul.addr %s214, 4
      %s216 = scalar_lea.vmem %s4, %s215
      %p217 = pneg %p153
      %p218 = pneg %p150
      %p219 = scmp.lt.s32.totalorder %s17, 1
      %s220 = scalar_select %p219, %s17, 1
      %s221 = smul.addr %s220, 2
      %s222 = scalar_lea.vmem %s5, %s221
      %s223 = smul.u32 18, %s17
      %p224 = scmp.lt.s32.totalorder %s223, 35
      %s225 = scalar_select %p224, %s223, 35
      %s226 = smul.addr %s225, 4
      %s227 = scalar_lea.vmem %s0, %s226
      %s228 = smul.u32 18, %s17
      %s229 = smul.u32 8, %s17
      %p230 = scmp.lt.s32.totalorder %s229, 15
      %s231 = scalar_select %p230, %s229, 15
      %s232 = smul.addr %s231, 4
      %s233 = scalar_lea.vmem %s4, %s232
      %s234 = smul.u32 8, %s17
      %p235 = scmp.lt.s32.totalorder %s17, 1
      %s236 = scalar_select %p235, %s17, 1
      %s237 = smul.addr %s236, 2
      %s238 = scalar_lea.vmem %s5, %s237
      %v240 = vld [vmem:[%s227] sm:$0xf]
      %v241 = vld [vmem:[%s227 + $0x4] sm:$0xf]
      %v242 = vld [vmem:[%s227 + $0x8] sm:$0xf]
      %v243 = vld [vmem:[%s227 + $0xc] sm:$0xf]
      %v244 = vld [vmem:[%s227 + $0x10] sm:$0xf]
      %v245 = vld [vmem:[%s227 + $0x14] sm:$0xf]
      %v246 = vld [vmem:[%s227 + $0x18] sm:$0xf]
      %v247 = vld [vmem:[%s227 + $0x1c] sm:$0xf]
      %v248 = vld [vmem:[%s227 + $0x20] sm:$0xf]
      %v249 = vld [vmem:[%s227 + $0x24] sm:$0xf]
      %v250 = vld [vmem:[%s227 + $0x28] sm:$0xf]
      %v251 = vld [vmem:[%s227 + $0x2c] sm:$0xf]
      %v252 = vld [vmem:[%s227 + $0x30] sm:$0xf]
      %v253 = vld [vmem:[%s227 + $0x34] sm:$0xf]
      %v254 = vld [vmem:[%s227 + $0x38] sm:$0xf]
      %v255 = vld [vmem:[%s227 + $0x3c] sm:$0xf]
      %v256 = vld [vmem:[%s227 + $0x40] sm:$0xf]
      %v257 = vld [vmem:[%s227 + $0x44] sm:$0xf]
      %v258 = vld [vmem:[%s1] sm:$0xf]
      %v259 = vld [vmem:[%s1 + $0x4] sm:$0xf]
      %v260 = vld [vmem:[%s1 + $0x8] sm:$0xf]
      %v261 = vld [vmem:[%s1 + $0xc] sm:$0xf]
      %v262 = vld [vmem:[%s1 + $0x10] sm:$0xf]
      %v263 = vld [vmem:[%s1 + $0x14] sm:$0xf]
      %v264 = vld [vmem:[%s1 + $0x18] sm:$0xf]
      %v265 = vld [vmem:[%s1 + $0x1c] sm:$0xf]
      %v266 = vld [vmem:[%s1 + $0x20] sm:$0xf]
      %v267 = vld [vmem:[%s1 + $0x24] sm:$0xf]
      %v268 = vld [vmem:[%s1 + $0x28] sm:$0xf]
      %v269 = vld [vmem:[%s1 + $0x2c] sm:$0xf]
      %v270 = vld [vmem:[%s1 + $0x30] sm:$0x3]
      %v289 = vunpack.c.l.b16 %v240
      %v290 = vunpack.c.l.b16 %v241
      %v291 = vunpack.c.l.b16 %v242
      %v292 = vunpack.c.l.b16 %v243
      %v293 = vunpack.c.l.b16 %v244
      %v294 = vunpack.c.l.b16 %v245
      %v295 = vunpack.c.l.b16 %v246
      %v296 = vunpack.c.l.b16 %v247
      %v297 = vunpack.c.l.b16 %v248
      %v298 = vunpack.c.l.b16 %v249
      %v299 = vunpack.c.l.b16 %v250
      %v300 = vunpack.c.l.b16 %v251
      %v301 = vunpack.c.l.b16 %v252
      %v302 = vunpack.c.l.b16 %v253
      %v303 = vunpack.c.l.b16 %v254
      %v304 = vunpack.c.l.b16 %v255
      %v305 = vunpack.c.l.b16 %v256
      %v306 = vunpack.c.l.b16 %v257
      %v307 = vpack.c.b16 %v290, %v289
      %v308 = vpack.c.b16 %v292, %v291
      %v309 = vpack.c.b16 %v294, %v293
      %v310 = vpack.c.b16 %v296, %v295
      %v311 = vpack.c.b16 %v298, %v297
      %v312 = vpack.c.b16 %v300, %v299
      %v313 = vpack.c.b16 %v302, %v301
      %v314 = vpack.c.b16 %v304, %v303
      %v315 = vpack.c.b16 %v306, %v305
      %v329 = vunpack.c.l.b16 %v258
      %v330 = vunpack.c.l.b16 %v259
      %v331 = vunpack.c.l.b16 %v260
      %v332 = vunpack.c.l.b16 %v261
      %v333 = vunpack.c.l.b16 %v262
      %v334 = vunpack.c.l.b16 %v263
      %v335 = vunpack.c.l.b16 %v264
      %v336 = vunpack.c.l.b16 %v265
      %v337 = vunpack.c.l.b16 %v266
      %v338 = vunpack.c.l.b16 %v267
      %v339 = vunpack.c.l.b16 %v268
      %v340 = vunpack.c.l.b16 %v269
      %v341 = vunpack.c.l.b16 %v270
      %v342 = vpack.c.b16 %v330, %v329
      %v343 = vpack.c.b16 %v332, %v331
      %v344 = vpack.c.b16 %v334, %v333
      %v345 = vpack.c.b16 %v336, %v335
      %v346 = vpack.c.b16 %v338, %v337
      %v347 = vpack.c.b16 %v340, %v339
      %v348 = vpack.c.b16 %v341, %v341
      %vm355 = vcmask 818176
      %v357 = vsel %vm355, %v307, 0
      %v360 = vsel %vm355, %v308, 0
      %v363 = vsel %vm355, %v309, 0
      %v366 = vsel %vm355, %v310, 0
      %v369 = vsel %vm355, %v311, 0
      %v372 = vsel %vm355, %v312, 0
      %v375 = vsel %vm355, %v313, 0
      %v378 = vsel %vm355, %v314, 0
      %v381 = vsel %vm355, %v315, 0
      %vm383 = vcmask 1041408
      %v385 = vsel %vm383, %v348, 0
      %387 = vmatprep.subr.bf16.mxu0 0
      %388 = vmatpush1.bf16.msra.mxu0 %v342
      %389 = vmatprep.subr.bf16.mxu0 0
      %390 = vmatpush1.bf16.msra.mxu0 %v343
      %391 = vmatprep.subr.bf16.mxu0 0
      %392 = vmatpush1.bf16.msra.mxu0 %v344
      %393 = vmatprep.subr.bf16.mxu0 0
      %394 = vmatpush1.bf16.msra.mxu0 %v345
      %395 = vmatprep.subr.bf16.mxu0 0
      %396 = vmatpush1.bf16.msra.mxu0 %v346
      %397 = vmatprep.subr.bf16.mxu0 0
      %398 = vmatpush1.bf16.msra.mxu0 %v347
      %399 = vmatprep.subr.bf16.mxu0 0
      %400 = vmatpush1.bf16.msra.mxu0 %v385
      %401 = vmatprep.subr.bf16.mxu0 0
      %402 = vmatpush1.bf16.msra.mxu0 0
      %403 = vmatprep.subr.bf16.mxu0 0
      %404 = vmatpush1.bf16.msra.mxu0 0
      %405 = vmatprep.subr.bf16.mxu0 0
      %406 = vmatpush1.bf16.msra.mxu0 0
      %407 = vmatprep.subr.bf16.mxu0 0
      %408 = vmatpush1.bf16.msra.mxu0 0
      %409 = vmatprep.subr.bf16.mxu0 0
      %410 = vmatpush1.bf16.msra.mxu0 0
      %411 = vmatprep.subr.bf16.mxu0 0
      %412 = vmatpush1.bf16.msra.mxu0 0
      %413 = vmatprep.subr.bf16.mxu0 0
      %414 = vmatpush1.bf16.msra.mxu0 0
      %415 = vmatprep.subr.bf16.mxu0 0
      %416 = vmatpush1.bf16.msra.mxu0 0
      %417 = vmatprep.subr.bf16.mxu0 0
      %418 = vmatpush1.bf16.msra.mxu0 0
      %419 = vmatprep.mubr.bf16.mxu0 0
      %420 = vmatmul.mubr.bf16.gmra.mrb[0].mxu0 %v357
      %v421 = vpop.f32.mrb[0].mxu0
      %v422 = vadd.f32 0.0, %v421
      %v423 = vpop.f32.mrb[0].mxu0
      %v424 = vpop.f32.mrb[0].mxu0
      %v425 = vadd.f32 0.0, %v424
      %v426 = vpop.f32.mrb[0].mxu0
      %427 = vmatprep.mubr.bf16.mxu0 0
      %428 = vmatmul.mubr.bf16.gmra.mrb[0].mxu0 %v360
      %v429 = vpop.f32.mrb[0].mxu0
      %v430 = vadd.f32 0.0, %v429
      %v431 = vpop.f32.mrb[0].mxu0
      %v432 = vpop.f32.mrb[0].mxu0
      %v433 = vadd.f32 0.0, %v432
      %v434 = vpop.f32.mrb[0].mxu0
      %435 = vmatprep.mubr.bf16.mxu0 0
      %436 = vmatmul.mubr.bf16.gmra.mrb[0].mxu0 %v363
      %v437 = vpop.f32.mrb[0].mxu0
      %v438 = vadd.f32 0.0, %v437
      %v439 = vpop.f32.mrb[0].mxu0
      %v440 = vpop.f32.mrb[0].mxu0
      %v441 = vadd.f32 0.0, %v440
      %v442 = vpop.f32.mrb[0].mxu0
      %443 = vmatprep.mubr.bf16.mxu0 0
      %444 = vmatmul.mubr.bf16.gmra.mrb[0].mxu0 %v366
      %v445 = vpop.f32.mrb[0].mxu0
      %v446 = vadd.f32 0.0, %v445
      %v447 = vpop.f32.mrb[0].mxu0
      %v448 = vpop.f32.mrb[0].mxu0
      %v449 = vadd.f32 0.0, %v448
      %v450 = vpop.f32.mrb[0].mxu0
      %451 = vmatprep.mubr.bf16.mxu0 0
      %452 = vmatmul.mubr.bf16.gmra.mrb[0].mxu0 %v369
      %v453 = vpop.f32.mrb[0].mxu0
      %v454 = vadd.f32 0.0, %v453
      %v455 = vpop.f32.mrb[0].mxu0
      %v456 = vpop.f32.mrb[0].mxu0
      %v457 = vadd.f32 0.0, %v456
      %v458 = vpop.f32.mrb[0].mxu0
      %459 = vmatprep.mubr.bf16.mxu0 0
      %460 = vmatmul.mubr.bf16.gmra.mrb[0].mxu0 %v372
      %v461 = vpop.f32.mrb[0].mxu0
      %v462 = vadd.f32 0.0, %v461
      %v463 = vpop.f32.mrb[0].mxu0
      %v464 = vpop.f32.mrb[0].mxu0
      %v465 = vadd.f32 0.0, %v464
      %v466 = vpop.f32.mrb[0].mxu0
      %467 = vmatprep.mubr.bf16.mxu0 0
      %468 = vmatmul.mubr.bf16.gmra.mrb[0].mxu0 %v375
      %v469 = vpop.f32.mrb[0].mxu0
      %v470 = vadd.f32 0.0, %v469
      %v471 = vpop.f32.mrb[0].mxu0
      %v472 = vpop.f32.mrb[0].mxu0
      %v473 = vadd.f32 0.0, %v472
      %v474 = vpop.f32.mrb[0].mxu0
      %475 = vmatprep.mubr.bf16.mxu0 0
      %476 = vmatmul.mubr.bf16.gmra.mrb[0].mxu0 %v378
      %v477 = vpop.f32.mrb[0].mxu0
      %v478 = vadd.f32 0.0, %v477
      %v479 = vpop.f32.mrb[0].mxu0
      %v480 = vpop.f32.mrb[0].mxu0
      %v481 = vadd.f32 0.0, %v480
      %v482 = vpop.f32.mrb[0].mxu0
      %483 = vmatprep.mubr.bf16.mxu0 0
      %484 = vmatmul.mubr.bf16.gmra.mrb[0].mxu0 %v381
      %v485 = vpop.f32.mrb[0].mxu0
      %v486 = vadd.f32 0.0, %v485
      %v487 = vpop.f32.mrb[0].mxu0
      %v488 = vpop.f32.mrb[0].mxu0
      %v489 = vadd.f32 0.0, %v488
      %v490 = vpop.f32.mrb[0].mxu0
      %491 = vdwg.mxu0
      %v492 = vld [vmem:[%s2] sm:$0x1]
      %v493 = vlaneseq
      %v494 = vshrl.u32 %v493, 7
      %v495 = vsub.s32 0, %v494
      %v496 = vrot.slane %v492, %v495
      %v497 = vmul.f32 %v422, %v496
      %v498 = vmul.f32 %v425, %v496
      %v499 = vmul.f32 %v430, %v496
      %v500 = vmul.f32 %v433, %v496
      %v501 = vmul.f32 %v438, %v496
      %v502 = vmul.f32 %v441, %v496
      %v503 = vmul.f32 %v446, %v496
      %v504 = vmul.f32 %v449, %v496
      %v505 = vmul.f32 %v454, %v496
      %v506 = vmul.f32 %v457, %v496
      %v507 = vmul.f32 %v462, %v496
      %v508 = vmul.f32 %v465, %v496
      %v509 = vmul.f32 %v470, %v496
      %v510 = vmul.f32 %v473, %v496
      %v511 = vmul.f32 %v478, %v496
      %v512 = vmul.f32 %v481, %v496
      %v513 = vmul.f32 %v486, %v496
      %v514 = vmul.f32 %v489, %v496
      %v515 = vld [vmem:[%s2 + $0x1] sm:$0x1]
      %v516 = vlaneseq
      %v517 = vshrl.u32 %v516, 7
      %v518 = vsub.s32 0, %v517
      %v519 = vrot.slane %v515, %v518
      %v520 = vadd.f32 %v497, %v519
      %v521 = vadd.f32 %v498, %v519
      %v522 = vadd.f32 %v499, %v519
      %v523 = vadd.f32 %v500, %v519
      %v524 = vadd.f32 %v501, %v519
      %v525 = vadd.f32 %v502, %v519
      %v526 = vadd.f32 %v503, %v519
      %v527 = vadd.f32 %v504, %v519
      %v528 = vadd.f32 %v505, %v519
      %v529 = vadd.f32 %v506, %v519
      %v530 = vadd.f32 %v507, %v519
      %v531 = vadd.f32 %v508, %v519
      %v532 = vadd.f32 %v509, %v519
      %v533 = vadd.f32 %v510, %v519
      %v534 = vadd.f32 %v511, %v519
      %v535 = vadd.f32 %v512, %v519
      %v536 = vadd.f32 %v513, %v519
      %v537 = vadd.f32 %v514, %v519
      %v538 = vmax.f32 %v520, 0.0
      %v539 = vmax.f32 %v521, 0.0
      %v540 = vmax.f32 %v522, 0.0
      %v541 = vmax.f32 %v523, 0.0
      %v542 = vmax.f32 %v524, 0.0
      %v543 = vmax.f32 %v525, 0.0
      %v544 = vmax.f32 %v526, 0.0
      %v545 = vmax.f32 %v527, 0.0
      %v546 = vmax.f32 %v528, 0.0
      %v547 = vmax.f32 %v529, 0.0
      %v548 = vmax.f32 %v530, 0.0
      %v549 = vmax.f32 %v531, 0.0
      %v550 = vmax.f32 %v532, 0.0
      %v551 = vmax.f32 %v533, 0.0
      %v552 = vmax.f32 %v534, 0.0
      %v553 = vmax.f32 %v535, 0.0
      %v554 = vmax.f32 %v536, 0.0
      %v555 = vmax.f32 %v537, 0.0
      %556 = vrot.lane.b32.xlu0 %v538, 32
      %v557 = vpop.permute.xlu0 %556
      %558 = vrot.lane.b32.xlu0 %v539, 32
      %v559 = vpop.permute.xlu0 %558
      %560 = vrot.lane.b32.xlu0 %v540, 32
      %v561 = vpop.permute.xlu0 %560
      %562 = vrot.lane.b32.xlu0 %v541, 32
      %v563 = vpop.permute.xlu0 %562
      %564 = vrot.lane.b32.xlu0 %v542, 32
      %v565 = vpop.permute.xlu0 %564
      %566 = vrot.lane.b32.xlu0 %v543, 32
      %v567 = vpop.permute.xlu0 %566
      %568 = vrot.lane.b32.xlu0 %v544, 32
      %v569 = vpop.permute.xlu0 %568
      %570 = vrot.lane.b32.xlu0 %v545, 32
      %v571 = vpop.permute.xlu0 %570
      %572 = vrot.lane.b32.xlu0 %v546, 32
      %v573 = vpop.permute.xlu0 %572
      %574 = vrot.lane.b32.xlu0 %v547, 32
      %v575 = vpop.permute.xlu0 %574
      %576 = vrot.lane.b32.xlu0 %v548, 32
      %v577 = vpop.permute.xlu0 %576
      %578 = vrot.lane.b32.xlu0 %v549, 32
      %v579 = vpop.permute.xlu0 %578
      %580 = vrot.lane.b32.xlu0 %v550, 32
      %v581 = vpop.permute.xlu0 %580
      %582 = vrot.lane.b32.xlu0 %v551, 32
      %v583 = vpop.permute.xlu0 %582
      %584 = vrot.lane.b32.xlu0 %v552, 32
      %v585 = vpop.permute.xlu0 %584
      %586 = vrot.lane.b32.xlu0 %v553, 32
      %v587 = vpop.permute.xlu0 %586
      %588 = vrot.lane.b32.xlu0 %v554, 32
      %v589 = vpop.permute.xlu0 %588
      %590 = vrot.lane.b32.xlu0 %v555, 32
      %v591 = vpop.permute.xlu0 %590
      %v592 = vmax.f32 %v538, %v557
      %v593 = vmax.f32 %v539, %v559
      %v594 = vmax.f32 %v540, %v561
      %v595 = vmax.f32 %v541, %v563
      %v596 = vmax.f32 %v542, %v565
      %v597 = vmax.f32 %v543, %v567
      %v598 = vmax.f32 %v544, %v569
      %v599 = vmax.f32 %v545, %v571
      %v600 = vmax.f32 %v546, %v573
      %v601 = vmax.f32 %v547, %v575
      %v602 = vmax.f32 %v548, %v577
      %v603 = vmax.f32 %v549, %v579
      %v604 = vmax.f32 %v550, %v581
      %v605 = vmax.f32 %v551, %v583
      %v606 = vmax.f32 %v552, %v585
      %v607 = vmax.f32 %v553, %v587
      %v608 = vmax.f32 %v554, %v589
      %v609 = vmax.f32 %v555, %v591
      %610 = vrot.lane.b32.xlu0 %v592, 64
      %v611 = vpop.permute.xlu0 %610
      %612 = vrot.lane.b32.xlu0 %v593, 64
      %v613 = vpop.permute.xlu0 %612
      %614 = vrot.lane.b32.xlu0 %v594, 64
      %v615 = vpop.permute.xlu0 %614
      %616 = vrot.lane.b32.xlu0 %v595, 64
      %v617 = vpop.permute.xlu0 %616
      %618 = vrot.lane.b32.xlu0 %v596, 64
      %v619 = vpop.permute.xlu0 %618
      %620 = vrot.lane.b32.xlu0 %v597, 64
      %v621 = vpop.permute.xlu0 %620
      %622 = vrot.lane.b32.xlu0 %v598, 64
      %v623 = vpop.permute.xlu0 %622
      %624 = vrot.lane.b32.xlu0 %v599, 64
      %v625 = vpop.permute.xlu0 %624
      %626 = vrot.lane.b32.xlu0 %v600, 64
      %v627 = vpop.permute.xlu0 %626
      %628 = vrot.lane.b32.xlu0 %v601, 64
      %v629 = vpop.permute.xlu0 %628
      %630 = vrot.lane.b32.xlu0 %v602, 64
      %v631 = vpop.permute.xlu0 %630
      %632 = vrot.lane.b32.xlu0 %v603, 64
      %v633 = vpop.permute.xlu0 %632
      %634 = vrot.lane.b32.xlu0 %v604, 64
      %v635 = vpop.permute.xlu0 %634
      %636 = vrot.lane.b32.xlu0 %v605, 64
      %v637 = vpop.permute.xlu0 %636
      %638 = vrot.lane.b32.xlu0 %v606, 64
      %v639 = vpop.permute.xlu0 %638
      %640 = vrot.lane.b32.xlu0 %v607, 64
      %v641 = vpop.permute.xlu0 %640
      %642 = vrot.lane.b32.xlu0 %v608, 64
      %v643 = vpop.permute.xlu0 %642
      %644 = vrot.lane.b32.xlu0 %v609, 64
      %v645 = vpop.permute.xlu0 %644
      %v646 = vmax.f32 %v592, %v611
      %v647 = vmax.f32 %v593, %v613
      %v648 = vmax.f32 %v594, %v615
      %v649 = vmax.f32 %v595, %v617
      %v650 = vmax.f32 %v596, %v619
      %v651 = vmax.f32 %v597, %v621
      %v652 = vmax.f32 %v598, %v623
      %v653 = vmax.f32 %v599, %v625
      %v654 = vmax.f32 %v600, %v627
      %v655 = vmax.f32 %v601, %v629
      %v656 = vmax.f32 %v602, %v631
      %v657 = vmax.f32 %v603, %v633
      %v658 = vmax.f32 %v604, %v635
      %v659 = vmax.f32 %v605, %v637
      %v660 = vmax.f32 %v606, %v639
      %v661 = vmax.f32 %v607, %v641
      %v662 = vmax.f32 %v608, %v643
      %v663 = vmax.f32 %v609, %v645
      %v664 = vpack.c.bf16 %v647, %v646
      %v665 = vpack.c.bf16 %v649, %v648
      %v666 = vpack.c.bf16 %v651, %v650
      %v667 = vpack.c.bf16 %v653, %v652
      %v668 = vpack.c.bf16 %v655, %v654
      %v669 = vpack.c.bf16 %v657, %v656
      %v670 = vpack.c.bf16 %v659, %v658
      %v671 = vpack.c.bf16 %v661, %v660
      %v672 = vpack.c.bf16 %v663, %v662
      %v682 = vcombine.high %v664, %v664
      %v684 = vunpack.c.l.s4 1983009808
      %v685 = vunpack.c.0.s8 %v684
      %v686 = vlaneseq
      %v687 = vshrl.u32 %v686, 7
      %v688 = vsub.s32 %v685, %v687
      %v689 = vrot.slane %v664, %v688
      %v691 = vunpack.c.l.s4 1983009808
      %v692 = vunpack.c.0.s8 %v691
      %v693 = vlaneseq
      %v694 = vshrl.u32 %v693, 7
      %v695 = vsub.s32 %v692, %v694
      %v696 = vrot.slane %v682, %v695
      %v697 = vcombine.high %v689, %v689
      %v698 = vcombine.high %v696, %v696
      %v699 = vcombine.high %v665, %v665
      %v701 = vunpack.c.l.s4 1983009808
      %v702 = vunpack.c.0.s8 %v701
      %v703 = vlaneseq
      %v704 = vshrl.u32 %v703, 7
      %v705 = vsub.s32 %v702, %v704
      %v706 = vrot.slane %v665, %v705
      %v708 = vunpack.c.l.s4 1983009808
      %v709 = vunpack.c.0.s8 %v708
      %v710 = vlaneseq
      %v711 = vshrl.u32 %v710, 7
      %v712 = vsub.s32 %v709, %v711
      %v713 = vrot.slane %v699, %v712
      %v714 = vcombine.high %v706, %v706
      %v715 = vcombine.high %v713, %v713
      %v716 = vcombine.high %v666, %v666
      %v718 = vunpack.c.l.s4 1983009808
      %v719 = vunpack.c.0.s8 %v718
      %v720 = vlaneseq
      %v721 = vshrl.u32 %v720, 7
      %v722 = vsub.s32 %v719, %v721
      %v723 = vrot.slane %v666, %v722
      %v725 = vunpack.c.l.s4 1983009808
      %v726 = vunpack.c.0.s8 %v725
      %v727 = vlaneseq
      %v728 = vshrl.u32 %v727, 7
      %v729 = vsub.s32 %v726, %v728
      %v730 = vrot.slane %v716, %v729
      %v731 = vcombine.high %v723, %v723
      %v732 = vcombine.high %v730, %v730
      %v733 = vcombine.high %v667, %v667
      %v735 = vunpack.c.l.s4 1983009808
      %v736 = vunpack.c.0.s8 %v735
      %v737 = vlaneseq
      %v738 = vshrl.u32 %v737, 7
      %v739 = vsub.s32 %v736, %v738
      %v740 = vrot.slane %v667, %v739
      %v742 = vunpack.c.l.s4 1983009808
      %v743 = vunpack.c.0.s8 %v742
      %v744 = vlaneseq
      %v745 = vshrl.u32 %v744, 7
      %v746 = vsub.s32 %v743, %v745
      %v747 = vrot.slane %v733, %v746
      %v748 = vcombine.high %v740, %v740
      %v749 = vcombine.high %v747, %v747
      %v750 = vcombine.high %v668, %v668
      %v752 = vunpack.c.l.s4 1983009808
      %v753 = vunpack.c.0.s8 %v752
      %v754 = vlaneseq
      %v755 = vshrl.u32 %v754, 7
      %v756 = vsub.s32 %v753, %v755
      %v757 = vrot.slane %v668, %v756
      %v759 = vunpack.c.l.s4 1983009808
      %v760 = vunpack.c.0.s8 %v759
      %v761 = vlaneseq
      %v762 = vshrl.u32 %v761, 7
      %v763 = vsub.s32 %v760, %v762
      %v764 = vrot.slane %v750, %v763
      %v765 = vcombine.high %v757, %v757
      %v766 = vcombine.high %v764, %v764
      %v767 = vcombine.high %v669, %v669
      %v769 = vunpack.c.l.s4 1983009808
      %v770 = vunpack.c.0.s8 %v769
      %v771 = vlaneseq
      %v772 = vshrl.u32 %v771, 7
      %v773 = vsub.s32 %v770, %v772
      %v774 = vrot.slane %v669, %v773
      %v776 = vunpack.c.l.s4 1983009808
      %v777 = vunpack.c.0.s8 %v776
      %v778 = vlaneseq
      %v779 = vshrl.u32 %v778, 7
      %v780 = vsub.s32 %v777, %v779
      %v781 = vrot.slane %v767, %v780
      %v782 = vcombine.high %v774, %v774
      %v783 = vcombine.high %v781, %v781
      %v784 = vcombine.high %v670, %v670
      %v786 = vunpack.c.l.s4 1983009808
      %v787 = vunpack.c.0.s8 %v786
      %v788 = vlaneseq
      %v789 = vshrl.u32 %v788, 7
      %v790 = vsub.s32 %v787, %v789
      %v791 = vrot.slane %v670, %v790
      %v793 = vunpack.c.l.s4 1983009808
      %v794 = vunpack.c.0.s8 %v793
      %v795 = vlaneseq
      %v796 = vshrl.u32 %v795, 7
      %v797 = vsub.s32 %v794, %v796
      %v798 = vrot.slane %v784, %v797
      %v799 = vcombine.high %v791, %v791
      %v800 = vcombine.high %v798, %v798
      %v801 = vcombine.high %v671, %v671
      %v803 = vunpack.c.l.s4 1983009808
      %v804 = vunpack.c.0.s8 %v803
      %v805 = vlaneseq
      %v806 = vshrl.u32 %v805, 7
      %v807 = vsub.s32 %v804, %v806
      %v808 = vrot.slane %v671, %v807
      %v810 = vunpack.c.l.s4 1983009808
      %v811 = vunpack.c.0.s8 %v810
      %v812 = vlaneseq
      %v813 = vshrl.u32 %v812, 7
      %v814 = vsub.s32 %v811, %v813
      %v815 = vrot.slane %v801, %v814
      %v816 = vcombine.high %v808, %v808
      %v817 = vcombine.high %v815, %v815
      %v818 = vcombine.high %v672, %v672
      %v820 = vunpack.c.l.s4 1983009808
      %v821 = vunpack.c.0.s8 %v820
      %v822 = vlaneseq
      %v823 = vshrl.u32 %v822, 7
      %v824 = vsub.s32 %v821, %v823
      %v825 = vrot.slane %v672, %v824
      %v827 = vunpack.c.l.s4 1983009808
      %v828 = vunpack.c.0.s8 %v827
      %v829 = vlaneseq
      %v830 = vshrl.u32 %v829, 7
      %v831 = vsub.s32 %v828, %v830
      %v832 = vrot.slane %v818, %v831
      %v833 = vcombine.high %v825, %v825
      %v834 = vcombine.high %v832, %v832
      %vm835 = vsmask.f32 1280
      %vm836 = vsmask.f32 3336
      %vm837 = vmor %vm835, %vm836
      %vm838 = vsmask.f32 5392
      %vm839 = vmor %vm837, %vm838
      %vm840 = vsmask.f32 7448
      %vm841 = vmor %vm839, %vm840
      %v843 = vshrl.u32 %v689, 16
      %v845 = vrot.slane %v843, 6
      %v846 = vshll.u32 %v689, 16
      %v848 = vrot.slane %v846, 7
      %v849 = vor.u32 %v845, %v848
      %v850 = vrot.slane %v849, 2
      %v852 = vshll.u32 %v697, 16
      %v854 = vrot.slane %v852, 7
      %v855 = vsel %vm841, %v850, %v854
      %v856 = vshrl.u32 %v697, 16
      %v858 = vrot.slane %v856, 6
      %v859 = vor.u32 %v858, %v854
      %v860 = vrot.slane %v859, 2
      %v862 = vshll.u32 %v696, 16
      %v864 = vrot.slane %v862, 7
      %v865 = vsel %vm841, %v860, %v864
      %v867 = vshrl.u32 %v698, 16
      %v869 = vrot.slane %v867, 6
      %v870 = vshll.u32 %v698, 16
      %v872 = vrot.slane %v870, 7
      %v873 = vor.u32 %v869, %v872
      %v874 = vrot.slane %v873, 2
      %v876 = vshll.u32 %v706, 16
      %v878 = vrot.slane %v876, 7
      %v879 = vsel %vm841, %v874, %v878
      %v880 = vshrl.u32 %v706, 16
      %v882 = vrot.slane %v880, 6
      %v883 = vor.u32 %v882, %v878
      %v884 = vrot.slane %v883, 2
      %v886 = vshll.u32 %v714, 16
      %v888 = vrot.slane %v886, 7
      %v889 = vsel %vm841, %v884, %v888
      %v891 = vshrl.u32 %v713, 16
      %v893 = vrot.slane %v891, 6
      %v894 = vshll.u32 %v713, 16
      %v896 = vrot.slane %v894, 7
      %v897 = vor.u32 %v893, %v896
      %v898 = vrot.slane %v897, 2
      %v900 = vshll.u32 %v715, 16
      %v902 = vrot.slane %v900, 7
      %v903 = vsel %vm841, %v898, %v902
      %v904 = vshrl.u32 %v715, 16
      %v906 = vrot.slane %v904, 6
      %v907 = vor.u32 %v906, %v902
      %v908 = vrot.slane %v907, 2
      %v910 = vshll.u32 %v723, 16
      %v912 = vrot.slane %v910, 7
      %v913 = vsel %vm841, %v908, %v912
      %v915 = vshrl.u32 %v731, 16
      %v917 = vrot.slane %v915, 6
      %v918 = vshll.u32 %v731, 16
      %v920 = vrot.slane %v918, 7
      %v921 = vor.u32 %v917, %v920
      %v922 = vrot.slane %v921, 2
      %v924 = vshll.u32 %v730, 16
      %v926 = vrot.slane %v924, 7
      %v927 = vsel %vm841, %v922, %v926
      %v928 = vshrl.u32 %v730, 16
      %v930 = vrot.slane %v928, 6
      %v931 = vor.u32 %v930, %v926
      %v932 = vrot.slane %v931, 2
      %v934 = vshll.u32 %v732, 16
      %v936 = vrot.slane %v934, 7
      %v937 = vsel %vm841, %v932, %v936
      %v939 = vshrl.u32 %v740, 16
      %v941 = vrot.slane %v939, 6
      %v942 = vshll.u32 %v740, 16
      %v944 = vrot.slane %v942, 7
      %v945 = vor.u32 %v941, %v944
      %v946 = vrot.slane %v945, 2
      %v948 = vshll.u32 %v748, 16
      %v950 = vrot.slane %v948, 7
      %v951 = vsel %vm841, %v946, %v950
      %v952 = vshrl.u32 %v748, 16
      %v954 = vrot.slane %v952, 6
      %v955 = vor.u32 %v954, %v950
      %v956 = vrot.slane %v955, 2
      %v958 = vshll.u32 %v747, 16
      %v960 = vrot.slane %v958, 7
      %v961 = vsel %vm841, %v956, %v960
      %v963 = vshrl.u32 %v749, 16
      %v965 = vrot.slane %v963, 6
      %v966 = vshll.u32 %v749, 16
      %v968 = vrot.slane %v966, 7
      %v969 = vor.u32 %v965, %v968
      %v970 = vrot.slane %v969, 2
      %v972 = vshll.u32 %v757, 16
      %v974 = vrot.slane %v972, 7
      %v975 = vsel %vm841, %v970, %v974
      %v976 = vshrl.u32 %v757, 16
      %v978 = vrot.slane %v976, 6
      %v979 = vor.u32 %v978, %v974
      %v980 = vrot.slane %v979, 2
      %v982 = vshll.u32 %v765, 16
      %v984 = vrot.slane %v982, 7
      %v985 = vsel %vm841, %v980, %v984
      %v987 = vshrl.u32 %v764, 16
      %v989 = vrot.slane %v987, 6
      %v990 = vshll.u32 %v764, 16
      %v992 = vrot.slane %v990, 7
      %v993 = vor.u32 %v989, %v992
      %v994 = vrot.slane %v993, 2
      %v996 = vshll.u32 %v766, 16
      %v998 = vrot.slane %v996, 7
      %v999 = vsel %vm841, %v994, %v998
      %v1000 = vshrl.u32 %v766, 16
      %v1002 = vrot.slane %v1000, 6
      %v1003 = vor.u32 %v1002, %v998
      %v1004 = vrot.slane %v1003, 2
      %v1006 = vshll.u32 %v774, 16
      %v1008 = vrot.slane %v1006, 7
      %v1009 = vsel %vm841, %v1004, %v1008
      %v1011 = vshrl.u32 %v782, 16
      %v1013 = vrot.slane %v1011, 6
      %v1014 = vshll.u32 %v782, 16
      %v1016 = vrot.slane %v1014, 7
      %v1017 = vor.u32 %v1013, %v1016
      %v1018 = vrot.slane %v1017, 2
      %v1020 = vshll.u32 %v781, 16
      %v1022 = vrot.slane %v1020, 7
      %v1023 = vsel %vm841, %v1018, %v1022
      %v1024 = vshrl.u32 %v781, 16
      %v1026 = vrot.slane %v1024, 6
      %v1027 = vor.u32 %v1026, %v1022
      %v1028 = vrot.slane %v1027, 2
      %v1030 = vshll.u32 %v783, 16
      %v1032 = vrot.slane %v1030, 7
      %v1033 = vsel %vm841, %v1028, %v1032
      %vm1034 = vcmask 1040384
      %vm1035 = vcmask 1042434
      %vm1036 = vmor %vm1034, %vm1035
      %vm1037 = vcmask 1044484
      %vm1038 = vmor %vm1036, %vm1037
      %vm1039 = vcmask 1046534
      %vm1040 = vmor %vm1038, %vm1039
      %v1041 = vrot.slane %v689, 7
      %v1042 = vrot.slane %v1041, 2
      %v1043 = vrot.slane %v697, 7
      %v1044 = vsel %vm1040, %v1042, %v1043
      %v1045 = vrot.slane %v1043, 2
      %v1046 = vrot.slane %v696, 7
      %v1047 = vsel %vm1040, %v1045, %v1046
      %v1048 = vrot.slane %v698, 7
      %v1049 = vrot.slane %v1048, 2
      %v1050 = vrot.slane %v706, 7
      %v1051 = vsel %vm1040, %v1049, %v1050
      %v1052 = vrot.slane %v1050, 2
      %v1053 = vrot.slane %v714, 7
      %v1054 = vsel %vm1040, %v1052, %v1053
      %v1055 = vrot.slane %v713, 7
      %v1056 = vrot.slane %v1055, 2
      %v1057 = vrot.slane %v715, 7
      %v1058 = vsel %vm1040, %v1056, %v1057
      %v1059 = vrot.slane %v1057, 2
      %v1060 = vrot.slane %v723, 7
      %v1061 = vsel %vm1040, %v1059, %v1060
      %v1062 = vrot.slane %v731, 7
      %v1063 = vrot.slane %v1062, 2
      %v1064 = vrot.slane %v730, 7
      %v1065 = vsel %vm1040, %v1063, %v1064
      %v1066 = vrot.slane %v1064, 2
      %v1067 = vrot.slane %v732, 7
      %v1068 = vsel %vm1040, %v1066, %v1067
      %v1069 = vrot.slane %v740, 7
      %v1070 = vrot.slane %v1069, 2
      %v1071 = vrot.slane %v748, 7
      %v1072 = vsel %vm1040, %v1070, %v1071
      %v1073 = vrot.slane %v1071, 2
      %v1074 = vrot.slane %v747, 7
      %v1075 = vsel %vm1040, %v1073, %v1074
      %v1076 = vrot.slane %v749, 7
      %v1077 = vrot.slane %v1076, 2
      %v1078 = vrot.slane %v757, 7
      %v1079 = vsel %vm1040, %v1077, %v1078
      %v1080 = vrot.slane %v1078, 2
      %v1081 = vrot.slane %v765, 7
      %v1082 = vsel %vm1040, %v1080, %v1081
      %v1083 = vrot.slane %v764, 7
      %v1084 = vrot.slane %v1083, 2
      %v1085 = vrot.slane %v766, 7
      %v1086 = vsel %vm1040, %v1084, %v1085
      %v1087 = vrot.slane %v1085, 2
      %v1088 = vrot.slane %v774, 7
      %v1089 = vsel %vm1040, %v1087, %v1088
      %v1090 = vrot.slane %v782, 7
      %v1091 = vrot.slane %v1090, 2
      %v1092 = vrot.slane %v781, 7
      %v1093 = vsel %vm1040, %v1091, %v1092
      %v1094 = vrot.slane %v1092, 2
      %v1095 = vrot.slane %v783, 7
      %v1096 = vsel %vm1040, %v1094, %v1095
      %vm1097 = vsmask.f32 256
      %vm1098 = vsmask.f32 2312
      %vm1099 = vmor %vm1097, %vm1098
      %vm1100 = vsmask.f32 4368
      %vm1101 = vmor %vm1099, %vm1100
      %vm1102 = vsmask.f32 6424
      %vm1103 = vmor %vm1101, %vm1102
      %v1104 = vrot.slane %v843, 7
      %v1105 = vrot.slane %v1104, 2
      %v1106 = vrot.slane %v856, 7
      %v1107 = vor.u32 %v1106, %v852
      %v1108 = vsel %vm1103, %v1105, %v1107
      %v1109 = vrot.slane %v1106, 2
      %v1110 = vshrl.u32 %v696, 16
      %v1112 = vrot.slane %v1110, 7
      %v1113 = vor.u32 %v1112, %v862
      %v1114 = vsel %vm1103, %v1109, %v1113
      %v1115 = vrot.slane %v867, 7
      %v1116 = vrot.slane %v1115, 2
      %v1117 = vrot.slane %v880, 7
      %v1118 = vor.u32 %v1117, %v876
      %v1119 = vsel %vm1103, %v1116, %v1118
      %v1120 = vrot.slane %v1117, 2
      %v1121 = vshrl.u32 %v714, 16
      %v1123 = vrot.slane %v1121, 7
      %v1124 = vor.u32 %v1123, %v886
      %v1125 = vsel %vm1103, %v1120, %v1124
      %v1126 = vrot.slane %v891, 7
      %v1127 = vrot.slane %v1126, 2
      %v1128 = vrot.slane %v904, 7
      %v1129 = vor.u32 %v1128, %v900
      %v1130 = vsel %vm1103, %v1127, %v1129
      %v1131 = vrot.slane %v1128, 2
      %v1132 = vshrl.u32 %v723, 16
      %v1134 = vrot.slane %v1132, 7
      %v1135 = vor.u32 %v1134, %v910
      %v1136 = vsel %vm1103, %v1131, %v1135
      %v1137 = vrot.slane %v915, 7
      %v1138 = vrot.slane %v1137, 2
      %v1139 = vrot.slane %v928, 7
      %v1140 = vor.u32 %v1139, %v924
      %v1141 = vsel %vm1103, %v1138, %v1140
      %v1142 = vrot.slane %v1139, 2
      %v1143 = vshrl.u32 %v732, 16
      %v1145 = vrot.slane %v1143, 7
      %v1146 = vor.u32 %v1145, %v934
      %v1147 = vsel %vm1103, %v1142, %v1146
      %v1148 = vrot.slane %v939, 7
      %v1149 = vrot.slane %v1148, 2
      %v1150 = vrot.slane %v952, 7
      %v1151 = vor.u32 %v1150, %v948
      %v1152 = vsel %vm1103, %v1149, %v1151
      %v1153 = vrot.slane %v1150, 2
      %v1154 = vshrl.u32 %v747, 16
      %v1156 = vrot.slane %v1154, 7
      %v1157 = vor.u32 %v1156, %v958
      %v1158 = vsel %vm1103, %v1153, %v1157
      %v1159 = vrot.slane %v963, 7
      %v1160 = vrot.slane %v1159, 2
      %v1161 = vrot.slane %v976, 7
      %v1162 = vor.u32 %v1161, %v972
      %v1163 = vsel %vm1103, %v1160, %v1162
      %v1164 = vrot.slane %v1161, 2
      %v1165 = vshrl.u32 %v765, 16
      %v1167 = vrot.slane %v1165, 7
      %v1168 = vor.u32 %v1167, %v982
      %v1169 = vsel %vm1103, %v1164, %v1168
      %v1170 = vrot.slane %v987, 7
      %v1171 = vrot.slane %v1170, 2
      %v1172 = vrot.slane %v1000, 7
      %v1173 = vor.u32 %v1172, %v996
      %v1174 = vsel %vm1103, %v1171, %v1173
      %v1175 = vrot.slane %v1172, 2
      %v1176 = vshrl.u32 %v774, 16
      %v1178 = vrot.slane %v1176, 7
      %v1179 = vor.u32 %v1178, %v1006
      %v1180 = vsel %vm1103, %v1175, %v1179
      %v1181 = vrot.slane %v1011, 7
      %v1182 = vrot.slane %v1181, 2
      %v1183 = vrot.slane %v1024, 7
      %v1184 = vor.u32 %v1183, %v1020
      %v1185 = vsel %vm1103, %v1182, %v1184
      %v1186 = vrot.slane %v1183, 2
      %v1187 = vshrl.u32 %v783, 16
      %v1189 = vrot.slane %v1187, 7
      %v1190 = vor.u32 %v1189, %v1030
      %v1191 = vsel %vm1103, %v1186, %v1190
      %v1192 = vcombine.low %v689, %v697
      %v1193 = vcombine.low %v698, %v706
      %v1195 = vunpack.c.l.s4 1983009808
      %v1196 = vunpack.c.0.s8 %v1195
      %v1197 = vlaneseq
      %v1198 = vshrl.u32 %v1197, 7
      %v1199 = vsub.s32 %v1196, %v1198
      %v1200 = vrot.slane %v1192, %v1199
      %v1202 = vunpack.c.l.s4 1983009808
      %v1203 = vunpack.c.0.s8 %v1202
      %v1204 = vlaneseq
      %v1205 = vshrl.u32 %v1204, 7
      %v1206 = vsub.s32 %v1203, %v1205
      %v1207 = vrot.slane %v1193, %v1206
      %v1208 = vcombine.low %v1200, %v1207
      %v1209 = vcombine.low %v713, %v715
      %v1210 = vcombine.low %v731, %v730
      %v1212 = vunpack.c.l.s4 1983009808
      %v1213 = vunpack.c.0.s8 %v1212
      %v1214 = vlaneseq
      %v1215 = vshrl.u32 %v1214, 7
      %v1216 = vsub.s32 %v1213, %v1215
      %v1217 = vrot.slane %v1209, %v1216
      %v1219 = vunpack.c.l.s4 1983009808
      %v1220 = vunpack.c.0.s8 %v1219
      %v1221 = vlaneseq
      %v1222 = vshrl.u32 %v1221, 7
      %v1223 = vsub.s32 %v1220, %v1222
      %v1224 = vrot.slane %v1210, %v1223
      %v1225 = vcombine.low %v1217, %v1224
      %v1226 = vcombine.low %v740, %v748
      %v1227 = vcombine.low %v749, %v757
      %v1229 = vunpack.c.l.s4 1983009808
      %v1230 = vunpack.c.0.s8 %v1229
      %v1231 = vlaneseq
      %v1232 = vshrl.u32 %v1231, 7
      %v1233 = vsub.s32 %v1230, %v1232
      %v1234 = vrot.slane %v1226, %v1233
      %v1236 = vunpack.c.l.s4 1983009808
      %v1237 = vunpack.c.0.s8 %v1236
      %v1238 = vlaneseq
      %v1239 = vshrl.u32 %v1238, 7
      %v1240 = vsub.s32 %v1237, %v1239
      %v1241 = vrot.slane %v1227, %v1240
      %v1242 = vcombine.low %v1234, %v1241
      %v1243 = vcombine.low %v764, %v766
      %v1244 = vcombine.low %v782, %v781
      %v1246 = vunpack.c.l.s4 1983009808
      %v1247 = vunpack.c.0.s8 %v1246
      %v1248 = vlaneseq
      %v1249 = vshrl.u32 %v1248, 7
      %v1250 = vsub.s32 %v1247, %v1249
      %v1251 = vrot.slane %v1243, %v1250
      %v1253 = vunpack.c.l.s4 1983009808
      %v1254 = vunpack.c.0.s8 %v1253
      %v1255 = vlaneseq
      %v1256 = vshrl.u32 %v1255, 7
      %v1257 = vsub.s32 %v1254, %v1256
      %v1258 = vrot.slane %v1244, %v1257
      %v1259 = vcombine.low %v1251, %v1258
      %v1264 = vcombine.low %v855, %v865
      %v1265 = vcombine.low %v879, %v889
      %v1267 = vunpack.c.l.s4 1983009808
      %v1268 = vunpack.c.0.s8 %v1267
      %v1269 = vlaneseq
      %v1270 = vshrl.u32 %v1269, 7
      %v1271 = vsub.s32 %v1268, %v1270
      %v1272 = vrot.slane %v1264, %v1271
      %v1274 = vunpack.c.l.s4 1983009808
      %v1275 = vunpack.c.0.s8 %v1274
      %v1276 = vlaneseq
      %v1277 = vshrl.u32 %v1276, 7
      %v1278 = vsub.s32 %v1275, %v1277
      %v1279 = vrot.slane %v1265, %v1278
      %v1280 = vcombine.low %v1272, %v1279
      %v1281 = vcombine.low %v903, %v913
      %v1282 = vcombine.low %v927, %v937
      %v1284 = vunpack.c.l.s4 1983009808
      %v1285 = vunpack.c.0.s8 %v1284
      %v1286 = vlaneseq
      %v1287 = vshrl.u32 %v1286, 7
      %v1288 = vsub.s32 %v1285, %v1287
      %v1289 = vrot.slane %v1281, %v1288
      %v1291 = vunpack.c.l.s4 1983009808
      %v1292 = vunpack.c.0.s8 %v1291
      %v1293 = vlaneseq
      %v1294 = vshrl.u32 %v1293, 7
      %v1295 = vsub.s32 %v1292, %v1294
      %v1296 = vrot.slane %v1282, %v1295
      %v1297 = vcombine.low %v1289, %v1296
      %v1298 = vcombine.low %v951, %v961
      %v1299 = vcombine.low %v975, %v985
      %v1301 = vunpack.c.l.s4 1983009808
      %v1302 = vunpack.c.0.s8 %v1301
      %v1303 = vlaneseq
      %v1304 = vshrl.u32 %v1303, 7
      %v1305 = vsub.s32 %v1302, %v1304
      %v1306 = vrot.slane %v1298, %v1305
      %v1308 = vunpack.c.l.s4 1983009808
      %v1309 = vunpack.c.0.s8 %v1308
      %v1310 = vlaneseq
      %v1311 = vshrl.u32 %v1310, 7
      %v1312 = vsub.s32 %v1309, %v1311
      %v1313 = vrot.slane %v1299, %v1312
      %v1314 = vcombine.low %v1306, %v1313
      %v1315 = vcombine.low %v999, %v1009
      %v1316 = vcombine.low %v1023, %v1033
      %v1318 = vunpack.c.l.s4 1983009808
      %v1319 = vunpack.c.0.s8 %v1318
      %v1320 = vlaneseq
      %v1321 = vshrl.u32 %v1320, 7
      %v1322 = vsub.s32 %v1319, %v1321
      %v1323 = vrot.slane %v1315, %v1322
      %v1325 = vunpack.c.l.s4 1983009808
      %v1326 = vunpack.c.0.s8 %v1325
      %v1327 = vlaneseq
      %v1328 = vshrl.u32 %v1327, 7
      %v1329 = vsub.s32 %v1326, %v1328
      %v1330 = vrot.slane %v1316, %v1329
      %v1331 = vcombine.low %v1323, %v1330
      %v1336 = vcombine.low %v1044, %v1047
      %v1337 = vcombine.low %v1051, %v1054
      %v1339 = vunpack.c.l.s4 1983009808
      %v1340 = vunpack.c.0.s8 %v1339
      %v1341 = vlaneseq
      %v1342 = vshrl.u32 %v1341, 7
      %v1343 = vsub.s32 %v1340, %v1342
      %v1344 = vrot.slane %v1336, %v1343
      %v1346 = vunpack.c.l.s4 1983009808
      %v1347 = vunpack.c.0.s8 %v1346
      %v1348 = vlaneseq
      %v1349 = vshrl.u32 %v1348, 7
      %v1350 = vsub.s32 %v1347, %v1349
      %v1351 = vrot.slane %v1337, %v1350
      %v1352 = vcombine.low %v1344, %v1351
      %v1353 = vcombine.low %v1058, %v1061
      %v1354 = vcombine.low %v1065, %v1068
      %v1356 = vunpack.c.l.s4 1983009808
      %v1357 = vunpack.c.0.s8 %v1356
      %v1358 = vlaneseq
      %v1359 = vshrl.u32 %v1358, 7
      %v1360 = vsub.s32 %v1357, %v1359
      %v1361 = vrot.slane %v1353, %v1360
      %v1363 = vunpack.c.l.s4 1983009808
      %v1364 = vunpack.c.0.s8 %v1363
      %v1365 = vlaneseq
      %v1366 = vshrl.u32 %v1365, 7
      %v1367 = vsub.s32 %v1364, %v1366
      %v1368 = vrot.slane %v1354, %v1367
      %v1369 = vcombine.low %v1361, %v1368
      %v1370 = vcombine.low %v1072, %v1075
      %v1371 = vcombine.low %v1079, %v1082
      %v1373 = vunpack.c.l.s4 1983009808
      %v1374 = vunpack.c.0.s8 %v1373
      %v1375 = vlaneseq
      %v1376 = vshrl.u32 %v1375, 7
      %v1377 = vsub.s32 %v1374, %v1376
      %v1378 = vrot.slane %v1370, %v1377
      %v1380 = vunpack.c.l.s4 1983009808
      %v1381 = vunpack.c.0.s8 %v1380
      %v1382 = vlaneseq
      %v1383 = vshrl.u32 %v1382, 7
      %v1384 = vsub.s32 %v1381, %v1383
      %v1385 = vrot.slane %v1371, %v1384
      %v1386 = vcombine.low %v1378, %v1385
      %v1387 = vcombine.low %v1086, %v1089
      %v1388 = vcombine.low %v1093, %v1096
      %v1390 = vunpack.c.l.s4 1983009808
      %v1391 = vunpack.c.0.s8 %v1390
      %v1392 = vlaneseq
      %v1393 = vshrl.u32 %v1392, 7
      %v1394 = vsub.s32 %v1391, %v1393
      %v1395 = vrot.slane %v1387, %v1394
      %v1397 = vunpack.c.l.s4 1983009808
      %v1398 = vunpack.c.0.s8 %v1397
      %v1399 = vlaneseq
      %v1400 = vshrl.u32 %v1399, 7
      %v1401 = vsub.s32 %v1398, %v1400
      %v1402 = vrot.slane %v1388, %v1401
      %v1403 = vcombine.low %v1395, %v1402
      %v1408 = vcombine.low %v1108, %v1114
      %v1409 = vcombine.low %v1119, %v1125
      %v1411 = vunpack.c.l.s4 1983009808
      %v1412 = vunpack.c.0.s8 %v1411
      %v1413 = vlaneseq
      %v1414 = vshrl.u32 %v1413, 7
      %v1415 = vsub.s32 %v1412, %v1414
      %v1416 = vrot.slane %v1408, %v1415
      %v1418 = vunpack.c.l.s4 1983009808
      %v1419 = vunpack.c.0.s8 %v1418
      %v1420 = vlaneseq
      %v1421 = vshrl.u32 %v1420, 7
      %v1422 = vsub.s32 %v1419, %v1421
      %v1423 = vrot.slane %v1409, %v1422
      %v1424 = vcombine.low %v1416, %v1423
      %v1425 = vcombine.low %v1130, %v1136
      %v1426 = vcombine.low %v1141, %v1147
      %v1428 = vunpack.c.l.s4 1983009808
      %v1429 = vunpack.c.0.s8 %v1428
      %v1430 = vlaneseq
      %v1431 = vshrl.u32 %v1430, 7
      %v1432 = vsub.s32 %v1429, %v1431
      %v1433 = vrot.slane %v1425, %v1432
      %v1435 = vunpack.c.l.s4 1983009808
      %v1436 = vunpack.c.0.s8 %v1435
      %v1437 = vlaneseq
      %v1438 = vshrl.u32 %v1437, 7
      %v1439 = vsub.s32 %v1436, %v1438
      %v1440 = vrot.slane %v1426, %v1439
      %v1441 = vcombine.low %v1433, %v1440
      %v1442 = vcombine.low %v1152, %v1158
      %v1443 = vcombine.low %v1163, %v1169
      %v1445 = vunpack.c.l.s4 1983009808
      %v1446 = vunpack.c.0.s8 %v1445
      %v1447 = vlaneseq
      %v1448 = vshrl.u32 %v1447, 7
      %v1449 = vsub.s32 %v1446, %v1448
      %v1450 = vrot.slane %v1442, %v1449
      %v1452 = vunpack.c.l.s4 1983009808
      %v1453 = vunpack.c.0.s8 %v1452
      %v1454 = vlaneseq
      %v1455 = vshrl.u32 %v1454, 7
      %v1456 = vsub.s32 %v1453, %v1455
      %v1457 = vrot.slane %v1443, %v1456
      %v1458 = vcombine.low %v1450, %v1457
      %v1459 = vcombine.low %v1174, %v1180
      %v1460 = vcombine.low %v1185, %v1191
      %v1462 = vunpack.c.l.s4 1983009808
      %v1463 = vunpack.c.0.s8 %v1462
      %v1464 = vlaneseq
      %v1465 = vshrl.u32 %v1464, 7
      %v1466 = vsub.s32 %v1463, %v1465
      %v1467 = vrot.slane %v1459, %v1466
      %v1469 = vunpack.c.l.s4 1983009808
      %v1470 = vunpack.c.0.s8 %v1469
      %v1471 = vlaneseq
      %v1472 = vshrl.u32 %v1471, 7
      %v1473 = vsub.s32 %v1470, %v1472
      %v1474 = vrot.slane %v1460, %v1473
      %v1475 = vcombine.low %v1467, %v1474
      %v1480 = vld [vmem:[%s3] sm:$0xf]
      %v1481 = vld [vmem:[%s3 + $0x4] sm:$0xf]
      %v1482 = vld [vmem:[%s3 + $0x8] sm:$0xf]
      %v1483 = vld [vmem:[%s3 + $0xc] sm:$0xf]
      %v1484 = vld [vmem:[%s3 + $0x10] sm:$0xf]
      %v1485 = vld [vmem:[%s3 + $0x14] sm:$0xf]
      %v1486 = vld [vmem:[%s3 + $0x18] sm:$0xf]
      %v1487 = vld [vmem:[%s3 + $0x1c] sm:$0xf]
      %v1488 = vld [vmem:[%s3 + $0x20] sm:$0xf]
      %v1489 = vld [vmem:[%s3 + $0x24] sm:$0xf]
      %v1490 = vld [vmem:[%s3 + $0x28] sm:$0xf]
      %v1491 = vld [vmem:[%s3 + $0x2c] sm:$0xf]
      %v1492 = vld [vmem:[%s3 + $0x30] sm:$0xf]
      %v1493 = vld [vmem:[%s3 + $0x34] sm:$0xf]
      %v1494 = vld [vmem:[%s3 + $0x38] sm:$0xf]
      %v1495 = vld [vmem:[%s3 + $0x3c] sm:$0xf]
      %v1496 = vld [vmem:[%s3 + $0x40] sm:$0xf]
      %v1497 = vld [vmem:[%s3 + $0x44] sm:$0xf]
      %v1498 = vld [vmem:[%s3 + $0x48] sm:$0xf]
      %v1499 = vld [vmem:[%s3 + $0x4c] sm:$0xf]
      %v1500 = vld [vmem:[%s3 + $0x50] sm:$0xf]
      %v1501 = vld [vmem:[%s3 + $0x54] sm:$0xf]
      %v1502 = vld [vmem:[%s3 + $0x58] sm:$0xf]
      %v1503 = vld [vmem:[%s3 + $0x5c] sm:$0xf]
      %v1504 = vld [vmem:[%s3 + $0x60] sm:$0xf]
      %v1505 = vld [vmem:[%s3 + $0x64] sm:$0xf]
      %v1506 = vld [vmem:[%s3 + $0x68] sm:$0xf]
      %v1507 = vld [vmem:[%s3 + $0x6c] sm:$0xf]
      %v1508 = vld [vmem:[%s3 + $0x70] sm:$0xf]
      %v1509 = vld [vmem:[%s3 + $0x74] sm:$0xf]
      %v1510 = vld [vmem:[%s3 + $0x78] sm:$0xf]
      %v1511 = vld [vmem:[%s3 + $0x7c] sm:$0xf]
      %v1512 = vld [vmem:[%s3 + $0x80] sm:$0xf]
      %v1513 = vld [vmem:[%s3 + $0x84] sm:$0xf]
      %v1514 = vld [vmem:[%s3 + $0x88] sm:$0xf]
      %v1515 = vld [vmem:[%s3 + $0x8c] sm:$0xf]
      %v1516 = vld [vmem:[%s3 + $0x90] sm:$0xf]
      %v1517 = vld [vmem:[%s3 + $0x94] sm:$0xf]
      %v1518 = vld [vmem:[%s3 + $0x98] sm:$0xf]
      %v1519 = vld [vmem:[%s3 + $0x9c] sm:$0xf]
      %v1520 = vld [vmem:[%s3 + $0xa0] sm:$0xf]
      %v1521 = vld [vmem:[%s3 + $0xa4] sm:$0xf]
      %v1522 = vld [vmem:[%s3 + $0xa8] sm:$0xf]
      %v1523 = vld [vmem:[%s3 + $0xac] sm:$0xf]
      %v1524 = vld [vmem:[%s3 + $0xb0] sm:$0xf]
      %v1525 = vld [vmem:[%s3 + $0xb4] sm:$0xf]
      %v1526 = vld [vmem:[%s3 + $0xb8] sm:$0xf]
      %v1527 = vld [vmem:[%s3 + $0xbc] sm:$0xf]
      %v1528 = vld [vmem:[%s3 + $0xc0] sm:$0xf]
      %v1529 = vld [vmem:[%s3 + $0xc4] sm:$0xf]
      %v1530 = vld [vmem:[%s3 + $0xc8] sm:$0xf]
      %v1531 = vld [vmem:[%s3 + $0xcc] sm:$0xf]
      %v1532 = vld [vmem:[%s3 + $0xd0] sm:$0xf]
      %v1533 = vld [vmem:[%s3 + $0xd4] sm:$0xf]
      %v1534 = vld [vmem:[%s3 + $0xd8] sm:$0xf]
      %v1535 = vld [vmem:[%s3 + $0xdc] sm:$0xf]
      %v1536 = vld [vmem:[%s3 + $0xe0] sm:$0xf]
      %v1537 = vld [vmem:[%s3 + $0xe4] sm:$0xf]
      %v1538 = vld [vmem:[%s3 + $0xe8] sm:$0xf]
      %v1539 = vld [vmem:[%s3 + $0xec] sm:$0xf]
      %v1540 = vld [vmem:[%s3 + $0xf0] sm:$0xf]
      %v1541 = vld [vmem:[%s3 + $0xf4] sm:$0xf]
      %v1542 = vld [vmem:[%s3 + $0xf8] sm:$0xf]
      %v1543 = vld [vmem:[%s3 + $0xfc] sm:$0xf]
      %v1545 = vshrl.u32 %v791, 16
      %v1547 = vrot.slane %v1545, 6
      %v1548 = vshll.u32 %v791, 16
      %v1550 = vrot.slane %v1548, 7
      %v1551 = vor.u32 %v1547, %v1550
      %v1552 = vrot.slane %v1551, 2
      %v1554 = vshll.u32 %v799, 16
      %v1556 = vrot.slane %v1554, 7
      %v1557 = vsel %vm841, %v1552, %v1556
      %v1558 = vshrl.u32 %v799, 16
      %v1560 = vrot.slane %v1558, 6
      %v1561 = vor.u32 %v1560, %v1556
      %v1562 = vrot.slane %v1561, 2
      %v1564 = vshll.u32 %v798, 16
      %v1566 = vrot.slane %v1564, 7
      %v1567 = vsel %vm841, %v1562, %v1566
      %v1568 = vrot.slane %v791, 7
      %v1569 = vrot.slane %v1568, 2
      %v1570 = vrot.slane %v799, 7
      %v1571 = vsel %vm1040, %v1569, %v1570
      %v1572 = vrot.slane %v1570, 2
      %v1573 = vrot.slane %v798, 7
      %v1574 = vsel %vm1040, %v1572, %v1573
      %v1575 = vcombine.low %v697, %v696
      %v1576 = vcombine.low %v706, %v714
      %v1578 = vunpack.c.l.s4 1983009808
      %v1579 = vunpack.c.0.s8 %v1578
      %v1580 = vlaneseq
      %v1581 = vshrl.u32 %v1580, 7
      %v1582 = vsub.s32 %v1579, %v1581
      %v1583 = vrot.slane %v1575, %v1582
      %v1585 = vunpack.c.l.s4 1983009808
      %v1586 = vunpack.c.0.s8 %v1585
      %v1587 = vlaneseq
      %v1588 = vshrl.u32 %v1587, 7
      %v1589 = vsub.s32 %v1586, %v1588
      %v1590 = vrot.slane %v1576, %v1589
      %v1591 = vcombine.low %v1583, %v1590
      %v1592 = vcombine.low %v715, %v723
      %v1593 = vcombine.low %v730, %v732
      %v1595 = vunpack.c.l.s4 1983009808
      %v1596 = vunpack.c.0.s8 %v1595
      %v1597 = vlaneseq
      %v1598 = vshrl.u32 %v1597, 7
      %v1599 = vsub.s32 %v1596, %v1598
      %v1600 = vrot.slane %v1592, %v1599
      %v1602 = vunpack.c.l.s4 1983009808
      %v1603 = vunpack.c.0.s8 %v1602
      %v1604 = vlaneseq
      %v1605 = vshrl.u32 %v1604, 7
      %v1606 = vsub.s32 %v1603, %v1605
      %v1607 = vrot.slane %v1593, %v1606
      %v1608 = vcombine.low %v1600, %v1607
      %v1609 = vcombine.low %v748, %v747
      %v1610 = vcombine.low %v757, %v765
      %v1612 = vunpack.c.l.s4 1983009808
      %v1613 = vunpack.c.0.s8 %v1612
      %v1614 = vlaneseq
      %v1615 = vshrl.u32 %v1614, 7
      %v1616 = vsub.s32 %v1613, %v1615
      %v1617 = vrot.slane %v1609, %v1616
      %v1619 = vunpack.c.l.s4 1983009808
      %v1620 = vunpack.c.0.s8 %v1619
      %v1621 = vlaneseq
      %v1622 = vshrl.u32 %v1621, 7
      %v1623 = vsub.s32 %v1620, %v1622
      %v1624 = vrot.slane %v1610, %v1623
      %v1625 = vcombine.low %v1617, %v1624
      %v1626 = vcombine.low %v766, %v774
      %v1627 = vcombine.low %v781, %v783
      %v1629 = vunpack.c.l.s4 1983009808
      %v1630 = vunpack.c.0.s8 %v1629
      %v1631 = vlaneseq
      %v1632 = vshrl.u32 %v1631, 7
      %v1633 = vsub.s32 %v1630, %v1632
      %v1634 = vrot.slane %v1626, %v1633
      %v1636 = vunpack.c.l.s4 1983009808
      %v1637 = vunpack.c.0.s8 %v1636
      %v1638 = vlaneseq
      %v1639 = vshrl.u32 %v1638, 7
      %v1640 = vsub.s32 %v1637, %v1639
      %v1641 = vrot.slane %v1627, %v1640
      %v1642 = vcombine.low %v1634, %v1641
      %v1647 = vcombine.low %v1207, %v1217
      %v1648 = vcombine.low %v1224, %v1234
      %v1649 = vcombine.low %v1241, %v1251
      %v1650 = vcombine.low %v791, %v799
      %v1652 = vunpack.c.l.s4 1983009808
      %v1653 = vunpack.c.0.s8 %v1652
      %v1654 = vlaneseq
      %v1655 = vshrl.u32 %v1654, 7
      %v1656 = vsub.s32 %v1653, %v1655
      %v1657 = vrot.slane %v1650, %v1656
      %v1658 = vcombine.low %v1258, %v1657
      %v1663 = vcombine.low %v1279, %v1289
      %v1664 = vcombine.low %v1296, %v1306
      %v1665 = vcombine.low %v1313, %v1323
      %v1666 = vcombine.low %v1557, %v1567
      %v1668 = vunpack.c.l.s4 1983009808
      %v1669 = vunpack.c.0.s8 %v1668
      %v1670 = vlaneseq
      %v1671 = vshrl.u32 %v1670, 7
      %v1672 = vsub.s32 %v1669, %v1671
      %v1673 = vrot.slane %v1666, %v1672
      %v1674 = vcombine.low %v1330, %v1673
      %v1679 = vcombine.low %v1351, %v1361
      %v1680 = vcombine.low %v1368, %v1378
      %v1681 = vcombine.low %v1385, %v1395
      %v1682 = vcombine.low %v1571, %v1574
      %v1684 = vunpack.c.l.s4 1983009808
      %v1685 = vunpack.c.0.s8 %v1684
      %v1686 = vlaneseq
      %v1687 = vshrl.u32 %v1686, 7
      %v1688 = vsub.s32 %v1685, %v1687
      %v1689 = vrot.slane %v1682, %v1688
      %v1690 = vcombine.low %v1402, %v1689
      %s1695 = scalar_lea.vmem %s3, 256
      %v1696 = vld [vmem:[%s1695] sm:$0xf]
      %v1697 = vld [vmem:[%s1695 + $0x4] sm:$0xf]
      %v1698 = vld [vmem:[%s1695 + $0x8] sm:$0xf]
      %v1699 = vld [vmem:[%s1695 + $0xc] sm:$0xf]
      %v1700 = vld [vmem:[%s1695 + $0x10] sm:$0xf]
      %v1701 = vld [vmem:[%s1695 + $0x14] sm:$0xf]
      %v1702 = vld [vmem:[%s1695 + $0x18] sm:$0xf]
      %v1703 = vld [vmem:[%s1695 + $0x1c] sm:$0xf]
      %v1704 = vld [vmem:[%s1695 + $0x20] sm:$0xf]
      %v1705 = vld [vmem:[%s1695 + $0x24] sm:$0xf]
      %v1706 = vld [vmem:[%s1695 + $0x28] sm:$0xf]
      %v1707 = vld [vmem:[%s1695 + $0x2c] sm:$0xf]
      %v1708 = vld [vmem:[%s1695 + $0x30] sm:$0xf]
      %v1709 = vld [vmem:[%s1695 + $0x34] sm:$0xf]
      %v1710 = vld [vmem:[%s1695 + $0x38] sm:$0xf]
      %v1711 = vld [vmem:[%s1695 + $0x3c] sm:$0xf]
      %v1712 = vld [vmem:[%s1695 + $0x40] sm:$0xf]
      %v1713 = vld [vmem:[%s1695 + $0x44] sm:$0xf]
      %v1714 = vld [vmem:[%s1695 + $0x48] sm:$0xf]
      %v1715 = vld [vmem:[%s1695 + $0x4c] sm:$0xf]
      %v1716 = vld [vmem:[%s1695 + $0x50] sm:$0xf]
      %v1717 = vld [vmem:[%s1695 + $0x54] sm:$0xf]
      %v1718 = vld [vmem:[%s1695 + $0x58] sm:$0xf]
      %v1719 = vld [vmem:[%s1695 + $0x5c] sm:$0xf]
      %v1720 = vld [vmem:[%s1695 + $0x60] sm:$0xf]
      %v1721 = vld [vmem:[%s1695 + $0x64] sm:$0xf]
      %v1722 = vld [vmem:[%s1695 + $0x68] sm:$0xf]
      %v1723 = vld [vmem:[%s1695 + $0x6c] sm:$0xf]
      %v1724 = vld [vmem:[%s1695 + $0x70] sm:$0xf]
      %v1725 = vld [vmem:[%s1695 + $0x74] sm:$0xf]
      %v1726 = vld [vmem:[%s1695 + $0x78] sm:$0xf]
      %v1727 = vld [vmem:[%s1695 + $0x7c] sm:$0xf]
      %v1728 = vld [vmem:[%s1695 + $0x80] sm:$0xf]
      %v1729 = vld [vmem:[%s1695 + $0x84] sm:$0xf]
      %v1730 = vld [vmem:[%s1695 + $0x88] sm:$0xf]
      %v1731 = vld [vmem:[%s1695 + $0x8c] sm:$0xf]
      %v1732 = vld [vmem:[%s1695 + $0x90] sm:$0xf]
      %v1733 = vld [vmem:[%s1695 + $0x94] sm:$0xf]
      %v1734 = vld [vmem:[%s1695 + $0x98] sm:$0xf]
      %v1735 = vld [vmem:[%s1695 + $0x9c] sm:$0xf]
      %v1736 = vld [vmem:[%s1695 + $0xa0] sm:$0xf]
      %v1737 = vld [vmem:[%s1695 + $0xa4] sm:$0xf]
      %v1738 = vld [vmem:[%s1695 + $0xa8] sm:$0xf]
      %v1739 = vld [vmem:[%s1695 + $0xac] sm:$0xf]
      %v1740 = vld [vmem:[%s1695 + $0xb0] sm:$0xf]
      %v1741 = vld [vmem:[%s1695 + $0xb4] sm:$0xf]
      %v1742 = vld [vmem:[%s1695 + $0xb8] sm:$0xf]
      %v1743 = vld [vmem:[%s1695 + $0xbc] sm:$0xf]
      %v1744 = vld [vmem:[%s1695 + $0xc0] sm:$0xf]
      %v1745 = vld [vmem:[%s1695 + $0xc4] sm:$0xf]
      %v1746 = vld [vmem:[%s1695 + $0xc8] sm:$0xf]
      %v1747 = vld [vmem:[%s1695 + $0xcc] sm:$0xf]
      %v1748 = vld [vmem:[%s1695 + $0xd0] sm:$0xf]
      %v1749 = vld [vmem:[%s1695 + $0xd4] sm:$0xf]
      %v1750 = vld [vmem:[%s1695 + $0xd8] sm:$0xf]
      %v1751 = vld [vmem:[%s1695 + $0xdc] sm:$0xf]
      %v1752 = vld [vmem:[%s1695 + $0xe0] sm:$0xf]
      %v1753 = vld [vmem:[%s1695 + $0xe4] sm:$0xf]
      %v1754 = vld [vmem:[%s1695 + $0xe8] sm:$0xf]
      %v1755 = vld [vmem:[%s1695 + $0xec] sm:$0xf]
      %v1756 = vld [vmem:[%s1695 + $0xf0] sm:$0xf]
      %v1757 = vld [vmem:[%s1695 + $0xf4] sm:$0xf]
      %v1758 = vld [vmem:[%s1695 + $0xf8] sm:$0xf]
      %v1759 = vld [vmem:[%s1695 + $0xfc] sm:$0xf]
      %v1824 = vunpack.c.l.b16 %v1696
      %v1825 = vunpack.c.l.b16 %v1697
      %v1826 = vunpack.c.l.b16 %v1698
      %v1827 = vunpack.c.l.b16 %v1699
      %v1828 = vunpack.c.l.b16 %v1700
      %v1829 = vunpack.c.l.b16 %v1701
      %v1830 = vunpack.c.l.b16 %v1702
      %v1831 = vunpack.c.l.b16 %v1703
      %v1832 = vunpack.c.l.b16 %v1704
      %v1833 = vunpack.c.l.b16 %v1705
      %v1834 = vunpack.c.l.b16 %v1706
      %v1835 = vunpack.c.l.b16 %v1707
      %v1836 = vunpack.c.l.b16 %v1708
      %v1837 = vunpack.c.l.b16 %v1709
      %v1838 = vunpack.c.l.b16 %v1710
      %v1839 = vunpack.c.l.b16 %v1711
      %v1840 = vunpack.c.l.b16 %v1712
      %v1841 = vunpack.c.l.b16 %v1713
      %v1842 = vunpack.c.l.b16 %v1714
      %v1843 = vunpack.c.l.b16 %v1715
      %v1844 = vunpack.c.l.b16 %v1716
      %v1845 = vunpack.c.l.b16 %v1717
      %v1846 = vunpack.c.l.b16 %v1718
      %v1847 = vunpack.c.l.b16 %v1719
      %v1848 = vunpack.c.l.b16 %v1720
      %v1849 = vunpack.c.l.b16 %v1721
      %v1850 = vunpack.c.l.b16 %v1722
      %v1851 = vunpack.c.l.b16 %v1723
      %v1852 = vunpack.c.l.b16 %v1724
      %v1853 = vunpack.c.l.b16 %v1725
      %v1854 = vunpack.c.l.b16 %v1726
      %v1855 = vunpack.c.l.b16 %v1727
      %v1856 = vunpack.c.l.b16 %v1728
      %v1857 = vunpack.c.l.b16 %v1729
      %v1858 = vunpack.c.l.b16 %v1730
      %v1859 = vunpack.c.l.b16 %v1731
      %v1860 = vunpack.c.l.b16 %v1732
      %v1861 = vunpack.c.l.b16 %v1733
      %v1862 = vunpack.c.l.b16 %v1734
      %v1863 = vunpack.c.l.b16 %v1735
      %v1864 = vunpack.c.l.b16 %v1736
      %v1865 = vunpack.c.l.b16 %v1737
      %v1866 = vunpack.c.l.b16 %v1738
      %v1867 = vunpack.c.l.b16 %v1739
      %v1868 = vunpack.c.l.b16 %v1740
      %v1869 = vunpack.c.l.b16 %v1741
      %v1870 = vunpack.c.l.b16 %v1742
      %v1871 = vunpack.c.l.b16 %v1743
      %v1872 = vunpack.c.l.b16 %v1744
      %v1873 = vunpack.c.l.b16 %v1745
      %v1874 = vunpack.c.l.b16 %v1746
      %v1875 = vunpack.c.l.b16 %v1747
      %v1876 = vunpack.c.l.b16 %v1748
      %v1877 = vunpack.c.l.b16 %v1749
      %v1878 = vunpack.c.l.b16 %v1750
      %v1879 = vunpack.c.l.b16 %v1751
      %v1880 = vunpack.c.l.b16 %v1752
      %v1881 = vunpack.c.l.b16 %v1753
      %v1882 = vunpack.c.l.b16 %v1754
      %v1883 = vunpack.c.l.b16 %v1755
      %v1884 = vunpack.c.l.b16 %v1756
      %v1885 = vunpack.c.l.b16 %v1757
      %v1886 = vunpack.c.l.b16 %v1758
      %v1887 = vunpack.c.l.b16 %v1759
      %v1888 = vpack.c.b16 %v1825, %v1824
      %v1889 = vpack.c.b16 %v1827, %v1826
      %v1890 = vpack.c.b16 %v1829, %v1828
      %v1891 = vpack.c.b16 %v1831, %v1830
      %v1892 = vpack.c.b16 %v1833, %v1832
      %v1893 = vpack.c.b16 %v1835, %v1834
      %v1894 = vpack.c.b16 %v1837, %v1836
      %v1895 = vpack.c.b16 %v1839, %v1838
      %v1896 = vpack.c.b16 %v1841, %v1840
      %v1897 = vpack.c.b16 %v1843, %v1842
      %v1898 = vpack.c.b16 %v1845, %v1844
      %v1899 = vpack.c.b16 %v1847, %v1846
      %v1900 = vpack.c.b16 %v1849, %v1848
      %v1901 = vpack.c.b16 %v1851, %v1850
      %v1902 = vpack.c.b16 %v1853, %v1852
      %v1903 = vpack.c.b16 %v1855, %v1854
      %v1904 = vpack.c.b16 %v1857, %v1856
      %v1905 = vpack.c.b16 %v1859, %v1858
      %v1906 = vpack.c.b16 %v1861, %v1860
      %v1907 = vpack.c.b16 %v1863, %v1862
      %v1908 = vpack.c.b16 %v1865, %v1864
      %v1909 = vpack.c.b16 %v1867, %v1866
      %v1910 = vpack.c.b16 %v1869, %v1868
      %v1911 = vpack.c.b16 %v1871, %v1870
      %v1912 = vpack.c.b16 %v1873, %v1872
      %v1913 = vpack.c.b16 %v1875, %v1874
      %v1914 = vpack.c.b16 %v1877, %v1876
      %v1915 = vpack.c.b16 %v1879, %v1878
      %v1916 = vpack.c.b16 %v1881, %v1880
      %v1917 = vpack.c.b16 %v1883, %v1882
      %v1918 = vpack.c.b16 %v1885, %v1884
      %v1919 = vpack.c.b16 %v1887, %v1886
      %1952 = vmatprep.subr.bf16.mxu0 0
      %1953 = vmatpush1.bf16.msra.mxu0 %v1888
      %1954 = vmatprep.subr.bf16.mxu0 0
      %1955 = vmatpush1.bf16.msra.mxu0 %v1889
      %1956 = vmatprep.subr.bf16.mxu0 0
      %1957 = vmatpush1.bf16.msra.mxu0 %v1890
      %1958 = vmatprep.subr.bf16.mxu0 0
      %1959 = vmatpush1.bf16.msra.mxu0 %v1891
      %1960 = vmatprep.subr.bf16.mxu0 0
      %1961 = vmatpush1.bf16.msra.mxu0 %v1892
      %1962 = vmatprep.subr.bf16.mxu0 0
      %1963 = vmatpush1.bf16.msra.mxu0 %v1893
      %1964 = vmatprep.subr.bf16.mxu0 0
      %1965 = vmatpush1.bf16.msra.mxu0 %v1894
      %1966 = vmatprep.subr.bf16.mxu0 0
      %1967 = vmatpush1.bf16.msra.mxu0 %v1895
      %1968 = vmatprep.subr.bf16.mxu0 0
      %1969 = vmatpush1.bf16.msra.mxu0 %v1896
      %1970 = vmatprep.subr.bf16.mxu0 0
      %1971 = vmatpush1.bf16.msra.mxu0 %v1897
      %1972 = vmatprep.subr.bf16.mxu0 0
      %1973 = vmatpush1.bf16.msra.mxu0 %v1898
      %1974 = vmatprep.subr.bf16.mxu0 0
      %1975 = vmatpush1.bf16.msra.mxu0 %v1899
      %1976 = vmatprep.subr.bf16.mxu0 0
      %1977 = vmatpush1.bf16.msra.mxu0 %v1900
      %1978 = vmatprep.subr.bf16.mxu0 0
      %1979 = vmatpush1.bf16.msra.mxu0 %v1901
      %1980 = vmatprep.subr.bf16.mxu0 0
      %1981 = vmatpush1.bf16.msra.mxu0 %v1902
      %1982 = vmatprep.subr.bf16.mxu0 0
      %1983 = vmatpush1.bf16.msra.mxu0 %v1903
      %1984 = vmatprep.mubr.bf16.mxu0 %v1647
      %1985 = vmatmul.mubr.bf16.gmra.mrb[0].mxu0 %v1591
      %v1986 = vpop.f32.mrb[0].mxu0
      %v1987 = vadd.f32 0.0, %v1986
      %v1988 = vpop.f32.mrb[0].mxu0
      %v1989 = vpop.f32.mrb[0].mxu0
      %v1990 = vadd.f32 0.0, %v1989
      %v1991 = vpop.f32.mrb[0].mxu0
      %1992 = vmatprep.mubr.bf16.mxu0 %v1648
      %1993 = vmatmul.mubr.bf16.gmra.mrb[0].mxu0 %v1608
      %v1994 = vpop.f32.mrb[0].mxu0
      %v1995 = vadd.f32 0.0, %v1994
      %v1996 = vpop.f32.mrb[0].mxu0
      %v1997 = vpop.f32.mrb[0].mxu0
      %v1998 = vadd.f32 0.0, %v1997
      %v1999 = vpop.f32.mrb[0].mxu0
      %2000 = vmatprep.mubr.bf16.mxu0 %v1649
      %2001 = vmatmul.mubr.bf16.gmra.mrb[0].mxu0 %v1625
      %v2002 = vpop.f32.mrb[0].mxu0
      %v2003 = vadd.f32 0.0, %v2002
      %v2004 = vpop.f32.mrb[0].mxu0
      %v2005 = vpop.f32.mrb[0].mxu0
      %v2006 = vadd.f32 0.0, %v2005
      %v2007 = vpop.f32.mrb[0].mxu0
      %2008 = vmatprep.mubr.bf16.mxu0 %v1658
      %2009 = vmatmul.mubr.bf16.gmra.mrb[0].mxu0 %v1642
      %v2010 = vpop.f32.mrb[0].mxu0
      %v2011 = vadd.f32 0.0, %v2010
      %v2012 = vpop.f32.mrb[0].mxu0
      %v2013 = vpop.f32.mrb[0].mxu0
      %v2014 = vadd.f32 0.0, %v2013
      %v2015 = vpop.f32.mrb[0].mxu0
      %2016 = vdwg.mxu0
      %2017 = vmatprep.subr.bf16.mxu0 0
      %2018 = vmatpush1.bf16.msra.mxu0 %v1904
      %2019 = vmatprep.subr.bf16.mxu0 0
      %2020 = vmatpush1.bf16.msra.mxu0 %v1905
      %2021 = vmatprep.subr.bf16.mxu0 0
      %2022 = vmatpush1.bf16.msra.mxu0 %v1906
      %2023 = vmatprep.subr.bf16.mxu0 0
      %2024 = vmatpush1.bf16.msra.mxu0 %v1907
      %2025 = vmatprep.subr.bf16.mxu0 0
      %2026 = vmatpush1.bf16.msra.mxu0 %v1908
      %2027 = vmatprep.subr.bf16.mxu0 0
      %2028 = vmatpush1.bf16.msra.mxu0 %v1909
      %2029 = vmatprep.subr.bf16.mxu0 0
      %2030 = vmatpush1.bf16.msra.mxu0 %v1910
      %2031 = vmatprep.subr.bf16.mxu0 0
      %2032 = vmatpush1.bf16.msra.mxu0 %v1911
      %2033 = vmatprep.subr.bf16.mxu0 0
      %2034 = vmatpush1.bf16.msra.mxu0 %v1912
      %2035 = vmatprep.subr.bf16.mxu0 0
      %2036 = vmatpush1.bf16.msra.mxu0 %v1913
      %2037 = vmatprep.subr.bf16.mxu0 0
      %2038 = vmatpush1.bf16.msra.mxu0 %v1914
      %2039 = vmatprep.subr.bf16.mxu0 0
      %2040 = vmatpush1.bf16.msra.mxu0 %v1915
      %2041 = vmatprep.subr.bf16.mxu0 0
      %2042 = vmatpush1.bf16.msra.mxu0 %v1916
      %2043 = vmatprep.subr.bf16.mxu0 0
      %2044 = vmatpush1.bf16.msra.mxu0 %v1917
      %2045 = vmatprep.subr.bf16.mxu0 0
      %2046 = vmatpush1.bf16.msra.mxu0 %v1918
      %2047 = vmatprep.subr.bf16.mxu0 0
      %2048 = vmatpush1.bf16.msra.mxu0 %v1919
      %2049 = vmatprep.mubr.bf16.mxu0 %v1679
      %2050 = vmatmul.mubr.bf16.gmra.mrb[0].mxu0 %v1663
      %v2051 = vpop.f32.mrb[0].mxu0
      %v2052 = vadd.f32 %v1987, %v2051
      %v2053 = vpop.f32.mrb[0].mxu0
      %v2054 = vpop.f32.mrb[0].mxu0
      %v2055 = vadd.f32 %v1990, %v2054
      %v2056 = vpop.f32.mrb[0].mxu0
      %2057 = vmatprep.mubr.bf16.mxu0 %v1680
      %2058 = vmatmul.mubr.bf16.gmra.mrb[0].mxu0 %v1664
      %v2059 = vpop.f32.mrb[0].mxu0
      %v2060 = vadd.f32 %v1995, %v2059
      %v2061 = vpop.f32.mrb[0].mxu0
      %v2062 = vpop.f32.mrb[0].mxu0
      %v2063 = vadd.f32 %v1998, %v2062
      %v2064 = vpop.f32.mrb[0].mxu0
      %2065 = vmatprep.mubr.bf16.mxu0 %v1681
      %2066 = vmatmul.mubr.bf16.gmra.mrb[0].mxu0 %v1665
      %v2067 = vpop.f32.mrb[0].mxu0
      %v2068 = vadd.f32 %v2003, %v2067
      %v2069 = vpop.f32.mrb[0].mxu0
      %v2070 = vpop.f32.mrb[0].mxu0
      %v2071 = vadd.f32 %v2006, %v2070
      %v2072 = vpop.f32.mrb[0].mxu0
      %2073 = vmatprep.mubr.bf16.mxu0 %v1690
      %2074 = vmatmul.mubr.bf16.gmra.mrb[0].mxu0 %v1674
      %v2075 = vpop.f32.mrb[0].mxu0
      %v2076 = vadd.f32 %v2011, %v2075
      %v2077 = vpop.f32.mrb[0].mxu0
      %v2078 = vpop.f32.mrb[0].mxu0
      %v2079 = vadd.f32 %v2014, %v2078
      %v2080 = vpop.f32.mrb[0].mxu0
      %2081 = vdwg.mxu0
      %v2146 = vunpack.c.l.b16 %v1480
      %v2147 = vunpack.c.l.b16 %v1481
      %v2148 = vunpack.c.l.b16 %v1482
      %v2149 = vunpack.c.l.b16 %v1483
      %v2150 = vunpack.c.l.b16 %v1484
      %v2151 = vunpack.c.l.b16 %v1485
      %v2152 = vunpack.c.l.b16 %v1486
      %v2153 = vunpack.c.l.b16 %v1487
      %v2154 = vunpack.c.l.b16 %v1488
      %v2155 = vunpack.c.l.b16 %v1489
      %v2156 = vunpack.c.l.b16 %v1490
      %v2157 = vunpack.c.l.b16 %v1491
      %v2158 = vunpack.c.l.b16 %v1492
      %v2159 = vunpack.c.l.b16 %v1493
      %v2160 = vunpack.c.l.b16 %v1494
      %v2161 = vunpack.c.l.b16 %v1495
      %v2162 = vunpack.c.l.b16 %v1496
      %v2163 = vunpack.c.l.b16 %v1497
      %v2164 = vunpack.c.l.b16 %v1498
      %v2165 = vunpack.c.l.b16 %v1499
      %v2166 = vunpack.c.l.b16 %v1500
      %v2167 = vunpack.c.l.b16 %v1501
      %v2168 = vunpack.c.l.b16 %v1502
      %v2169 = vunpack.c.l.b16 %v1503
      %v2170 = vunpack.c.l.b16 %v1504
      %v2171 = vunpack.c.l.b16 %v1505
      %v2172 = vunpack.c.l.b16 %v1506
      %v2173 = vunpack.c.l.b16 %v1507
      %v2174 = vunpack.c.l.b16 %v1508
      %v2175 = vunpack.c.l.b16 %v1509
      %v2176 = vunpack.c.l.b16 %v1510
      %v2177 = vunpack.c.l.b16 %v1511
      %v2178 = vunpack.c.l.b16 %v1512
      %v2179 = vunpack.c.l.b16 %v1513
      %v2180 = vunpack.c.l.b16 %v1514
      %v2181 = vunpack.c.l.b16 %v1515
      %v2182 = vunpack.c.l.b16 %v1516
      %v2183 = vunpack.c.l.b16 %v1517
      %v2184 = vunpack.c.l.b16 %v1518
      %v2185 = vunpack.c.l.b16 %v1519
      %v2186 = vunpack.c.l.b16 %v1520
      %v2187 = vunpack.c.l.b16 %v1521
      %v2188 = vunpack.c.l.b16 %v1522
      %v2189 = vunpack.c.l.b16 %v1523
      %v2190 = vunpack.c.l.b16 %v1524
      %v2191 = vunpack.c.l.b16 %v1525
      %v2192 = vunpack.c.l.b16 %v1526
      %v2193 = vunpack.c.l.b16 %v1527
      %v2194 = vunpack.c.l.b16 %v1528
      %v2195 = vunpack.c.l.b16 %v1529
      %v2196 = vunpack.c.l.b16 %v1530
      %v2197 = vunpack.c.l.b16 %v1531
      %v2198 = vunpack.c.l.b16 %v1532
      %v2199 = vunpack.c.l.b16 %v1533
      %v2200 = vunpack.c.l.b16 %v1534
      %v2201 = vunpack.c.l.b16 %v1535
      %v2202 = vunpack.c.l.b16 %v1536
      %v2203 = vunpack.c.l.b16 %v1537
      %v2204 = vunpack.c.l.b16 %v1538
      %v2205 = vunpack.c.l.b16 %v1539
      %v2206 = vunpack.c.l.b16 %v1540
      %v2207 = vunpack.c.l.b16 %v1541
      %v2208 = vunpack.c.l.b16 %v1542
      %v2209 = vunpack.c.l.b16 %v1543
      %v2210 = vpack.c.b16 %v2147, %v2146
      %v2211 = vpack.c.b16 %v2149, %v2148
      %v2212 = vpack.c.b16 %v2151, %v2150
      %v2213 = vpack.c.b16 %v2153, %v2152
      %v2214 = vpack.c.b16 %v2155, %v2154
      %v2215 = vpack.c.b16 %v2157, %v2156
      %v2216 = vpack.c.b16 %v2159, %v2158
      %v2217 = vpack.c.b16 %v2161, %v2160
      %v2218 = vpack.c.b16 %v2163, %v2162
      %v2219 = vpack.c.b16 %v2165, %v2164
      %v2220 = vpack.c.b16 %v2167, %v2166
      %v2221 = vpack.c.b16 %v2169, %v2168
      %v2222 = vpack.c.b16 %v2171, %v2170
      %v2223 = vpack.c.b16 %v2173, %v2172
      %v2224 = vpack.c.b16 %v2175, %v2174
      %v2225 = vpack.c.b16 %v2177, %v2176
      %v2226 = vpack.c.b16 %v2179, %v2178
      %v2227 = vpack.c.b16 %v2181, %v2180
      %v2228 = vpack.c.b16 %v2183, %v2182
      %v2229 = vpack.c.b16 %v2185, %v2184
      %v2230 = vpack.c.b16 %v2187, %v2186
      %v2231 = vpack.c.b16 %v2189, %v2188
      %v2232 = vpack.c.b16 %v2191, %v2190
      %v2233 = vpack.c.b16 %v2193, %v2192
      %v2234 = vpack.c.b16 %v2195, %v2194
      %v2235 = vpack.c.b16 %v2197, %v2196
      %v2236 = vpack.c.b16 %v2199, %v2198
      %v2237 = vpack.c.b16 %v2201, %v2200
      %v2238 = vpack.c.b16 %v2203, %v2202
      %v2239 = vpack.c.b16 %v2205, %v2204
      %v2240 = vpack.c.b16 %v2207, %v2206
      %v2241 = vpack.c.b16 %v2209, %v2208
      %2274 = vmatprep.subr.bf16.mxu0 0
      %2275 = vmatpush1.bf16.msra.mxu0 %v2210
      %2276 = vmatprep.subr.bf16.mxu0 0
      %2277 = vmatpush1.bf16.msra.mxu0 %v2211
      %2278 = vmatprep.subr.bf16.mxu0 0
      %2279 = vmatpush1.bf16.msra.mxu0 %v2212
      %2280 = vmatprep.subr.bf16.mxu0 0
      %2281 = vmatpush1.bf16.msra.mxu0 %v2213
      %2282 = vmatprep.subr.bf16.mxu0 0
      %2283 = vmatpush1.bf16.msra.mxu0 %v2214
      %2284 = vmatprep.subr.bf16.mxu0 0
      %2285 = vmatpush1.bf16.msra.mxu0 %v2215
      %2286 = vmatprep.subr.bf16.mxu0 0
      %2287 = vmatpush1.bf16.msra.mxu0 %v2216
      %2288 = vmatprep.subr.bf16.mxu0 0
      %2289 = vmatpush1.bf16.msra.mxu0 %v2217
      %2290 = vmatprep.subr.bf16.mxu0 0
      %2291 = vmatpush1.bf16.msra.mxu0 %v2218
      %2292 = vmatprep.subr.bf16.mxu0 0
      %2293 = vmatpush1.bf16.msra.mxu0 %v2219
      %2294 = vmatprep.subr.bf16.mxu0 0
      %2295 = vmatpush1.bf16.msra.mxu0 %v2220
      %2296 = vmatprep.subr.bf16.mxu0 0
      %2297 = vmatpush1.bf16.msra.mxu0 %v2221
      %2298 = vmatprep.subr.bf16.mxu0 0
      %2299 = vmatpush1.bf16.msra.mxu0 %v2222
      %2300 = vmatprep.subr.bf16.mxu0 0
      %2301 = vmatpush1.bf16.msra.mxu0 %v2223
      %2302 = vmatprep.subr.bf16.mxu0 0
      %2303 = vmatpush1.bf16.msra.mxu0 %v2224
      %2304 = vmatprep.subr.bf16.mxu0 0
      %2305 = vmatpush1.bf16.msra.mxu0 %v2225
      %2306 = vmatprep.mubr.bf16.mxu0 %v1280
      %2307 = vmatmul.mubr.bf16.gmra.mrb[0].mxu0 %v1208
      %v2308 = vpop.f32.mrb[0].mxu0
      %v2309 = vadd.f32 %v2052, %v2308
      %v2310 = vpop.f32.mrb[0].mxu0
      %v2311 = vpop.f32.mrb[0].mxu0
      %v2312 = vadd.f32 %v2055, %v2311
      %v2313 = vpop.f32.mrb[0].mxu0
      %2314 = vmatprep.mubr.bf16.mxu0 %v1297
      %2315 = vmatmul.mubr.bf16.gmra.mrb[0].mxu0 %v1225
      %v2316 = vpop.f32.mrb[0].mxu0
      %v2317 = vadd.f32 %v2060, %v2316
      %v2318 = vpop.f32.mrb[0].mxu0
      %v2319 = vpop.f32.mrb[0].mxu0
      %v2320 = vadd.f32 %v2063, %v2319
      %v2321 = vpop.f32.mrb[0].mxu0
      %2322 = vmatprep.mubr.bf16.mxu0 %v1314
      %2323 = vmatmul.mubr.bf16.gmra.mrb[0].mxu0 %v1242
      %v2324 = vpop.f32.mrb[0].mxu0
      %v2325 = vadd.f32 %v2068, %v2324
      %v2326 = vpop.f32.mrb[0].mxu0
      %v2327 = vpop.f32.mrb[0].mxu0
      %v2328 = vadd.f32 %v2071, %v2327
      %v2329 = vpop.f32.mrb[0].mxu0
      %2330 = vmatprep.mubr.bf16.mxu0 %v1331
      %2331 = vmatmul.mubr.bf16.gmra.mrb[0].mxu0 %v1259
      %v2332 = vpop.f32.mrb[0].mxu0
      %v2333 = vadd.f32 %v2076, %v2332
      %v2334 = vpop.f32.mrb[0].mxu0
      %v2335 = vpop.f32.mrb[0].mxu0
      %v2336 = vadd.f32 %v2079, %v2335
      %v2337 = vpop.f32.mrb[0].mxu0
      %2338 = vdwg.mxu0
      %2339 = vmatprep.subr.bf16.mxu0 0
      %2340 = vmatpush1.bf16.msra.mxu0 %v2226
      %2341 = vmatprep.subr.bf16.mxu0 0
      %2342 = vmatpush1.bf16.msra.mxu0 %v2227
      %2343 = vmatprep.subr.bf16.mxu0 0
      %2344 = vmatpush1.bf16.msra.mxu0 %v2228
      %2345 = vmatprep.subr.bf16.mxu0 0
      %2346 = vmatpush1.bf16.msra.mxu0 %v2229
      %2347 = vmatprep.subr.bf16.mxu0 0
      %2348 = vmatpush1.bf16.msra.mxu0 %v2230
      %2349 = vmatprep.subr.bf16.mxu0 0
      %2350 = vmatpush1.bf16.msra.mxu0 %v2231
      %2351 = vmatprep.subr.bf16.mxu0 0
      %2352 = vmatpush1.bf16.msra.mxu0 %v2232
      %2353 = vmatprep.subr.bf16.mxu0 0
      %2354 = vmatpush1.bf16.msra.mxu0 %v2233
      %2355 = vmatprep.subr.bf16.mxu0 0
      %2356 = vmatpush1.bf16.msra.mxu0 %v2234
      %2357 = vmatprep.subr.bf16.mxu0 0
      %2358 = vmatpush1.bf16.msra.mxu0 %v2235
      %2359 = vmatprep.subr.bf16.mxu0 0
      %2360 = vmatpush1.bf16.msra.mxu0 %v2236
      %2361 = vmatprep.subr.bf16.mxu0 0
      %2362 = vmatpush1.bf16.msra.mxu0 %v2237
      %2363 = vmatprep.subr.bf16.mxu0 0
      %2364 = vmatpush1.bf16.msra.mxu0 %v2238
      %2365 = vmatprep.subr.bf16.mxu0 0
      %2366 = vmatpush1.bf16.msra.mxu0 %v2239
      %2367 = vmatprep.subr.bf16.mxu0 0
      %2368 = vmatpush1.bf16.msra.mxu0 %v2240
      %2369 = vmatprep.subr.bf16.mxu0 0
      %2370 = vmatpush1.bf16.msra.mxu0 %v2241
      %2371 = vmatprep.mubr.bf16.mxu0 %v1424
      %2372 = vmatmul.mubr.bf16.gmra.mrb[0].mxu0 %v1352
      %v2373 = vpop.f32.mrb[0].mxu0
      %v2374 = vadd.f32 %v2309, %v2373
      %v2375 = vpop.f32.mrb[0].mxu0
      %v2376 = vpop.f32.mrb[0].mxu0
      %v2377 = vadd.f32 %v2312, %v2376
      %v2378 = vpop.f32.mrb[0].mxu0
      %2379 = vmatprep.mubr.bf16.mxu0 %v1441
      %2380 = vmatmul.mubr.bf16.gmra.mrb[0].mxu0 %v1369
      %v2381 = vpop.f32.mrb[0].mxu0
      %v2382 = vadd.f32 %v2317, %v2381
      %v2383 = vpop.f32.mrb[0].mxu0
      %v2384 = vpop.f32.mrb[0].mxu0
      %v2385 = vadd.f32 %v2320, %v2384
      %v2386 = vpop.f32.mrb[0].mxu0
      %2387 = vmatprep.mubr.bf16.mxu0 %v1458
      %2388 = vmatmul.mubr.bf16.gmra.mrb[0].mxu0 %v1386
      %v2389 = vpop.f32.mrb[0].mxu0
      %v2390 = vadd.f32 %v2325, %v2389
      %v2391 = vpop.f32.mrb[0].mxu0
      %v2392 = vpop.f32.mrb[0].mxu0
      %v2393 = vadd.f32 %v2328, %v2392
      %v2394 = vpop.f32.mrb[0].mxu0
      %2395 = vmatprep.mubr.bf16.mxu0 %v1475
      %2396 = vmatmul.mubr.bf16.gmra.mrb[0].mxu0 %v1403
      %v2397 = vpop.f32.mrb[0].mxu0
      %v2398 = vadd.f32 %v2333, %v2397
      %v2399 = vpop.f32.mrb[0].mxu0
      %v2400 = vpop.f32.mrb[0].mxu0
      %v2401 = vadd.f32 %v2336, %v2400
      %v2402 = vpop.f32.mrb[0].mxu0
      %2403 = vdwg.mxu0
      %v2404 = vrot.slane %v1545, 7
      %v2405 = vrot.slane %v2404, 2
      %v2406 = vrot.slane %v1558, 7
      %v2407 = vor.u32 %v2406, %v1554
      %v2408 = vsel %vm1103, %v2405, %v2407
      %v2409 = vrot.slane %v2406, 2
      %v2410 = vshrl.u32 %v798, 16
      %v2412 = vrot.slane %v2410, 7
      %v2413 = vor.u32 %v2412, %v1564
      %v2414 = vsel %vm1103, %v2409, %v2413
      %v2416 = vshrl.u32 %v800, 16
      %v2418 = vrot.slane %v2416, 6
      %v2419 = vshll.u32 %v800, 16
      %v2421 = vrot.slane %v2419, 7
      %v2422 = vor.u32 %v2418, %v2421
      %v2423 = vrot.slane %v2422, 2
      %v2425 = vshll.u32 %v808, 16
      %v2427 = vrot.slane %v2425, 7
      %v2428 = vsel %vm841, %v2423, %v2427
      %v2429 = vshrl.u32 %v808, 16
      %v2431 = vrot.slane %v2429, 6
      %v2432 = vor.u32 %v2431, %v2427
      %v2433 = vrot.slane %v2432, 2
      %v2435 = vshll.u32 %v816, 16
      %v2437 = vrot.slane %v2435, 7
      %v2438 = vsel %vm841, %v2433, %v2437
      %v2439 = vcombine.low %v1423, %v1433
      %v2440 = vcombine.low %v1440, %v1450
      %v2441 = vcombine.low %v1457, %v1467
      %v2442 = vcombine.low %v2408, %v2414
      %v2444 = vunpack.c.l.s4 1983009808
      %v2445 = vunpack.c.0.s8 %v2444
      %v2446 = vlaneseq
      %v2447 = vshrl.u32 %v2446, 7
      %v2448 = vsub.s32 %v2445, %v2447
      %v2449 = vrot.slane %v2442, %v2448
      %v2450 = vcombine.low %v1474, %v2449
      %v2455 = vcombine.low %v1590, %v1600
      %v2456 = vcombine.low %v1607, %v1617
      %v2457 = vcombine.low %v1624, %v1634
      %v2458 = vcombine.low %v799, %v798
      %v2460 = vunpack.c.l.s4 1983009808
      %v2461 = vunpack.c.0.s8 %v2460
      %v2462 = vlaneseq
      %v2463 = vshrl.u32 %v2462, 7
      %v2464 = vsub.s32 %v2461, %v2463
      %v2465 = vrot.slane %v2458, %v2464
      %v2466 = vcombine.low %v1641, %v2465
      %v2471 = vcombine.low %v800, %v808
      %v2473 = vunpack.c.l.s4 1983009808
      %v2474 = vunpack.c.0.s8 %v2473
      %v2475 = vlaneseq
      %v2476 = vshrl.u32 %v2475, 7
      %v2477 = vsub.s32 %v2474, %v2476
      %v2478 = vrot.slane %v2471, %v2477
      %v2479 = vcombine.low %v1657, %v2478
      %v2481 = vcombine.low %v2428, %v2438
      %v2483 = vunpack.c.l.s4 1983009808
      %v2484 = vunpack.c.0.s8 %v2483
      %v2485 = vlaneseq
      %v2486 = vshrl.u32 %v2485, 7
      %v2487 = vsub.s32 %v2484, %v2486
      %v2488 = vrot.slane %v2481, %v2487
      %v2489 = vcombine.low %v1673, %v2488
      %s2491 = scalar_lea.vmem %s3, 512
      %v2492 = vld [vmem:[%s2491] sm:$0xf]
      %v2493 = vld [vmem:[%s2491 + $0x4] sm:$0xf]
      %v2494 = vld [vmem:[%s2491 + $0x8] sm:$0xf]
      %v2495 = vld [vmem:[%s2491 + $0xc] sm:$0xf]
      %v2496 = vld [vmem:[%s2491 + $0x10] sm:$0xf]
      %v2497 = vld [vmem:[%s2491 + $0x14] sm:$0xf]
      %v2498 = vld [vmem:[%s2491 + $0x18] sm:$0xf]
      %v2499 = vld [vmem:[%s2491 + $0x1c] sm:$0xf]
      %v2500 = vld [vmem:[%s2491 + $0x20] sm:$0xf]
      %v2501 = vld [vmem:[%s2491 + $0x24] sm:$0xf]
      %v2502 = vld [vmem:[%s2491 + $0x28] sm:$0xf]
      %v2503 = vld [vmem:[%s2491 + $0x2c] sm:$0xf]
      %v2504 = vld [vmem:[%s2491 + $0x30] sm:$0xf]
      %v2505 = vld [vmem:[%s2491 + $0x34] sm:$0xf]
      %v2506 = vld [vmem:[%s2491 + $0x38] sm:$0xf]
      %v2507 = vld [vmem:[%s2491 + $0x3c] sm:$0xf]
      %v2508 = vld [vmem:[%s2491 + $0x40] sm:$0xf]
      %v2509 = vld [vmem:[%s2491 + $0x44] sm:$0xf]
      %v2510 = vld [vmem:[%s2491 + $0x48] sm:$0xf]
      %v2511 = vld [vmem:[%s2491 + $0x4c] sm:$0xf]
      %v2512 = vld [vmem:[%s2491 + $0x50] sm:$0xf]
      %v2513 = vld [vmem:[%s2491 + $0x54] sm:$0xf]
      %v2514 = vld [vmem:[%s2491 + $0x58] sm:$0xf]
      %v2515 = vld [vmem:[%s2491 + $0x5c] sm:$0xf]
      %v2516 = vld [vmem:[%s2491 + $0x60] sm:$0xf]
      %v2517 = vld [vmem:[%s2491 + $0x64] sm:$0xf]
      %v2518 = vld [vmem:[%s2491 + $0x68] sm:$0xf]
      %v2519 = vld [vmem:[%s2491 + $0x6c] sm:$0xf]
      %v2520 = vld [vmem:[%s2491 + $0x70] sm:$0xf]
      %v2521 = vld [vmem:[%s2491 + $0x74] sm:$0xf]
      %v2522 = vld [vmem:[%s2491 + $0x78] sm:$0xf]
      %v2523 = vld [vmem:[%s2491 + $0x7c] sm:$0xf]
      %v2524 = vld [vmem:[%s2491 + $0x80] sm:$0xf]
      %v2525 = vld [vmem:[%s2491 + $0x84] sm:$0xf]
      %v2526 = vld [vmem:[%s2491 + $0x88] sm:$0xf]
      %v2527 = vld [vmem:[%s2491 + $0x8c] sm:$0xf]
      %v2528 = vld [vmem:[%s2491 + $0x90] sm:$0xf]
      %v2529 = vld [vmem:[%s2491 + $0x94] sm:$0xf]
      %v2530 = vld [vmem:[%s2491 + $0x98] sm:$0xf]
      %v2531 = vld [vmem:[%s2491 + $0x9c] sm:$0xf]
      %v2532 = vld [vmem:[%s2491 + $0xa0] sm:$0xf]
      %v2533 = vld [vmem:[%s2491 + $0xa4] sm:$0xf]
      %v2534 = vld [vmem:[%s2491 + $0xa8] sm:$0xf]
      %v2535 = vld [vmem:[%s2491 + $0xac] sm:$0xf]
      %v2536 = vld [vmem:[%s2491 + $0xb0] sm:$0xf]
      %v2537 = vld [vmem:[%s2491 + $0xb4] sm:$0xf]
      %v2538 = vld [vmem:[%s2491 + $0xb8] sm:$0xf]
      %v2539 = vld [vmem:[%s2491 + $0xbc] sm:$0xf]
      %v2540 = vld [vmem:[%s2491 + $0xc0] sm:$0xf]
      %v2541 = vld [vmem:[%s2491 + $0xc4] sm:$0xf]
      %v2542 = vld [vmem:[%s2491 + $0xc8] sm:$0xf]
      %v2543 = vld [vmem:[%s2491 + $0xcc] sm:$0xf]
      %v2544 = vld [vmem:[%s2491 + $0xd0] sm:$0xf]
      %v2545 = vld [vmem:[%s2491 + $0xd4] sm:$0xf]
      %v2546 = vld [vmem:[%s2491 + $0xd8] sm:$0xf]
      %v2547 = vld [vmem:[%s2491 + $0xdc] sm:$0xf]
      %v2548 = vld [vmem:[%s2491 + $0xe0] sm:$0xf]
      %v2549 = vld [vmem:[%s2491 + $0xe4] sm:$0xf]
      %v2550 = vld [vmem:[%s2491 + $0xe8] sm:$0xf]
      %v2551 = vld [vmem:[%s2491 + $0xec] sm:$0xf]
      %v2552 = vld [vmem:[%s2491 + $0xf0] sm:$0xf]
      %v2553 = vld [vmem:[%s2491 + $0xf4] sm:$0xf]
      %v2554 = vld [vmem:[%s2491 + $0xf8] sm:$0xf]
      %v2555 = vld [vmem:[%s2491 + $0xfc] sm:$0xf]
      %v2620 = vunpack.c.l.b16 %v2492
      %v2621 = vunpack.c.l.b16 %v2493
      %v2622 = vunpack.c.l.b16 %v2494
      %v2623 = vunpack.c.l.b16 %v2495
      %v2624 = vunpack.c.l.b16 %v2496
      %v2625 = vunpack.c.l.b16 %v2497
      %v2626 = vunpack.c.l.b16 %v2498
      %v2627 = vunpack.c.l.b16 %v2499
      %v2628 = vunpack.c.l.b16 %v2500
      %v2629 = vunpack.c.l.b16 %v2501
      %v2630 = vunpack.c.l.b16 %v2502
      %v2631 = vunpack.c.l.b16 %v2503
      %v2632 = vunpack.c.l.b16 %v2504
      %v2633 = vunpack.c.l.b16 %v2505
      %v2634 = vunpack.c.l.b16 %v2506
      %v2635 = vunpack.c.l.b16 %v2507
      %v2636 = vunpack.c.l.b16 %v2508
      %v2637 = vunpack.c.l.b16 %v2509
      %v2638 = vunpack.c.l.b16 %v2510
      %v2639 = vunpack.c.l.b16 %v2511
      %v2640 = vunpack.c.l.b16 %v2512
      %v2641 = vunpack.c.l.b16 %v2513
      %v2642 = vunpack.c.l.b16 %v2514
      %v2643 = vunpack.c.l.b16 %v2515
      %v2644 = vunpack.c.l.b16 %v2516
      %v2645 = vunpack.c.l.b16 %v2517
      %v2646 = vunpack.c.l.b16 %v2518
      %v2647 = vunpack.c.l.b16 %v2519
      %v2648 = vunpack.c.l.b16 %v2520
      %v2649 = vunpack.c.l.b16 %v2521
      %v2650 = vunpack.c.l.b16 %v2522
      %v2651 = vunpack.c.l.b16 %v2523
      %v2652 = vunpack.c.l.b16 %v2524
      %v2653 = vunpack.c.l.b16 %v2525
      %v2654 = vunpack.c.l.b16 %v2526
      %v2655 = vunpack.c.l.b16 %v2527
      %v2656 = vunpack.c.l.b16 %v2528
      %v2657 = vunpack.c.l.b16 %v2529
      %v2658 = vunpack.c.l.b16 %v2530
      %v2659 = vunpack.c.l.b16 %v2531
      %v2660 = vunpack.c.l.b16 %v2532
      %v2661 = vunpack.c.l.b16 %v2533
      %v2662 = vunpack.c.l.b16 %v2534
      %v2663 = vunpack.c.l.b16 %v2535
      %v2664 = vunpack.c.l.b16 %v2536
      %v2665 = vunpack.c.l.b16 %v2537
      %v2666 = vunpack.c.l.b16 %v2538
      %v2667 = vunpack.c.l.b16 %v2539
      %v2668 = vunpack.c.l.b16 %v2540
      %v2669 = vunpack.c.l.b16 %v2541
      %v2670 = vunpack.c.l.b16 %v2542
      %v2671 = vunpack.c.l.b16 %v2543
      %v2672 = vunpack.c.l.b16 %v2544
      %v2673 = vunpack.c.l.b16 %v2545
      %v2674 = vunpack.c.l.b16 %v2546
      %v2675 = vunpack.c.l.b16 %v2547
      %v2676 = vunpack.c.l.b16 %v2548
      %v2677 = vunpack.c.l.b16 %v2549
      %v2678 = vunpack.c.l.b16 %v2550
      %v2679 = vunpack.c.l.b16 %v2551
      %v2680 = vunpack.c.l.b16 %v2552
      %v2681 = vunpack.c.l.b16 %v2553
      %v2682 = vunpack.c.l.b16 %v2554
      %v2683 = vunpack.c.l.b16 %v2555
      %v2684 = vpack.c.b16 %v2621, %v2620
      %v2685 = vpack.c.b16 %v2623, %v2622
      %v2686 = vpack.c.b16 %v2625, %v2624
      %v2687 = vpack.c.b16 %v2627, %v2626
      %v2688 = vpack.c.b16 %v2629, %v2628
      %v2689 = vpack.c.b16 %v2631, %v2630
      %v2690 = vpack.c.b16 %v2633, %v2632
      %v2691 = vpack.c.b16 %v2635, %v2634
      %v2692 = vpack.c.b16 %v2637, %v2636
      %v2693 = vpack.c.b16 %v2639, %v2638
      %v2694 = vpack.c.b16 %v2641, %v2640
      %v2695 = vpack.c.b16 %v2643, %v2642
      %v2696 = vpack.c.b16 %v2645, %v2644
      %v2697 = vpack.c.b16 %v2647, %v2646
      %v2698 = vpack.c.b16 %v2649, %v2648
      %v2699 = vpack.c.b16 %v2651, %v2650
      %v2700 = vpack.c.b16 %v2653, %v2652
      %v2701 = vpack.c.b16 %v2655, %v2654
      %v2702 = vpack.c.b16 %v2657, %v2656
      %v2703 = vpack.c.b16 %v2659, %v2658
      %v2704 = vpack.c.b16 %v2661, %v2660
      %v2705 = vpack.c.b16 %v2663, %v2662
      %v2706 = vpack.c.b16 %v2665, %v2664
      %v2707 = vpack.c.b16 %v2667, %v2666
      %v2708 = vpack.c.b16 %v2669, %v2668
      %v2709 = vpack.c.b16 %v2671, %v2670
      %v2710 = vpack.c.b16 %v2673, %v2672
      %v2711 = vpack.c.b16 %v2675, %v2674
      %v2712 = vpack.c.b16 %v2677, %v2676
      %v2713 = vpack.c.b16 %v2679, %v2678
      %v2714 = vpack.c.b16 %v2681, %v2680
      %v2715 = vpack.c.b16 %v2683, %v2682
      %2748 = vmatprep.subr.bf16.mxu0 0
      %2749 = vmatpush1.bf16.msra.mxu0 %v2684
      %2750 = vmatprep.subr.bf16.mxu0 0
      %2751 = vmatpush1.bf16.msra.mxu0 %v2685
      %2752 = vmatprep.subr.bf16.mxu0 0
      %2753 = vmatpush1.bf16.msra.mxu0 %v2686
      %2754 = vmatprep.subr.bf16.mxu0 0
      %2755 = vmatpush1.bf16.msra.mxu0 %v2687
      %2756 = vmatprep.subr.bf16.mxu0 0
      %2757 = vmatpush1.bf16.msra.mxu0 %v2688
      %2758 = vmatprep.subr.bf16.mxu0 0
      %2759 = vmatpush1.bf16.msra.mxu0 %v2689
      %2760 = vmatprep.subr.bf16.mxu0 0
      %2761 = vmatpush1.bf16.msra.mxu0 %v2690
      %2762 = vmatprep.subr.bf16.mxu0 0
      %2763 = vmatpush1.bf16.msra.mxu0 %v2691
      %2764 = vmatprep.subr.bf16.mxu0 0
      %2765 = vmatpush1.bf16.msra.mxu0 %v2692
      %2766 = vmatprep.subr.bf16.mxu0 0
      %2767 = vmatpush1.bf16.msra.mxu0 %v2693
      %2768 = vmatprep.subr.bf16.mxu0 0
      %2769 = vmatpush1.bf16.msra.mxu0 %v2694
      %2770 = vmatprep.subr.bf16.mxu0 0
      %2771 = vmatpush1.bf16.msra.mxu0 %v2695
      %2772 = vmatprep.subr.bf16.mxu0 0
      %2773 = vmatpush1.bf16.msra.mxu0 %v2696
      %2774 = vmatprep.subr.bf16.mxu0 0
      %2775 = vmatpush1.bf16.msra.mxu0 %v2697
      %2776 = vmatprep.subr.bf16.mxu0 0
      %2777 = vmatpush1.bf16.msra.mxu0 %v2698
      %2778 = vmatprep.subr.bf16.mxu0 0
      %2779 = vmatpush1.bf16.msra.mxu0 %v2699
      %2780 = vmatprep.mubr.bf16.mxu0 %v2455
      %2781 = vmatmul.mubr.bf16.gmra.mrb[0].mxu0 %v2439
      %v2782 = vpop.f32.mrb[0].mxu0
      %v2783 = vadd.f32 0.0, %v2782
      %v2784 = vpop.f32.mrb[0].mxu0
      %v2785 = vpop.f32.mrb[0].mxu0
      %v2786 = vadd.f32 0.0, %v2785
      %v2787 = vpop.f32.mrb[0].mxu0
      %2788 = vmatprep.mubr.bf16.mxu0 %v2456
      %2789 = vmatmul.mubr.bf16.gmra.mrb[0].mxu0 %v2440
      %v2790 = vpop.f32.mrb[0].mxu0
      %v2791 = vadd.f32 0.0, %v2790
      %v2792 = vpop.f32.mrb[0].mxu0
      %v2793 = vpop.f32.mrb[0].mxu0
      %v2794 = vadd.f32 0.0, %v2793
      %v2795 = vpop.f32.mrb[0].mxu0
      %2796 = vmatprep.mubr.bf16.mxu0 %v2457
      %2797 = vmatmul.mubr.bf16.gmra.mrb[0].mxu0 %v2441
      %v2798 = vpop.f32.mrb[0].mxu0
      %v2799 = vadd.f32 0.0, %v2798
      %v2800 = vpop.f32.mrb[0].mxu0
      %v2801 = vpop.f32.mrb[0].mxu0
      %v2802 = vadd.f32 0.0, %v2801
      %v2803 = vpop.f32.mrb[0].mxu0
      %2804 = vmatprep.mubr.bf16.mxu0 %v2466
      %2805 = vmatmul.mubr.bf16.gmra.mrb[0].mxu0 %v2450
      %v2806 = vpop.f32.mrb[0].mxu0
      %v2807 = vadd.f32 0.0, %v2806
      %v2808 = vpop.f32.mrb[0].mxu0
      %v2809 = vpop.f32.mrb[0].mxu0
      %v2810 = vadd.f32 0.0, %v2809
      %v2811 = vpop.f32.mrb[0].mxu0
      %2812 = vdwg.mxu0
      %2813 = vmatprep.subr.bf16.mxu0 0
      %2814 = vmatpush1.bf16.msra.mxu0 %v2700
      %2815 = vmatprep.subr.bf16.mxu0 0
      %2816 = vmatpush1.bf16.msra.mxu0 %v2701
      %2817 = vmatprep.subr.bf16.mxu0 0
      %2818 = vmatpush1.bf16.msra.mxu0 %v2702
      %2819 = vmatprep.subr.bf16.mxu0 0
      %2820 = vmatpush1.bf16.msra.mxu0 %v2703
      %2821 = vmatprep.subr.bf16.mxu0 0
      %2822 = vmatpush1.bf16.msra.mxu0 %v2704
      %2823 = vmatprep.subr.bf16.mxu0 0
      %2824 = vmatpush1.bf16.msra.mxu0 %v2705
      %2825 = vmatprep.subr.bf16.mxu0 0
      %2826 = vmatpush1.bf16.msra.mxu0 %v2706
      %2827 = vmatprep.subr.bf16.mxu0 0
      %2828 = vmatpush1.bf16.msra.mxu0 %v2707
      %2829 = vmatprep.subr.bf16.mxu0 0
      %2830 = vmatpush1.bf16.msra.mxu0 %v2708
      %2831 = vmatprep.subr.bf16.mxu0 0
      %2832 = vmatpush1.bf16.msra.mxu0 %v2709
      %2833 = vmatprep.subr.bf16.mxu0 0
      %2834 = vmatpush1.bf16.msra.mxu0 %v2710
      %2835 = vmatprep.subr.bf16.mxu0 0
      %2836 = vmatpush1.bf16.msra.mxu0 %v2711
      %2837 = vmatprep.subr.bf16.mxu0 0
      %2838 = vmatpush1.bf16.msra.mxu0 %v2712
      %2839 = vmatprep.subr.bf16.mxu0 0
      %2840 = vmatpush1.bf16.msra.mxu0 %v2713
      %2841 = vmatprep.subr.bf16.mxu0 0
      %2842 = vmatpush1.bf16.msra.mxu0 %v2714
      %2843 = vmatprep.subr.bf16.mxu0 0
      %2844 = vmatpush1.bf16.msra.mxu0 %v2715
      %2845 = vmatprep.mubr.bf16.mxu0 %v1297
      %2846 = vmatmul.mubr.bf16.gmra.mrb[0].mxu0 %v1225
      %v2847 = vpop.f32.mrb[0].mxu0
      %v2848 = vadd.f32 %v2783, %v2847
      %v2849 = vpop.f32.mrb[0].mxu0
      %v2850 = vpop.f32.mrb[0].mxu0
      %v2851 = vadd.f32 %v2786, %v2850
      %v2852 = vpop.f32.mrb[0].mxu0
      %2853 = vmatprep.mubr.bf16.mxu0 %v1314
      %2854 = vmatmul.mubr.bf16.gmra.mrb[0].mxu0 %v1242
      %v2855 = vpop.f32.mrb[0].mxu0
      %v2856 = vadd.f32 %v2791, %v2855
      %v2857 = vpop.f32.mrb[0].mxu0
      %v2858 = vpop.f32.mrb[0].mxu0
      %v2859 = vadd.f32 %v2794, %v2858
      %v2860 = vpop.f32.mrb[0].mxu0
      %2861 = vmatprep.mubr.bf16.mxu0 %v1331
      %2862 = vmatmul.mubr.bf16.gmra.mrb[0].mxu0 %v1259
      %v2863 = vpop.f32.mrb[0].mxu0
      %v2864 = vadd.f32 %v2799, %v2863
      %v2865 = vpop.f32.mrb[0].mxu0
      %v2866 = vpop.f32.mrb[0].mxu0
      %v2867 = vadd.f32 %v2802, %v2866
      %v2868 = vpop.f32.mrb[0].mxu0
      %2869 = vmatprep.mubr.bf16.mxu0 %v2489
      %2870 = vmatmul.mubr.bf16.gmra.mrb[0].mxu0 %v2479
      %v2871 = vpop.f32.mrb[0].mxu0
      %v2872 = vadd.f32 %v2807, %v2871
      %v2873 = vpop.f32.mrb[0].mxu0
      %v2874 = vpop.f32.mrb[0].mxu0
      %v2875 = vadd.f32 %v2810, %v2874
      %v2876 = vpop.f32.mrb[0].mxu0
      %2877 = vdwg.mxu0
      %v2878 = vadd.f32 %v2374, %v2848
      %v2879 = vadd.f32 %v2377, %v2851
      %v2880 = vadd.f32 %v2382, %v2856
      %v2881 = vadd.f32 %v2385, %v2859
      %v2882 = vadd.f32 %v2390, %v2864
      %v2883 = vadd.f32 %v2393, %v2867
      %v2884 = vadd.f32 %v2398, %v2872
      %v2885 = vadd.f32 %v2401, %v2875
      %v2886 = vrot.slane %v800, 7
      %v2887 = vrot.slane %v2886, 2
      %v2888 = vrot.slane %v808, 7
      %v2889 = vsel %vm1040, %v2887, %v2888
      %v2890 = vrot.slane %v2888, 2
      %v2891 = vrot.slane %v816, 7
      %v2892 = vsel %vm1040, %v2890, %v2891
      %v2893 = vrot.slane %v2416, 7
      %v2894 = vrot.slane %v2893, 2
      %v2895 = vrot.slane %v2429, 7
      %v2896 = vor.u32 %v2895, %v2425
      %v2897 = vsel %vm1103, %v2894, %v2896
      %v2898 = vrot.slane %v2895, 2
      %v2899 = vshrl.u32 %v816, 16
      %v2901 = vrot.slane %v2899, 7
      %v2902 = vor.u32 %v2901, %v2435
      %v2903 = vsel %vm1103, %v2898, %v2902
      %v2904 = vcombine.low %v2889, %v2892
      %v2906 = vunpack.c.l.s4 1983009808
      %v2907 = vunpack.c.0.s8 %v2906
      %v2908 = vlaneseq
      %v2909 = vshrl.u32 %v2908, 7
      %v2910 = vsub.s32 %v2907, %v2909
      %v2911 = vrot.slane %v2904, %v2910
      %v2912 = vcombine.low %v1689, %v2911
      %v2914 = vcombine.low %v2897, %v2903
      %v2916 = vunpack.c.l.s4 1983009808
      %v2917 = vunpack.c.0.s8 %v2916
      %v2918 = vlaneseq
      %v2919 = vshrl.u32 %v2918, 7
      %v2920 = vsub.s32 %v2917, %v2919
      %v2921 = vrot.slane %v2914, %v2920
      %v2922 = vcombine.low %v2449, %v2921
      %v2924 = vcombine.low %v808, %v816
      %v2926 = vunpack.c.l.s4 1983009808
      %v2927 = vunpack.c.0.s8 %v2926
      %v2928 = vlaneseq
      %v2929 = vshrl.u32 %v2928, 7
      %v2930 = vsub.s32 %v2927, %v2929
      %v2931 = vrot.slane %v2924, %v2930
      %v2932 = vcombine.low %v2465, %v2931
      %v2934 = vcombine.low %v815, %v817
      %v2936 = vunpack.c.l.s4 1983009808
      %v2937 = vunpack.c.0.s8 %v2936
      %v2938 = vlaneseq
      %v2939 = vshrl.u32 %v2938, 7
      %v2940 = vsub.s32 %v2937, %v2939
      %v2941 = vrot.slane %v2934, %v2940
      %v2942 = vcombine.low %v2478, %v2941
      %s2944 = scalar_lea.vmem %s3, 768
      %v2945 = vld [vmem:[%s2944] sm:$0xf]
      %v2946 = vld [vmem:[%s2944 + $0x4] sm:$0xf]
      %v2947 = vld [vmem:[%s2944 + $0x8] sm:$0xf]
      %v2948 = vld [vmem:[%s2944 + $0xc] sm:$0xf]
      %v2949 = vld [vmem:[%s2944 + $0x10] sm:$0xf]
      %v2950 = vld [vmem:[%s2944 + $0x14] sm:$0xf]
      %v2951 = vld [vmem:[%s2944 + $0x18] sm:$0xf]
      %v2952 = vld [vmem:[%s2944 + $0x1c] sm:$0xf]
      %v2953 = vld [vmem:[%s2944 + $0x20] sm:$0xf]
      %v2954 = vld [vmem:[%s2944 + $0x24] sm:$0xf]
      %v2955 = vld [vmem:[%s2944 + $0x28] sm:$0xf]
      %v2956 = vld [vmem:[%s2944 + $0x2c] sm:$0xf]
      %v2957 = vld [vmem:[%s2944 + $0x30] sm:$0xf]
      %v2958 = vld [vmem:[%s2944 + $0x34] sm:$0xf]
      %v2959 = vld [vmem:[%s2944 + $0x38] sm:$0xf]
      %v2960 = vld [vmem:[%s2944 + $0x3c] sm:$0xf]
      %v2961 = vld [vmem:[%s2944 + $0x40] sm:$0xf]
      %v2962 = vld [vmem:[%s2944 + $0x44] sm:$0xf]
      %v2963 = vld [vmem:[%s2944 + $0x48] sm:$0xf]
      %v2964 = vld [vmem:[%s2944 + $0x4c] sm:$0xf]
      %v2965 = vld [vmem:[%s2944 + $0x50] sm:$0xf]
      %v2966 = vld [vmem:[%s2944 + $0x54] sm:$0xf]
      %v2967 = vld [vmem:[%s2944 + $0x58] sm:$0xf]
      %v2968 = vld [vmem:[%s2944 + $0x5c] sm:$0xf]
      %v2969 = vld [vmem:[%s2944 + $0x60] sm:$0xf]
      %v2970 = vld [vmem:[%s2944 + $0x64] sm:$0xf]
      %v2971 = vld [vmem:[%s2944 + $0x68] sm:$0xf]
      %v2972 = vld [vmem:[%s2944 + $0x6c] sm:$0xf]
      %v2973 = vld [vmem:[%s2944 + $0x70] sm:$0xf]
      %v2974 = vld [vmem:[%s2944 + $0x74] sm:$0xf]
      %v2975 = vld [vmem:[%s2944 + $0x78] sm:$0xf]
      %v2976 = vld [vmem:[%s2944 + $0x7c] sm:$0xf]
      %v2977 = vld [vmem:[%s2944 + $0x80] sm:$0xf]
      %v2978 = vld [vmem:[%s2944 + $0x84] sm:$0xf]
      %v2979 = vld [vmem:[%s2944 + $0x88] sm:$0xf]
      %v2980 = vld [vmem:[%s2944 + $0x8c] sm:$0xf]
      %v2981 = vld [vmem:[%s2944 + $0x90] sm:$0xf]
      %v2982 = vld [vmem:[%s2944 + $0x94] sm:$0xf]
      %v2983 = vld [vmem:[%s2944 + $0x98] sm:$0xf]
      %v2984 = vld [vmem:[%s2944 + $0x9c] sm:$0xf]
      %v2985 = vld [vmem:[%s2944 + $0xa0] sm:$0xf]
      %v2986 = vld [vmem:[%s2944 + $0xa4] sm:$0xf]
      %v2987 = vld [vmem:[%s2944 + $0xa8] sm:$0xf]
      %v2988 = vld [vmem:[%s2944 + $0xac] sm:$0xf]
      %v2989 = vld [vmem:[%s2944 + $0xb0] sm:$0xf]
      %v2990 = vld [vmem:[%s2944 + $0xb4] sm:$0xf]
      %v2991 = vld [vmem:[%s2944 + $0xb8] sm:$0xf]
      %v2992 = vld [vmem:[%s2944 + $0xbc] sm:$0xf]
      %v2993 = vld [vmem:[%s2944 + $0xc0] sm:$0xf]
      %v2994 = vld [vmem:[%s2944 + $0xc4] sm:$0xf]
      %v2995 = vld [vmem:[%s2944 + $0xc8] sm:$0xf]
      %v2996 = vld [vmem:[%s2944 + $0xcc] sm:$0xf]
      %v2997 = vld [vmem:[%s2944 + $0xd0] sm:$0xf]
      %v2998 = vld [vmem:[%s2944 + $0xd4] sm:$0xf]
      %v2999 = vld [vmem:[%s2944 + $0xd8] sm:$0xf]
      %v3000 = vld [vmem:[%s2944 + $0xdc] sm:$0xf]
      %v3001 = vld [vmem:[%s2944 + $0xe0] sm:$0xf]
      %v3002 = vld [vmem:[%s2944 + $0xe4] sm:$0xf]
      %v3003 = vld [vmem:[%s2944 + $0xe8] sm:$0xf]
      %v3004 = vld [vmem:[%s2944 + $0xec] sm:$0xf]
      %v3005 = vld [vmem:[%s2944 + $0xf0] sm:$0xf]
      %v3006 = vld [vmem:[%s2944 + $0xf4] sm:$0xf]
      %v3007 = vld [vmem:[%s2944 + $0xf8] sm:$0xf]
      %v3008 = vld [vmem:[%s2944 + $0xfc] sm:$0xf]
      %v3073 = vunpack.c.l.b16 %v2945
      %v3074 = vunpack.c.l.b16 %v2946
      %v3075 = vunpack.c.l.b16 %v2947
      %v3076 = vunpack.c.l.b16 %v2948
      %v3077 = vunpack.c.l.b16 %v2949
      %v3078 = vunpack.c.l.b16 %v2950
      %v3079 = vunpack.c.l.b16 %v2951
      %v3080 = vunpack.c.l.b16 %v2952
      %v3081 = vunpack.c.l.b16 %v2953
      %v3082 = vunpack.c.l.b16 %v2954
      %v3083 = vunpack.c.l.b16 %v2955
      %v3084 = vunpack.c.l.b16 %v2956
      %v3085 = vunpack.c.l.b16 %v2957
      %v3086 = vunpack.c.l.b16 %v2958
      %v3087 = vunpack.c.l.b16 %v2959
      %v3088 = vunpack.c.l.b16 %v2960
      %v3089 = vunpack.c.l.b16 %v2961
      %v3090 = vunpack.c.l.b16 %v2962
      %v3091 = vunpack.c.l.b16 %v2963
      %v3092 = vunpack.c.l.b16 %v2964
      %v3093 = vunpack.c.l.b16 %v2965
      %v3094 = vunpack.c.l.b16 %v2966
      %v3095 = vunpack.c.l.b16 %v2967
      %v3096 = vunpack.c.l.b16 %v2968
      %v3097 = vunpack.c.l.b16 %v2969
      %v3098 = vunpack.c.l.b16 %v2970
      %v3099 = vunpack.c.l.b16 %v2971
      %v3100 = vunpack.c.l.b16 %v2972
      %v3101 = vunpack.c.l.b16 %v2973
      %v3102 = vunpack.c.l.b16 %v2974
      %v3103 = vunpack.c.l.b16 %v2975
      %v3104 = vunpack.c.l.b16 %v2976
      %v3105 = vunpack.c.l.b16 %v2977
      %v3106 = vunpack.c.l.b16 %v2978
      %v3107 = vunpack.c.l.b16 %v2979
      %v3108 = vunpack.c.l.b16 %v2980
      %v3109 = vunpack.c.l.b16 %v2981
      %v3110 = vunpack.c.l.b16 %v2982
      %v3111 = vunpack.c.l.b16 %v2983
      %v3112 = vunpack.c.l.b16 %v2984
      %v3113 = vunpack.c.l.b16 %v2985
      %v3114 = vunpack.c.l.b16 %v2986
      %v3115 = vunpack.c.l.b16 %v2987
      %v3116 = vunpack.c.l.b16 %v2988
      %v3117 = vunpack.c.l.b16 %v2989
      %v3118 = vunpack.c.l.b16 %v2990
      %v3119 = vunpack.c.l.b16 %v2991
      %v3120 = vunpack.c.l.b16 %v2992
      %v3121 = vunpack.c.l.b16 %v2993
      %v3122 = vunpack.c.l.b16 %v2994
      %v3123 = vunpack.c.l.b16 %v2995
      %v3124 = vunpack.c.l.b16 %v2996
      %v3125 = vunpack.c.l.b16 %v2997
      %v3126 = vunpack.c.l.b16 %v2998
      %v3127 = vunpack.c.l.b16 %v2999
      %v3128 = vunpack.c.l.b16 %v3000
      %v3129 = vunpack.c.l.b16 %v3001
      %v3130 = vunpack.c.l.b16 %v3002
      %v3131 = vunpack.c.l.b16 %v3003
      %v3132 = vunpack.c.l.b16 %v3004
      %v3133 = vunpack.c.l.b16 %v3005
      %v3134 = vunpack.c.l.b16 %v3006
      %v3135 = vunpack.c.l.b16 %v3007
      %v3136 = vunpack.c.l.b16 %v3008
      %v3137 = vpack.c.b16 %v3074, %v3073
      %v3138 = vpack.c.b16 %v3076, %v3075
      %v3139 = vpack.c.b16 %v3078, %v3077
      %v3140 = vpack.c.b16 %v3080, %v3079
      %v3141 = vpack.c.b16 %v3082, %v3081
      %v3142 = vpack.c.b16 %v3084, %v3083
      %v3143 = vpack.c.b16 %v3086, %v3085
      %v3144 = vpack.c.b16 %v3088, %v3087
      %v3145 = vpack.c.b16 %v3090, %v3089
      %v3146 = vpack.c.b16 %v3092, %v3091
      %v3147 = vpack.c.b16 %v3094, %v3093
      %v3148 = vpack.c.b16 %v3096, %v3095
      %v3149 = vpack.c.b16 %v3098, %v3097
      %v3150 = vpack.c.b16 %v3100, %v3099
      %v3151 = vpack.c.b16 %v3102, %v3101
      %v3152 = vpack.c.b16 %v3104, %v3103
      %v3153 = vpack.c.b16 %v3106, %v3105
      %v3154 = vpack.c.b16 %v3108, %v3107
      %v3155 = vpack.c.b16 %v3110, %v3109
      %v3156 = vpack.c.b16 %v3112, %v3111
      %v3157 = vpack.c.b16 %v3114, %v3113
      %v3158 = vpack.c.b16 %v3116, %v3115
      %v3159 = vpack.c.b16 %v3118, %v3117
      %v3160 = vpack.c.b16 %v3120, %v3119
      %v3161 = vpack.c.b16 %v3122, %v3121
      %v3162 = vpack.c.b16 %v3124, %v3123
      %v3163 = vpack.c.b16 %v3126, %v3125
      %v3164 = vpack.c.b16 %v3128, %v3127
      %v3165 = vpack.c.b16 %v3130, %v3129
      %v3166 = vpack.c.b16 %v3132, %v3131
      %v3167 = vpack.c.b16 %v3134, %v3133
      %v3168 = vpack.c.b16 %v3136, %v3135
      %3201 = vmatprep.subr.bf16.mxu0 0
      %3202 = vmatpush1.bf16.msra.mxu0 %v3137
      %3203 = vmatprep.subr.bf16.mxu0 0
      %3204 = vmatpush1.bf16.msra.mxu0 %v3138
      %3205 = vmatprep.subr.bf16.mxu0 0
      %3206 = vmatpush1.bf16.msra.mxu0 %v3139
      %3207 = vmatprep.subr.bf16.mxu0 0
      %3208 = vmatpush1.bf16.msra.mxu0 %v3140
      %3209 = vmatprep.subr.bf16.mxu0 0
      %3210 = vmatpush1.bf16.msra.mxu0 %v3141
      %3211 = vmatprep.subr.bf16.mxu0 0
      %3212 = vmatpush1.bf16.msra.mxu0 %v3142
      %3213 = vmatprep.subr.bf16.mxu0 0
      %3214 = vmatpush1.bf16.msra.mxu0 %v3143
      %3215 = vmatprep.subr.bf16.mxu0 0
      %3216 = vmatpush1.bf16.msra.mxu0 %v3144
      %3217 = vmatprep.subr.bf16.mxu0 0
      %3218 = vmatpush1.bf16.msra.mxu0 %v3145
      %3219 = vmatprep.subr.bf16.mxu0 0
      %3220 = vmatpush1.bf16.msra.mxu0 %v3146
      %3221 = vmatprep.subr.bf16.mxu0 0
      %3222 = vmatpush1.bf16.msra.mxu0 %v3147
      %3223 = vmatprep.subr.bf16.mxu0 0
      %3224 = vmatpush1.bf16.msra.mxu0 %v3148
      %3225 = vmatprep.subr.bf16.mxu0 0
      %3226 = vmatpush1.bf16.msra.mxu0 %v3149
      %3227 = vmatprep.subr.bf16.mxu0 0
      %3228 = vmatpush1.bf16.msra.mxu0 %v3150
      %3229 = vmatprep.subr.bf16.mxu0 0
      %3230 = vmatpush1.bf16.msra.mxu0 %v3151
      %3231 = vmatprep.subr.bf16.mxu0 0
      %3232 = vmatpush1.bf16.msra.mxu0 %v3152
      %3233 = vmatprep.mubr.bf16.mxu0 %v1441
      %3234 = vmatmul.mubr.bf16.gmra.mrb[0].mxu0 %v1369
      %v3235 = vpop.f32.mrb[0].mxu0
      %v3236 = vadd.f32 0.0, %v3235
      %v3237 = vpop.f32.mrb[0].mxu0
      %v3238 = vpop.f32.mrb[0].mxu0
      %v3239 = vadd.f32 0.0, %v3238
      %v3240 = vpop.f32.mrb[0].mxu0
      %3241 = vmatprep.mubr.bf16.mxu0 %v1458
      %3242 = vmatmul.mubr.bf16.gmra.mrb[0].mxu0 %v1386
      %v3243 = vpop.f32.mrb[0].mxu0
      %v3244 = vadd.f32 0.0, %v3243
      %v3245 = vpop.f32.mrb[0].mxu0
      %v3246 = vpop.f32.mrb[0].mxu0
      %v3247 = vadd.f32 0.0, %v3246
      %v3248 = vpop.f32.mrb[0].mxu0
      %3249 = vmatprep.mubr.bf16.mxu0 %v1475
      %3250 = vmatmul.mubr.bf16.gmra.mrb[0].mxu0 %v1403
      %v3251 = vpop.f32.mrb[0].mxu0
      %v3252 = vadd.f32 0.0, %v3251
      %v3253 = vpop.f32.mrb[0].mxu0
      %v3254 = vpop.f32.mrb[0].mxu0
      %v3255 = vadd.f32 0.0, %v3254
      %v3256 = vpop.f32.mrb[0].mxu0
      %3257 = vmatprep.mubr.bf16.mxu0 %v2922
      %3258 = vmatmul.mubr.bf16.gmra.mrb[0].mxu0 %v2912
      %v3259 = vpop.f32.mrb[0].mxu0
      %v3260 = vadd.f32 0.0, %v3259
      %v3261 = vpop.f32.mrb[0].mxu0
      %v3262 = vpop.f32.mrb[0].mxu0
      %v3263 = vadd.f32 0.0, %v3262
      %v3264 = vpop.f32.mrb[0].mxu0
      %3265 = vdwg.mxu0
      %3266 = vmatprep.subr.bf16.mxu0 0
      %3267 = vmatpush1.bf16.msra.mxu0 %v3153
      %3268 = vmatprep.subr.bf16.mxu0 0
      %3269 = vmatpush1.bf16.msra.mxu0 %v3154
      %3270 = vmatprep.subr.bf16.mxu0 0
      %3271 = vmatpush1.bf16.msra.mxu0 %v3155
      %3272 = vmatprep.subr.bf16.mxu0 0
      %3273 = vmatpush1.bf16.msra.mxu0 %v3156
      %3274 = vmatprep.subr.bf16.mxu0 0
      %3275 = vmatpush1.bf16.msra.mxu0 %v3157
      %3276 = vmatprep.subr.bf16.mxu0 0
      %3277 = vmatpush1.bf16.msra.mxu0 %v3158
      %3278 = vmatprep.subr.bf16.mxu0 0
      %3279 = vmatpush1.bf16.msra.mxu0 %v3159
      %3280 = vmatprep.subr.bf16.mxu0 0
      %3281 = vmatpush1.bf16.msra.mxu0 %v3160
      %3282 = vmatprep.subr.bf16.mxu0 0
      %3283 = vmatpush1.bf16.msra.mxu0 %v3161
      %3284 = vmatprep.subr.bf16.mxu0 0
      %3285 = vmatpush1.bf16.msra.mxu0 %v3162
      %3286 = vmatprep.subr.bf16.mxu0 0
      %3287 = vmatpush1.bf16.msra.mxu0 %v3163
      %3288 = vmatprep.subr.bf16.mxu0 0
      %3289 = vmatpush1.bf16.msra.mxu0 %v3164
      %3290 = vmatprep.subr.bf16.mxu0 0
      %3291 = vmatpush1.bf16.msra.mxu0 %v3165
      %3292 = vmatprep.subr.bf16.mxu0 0
      %3293 = vmatpush1.bf16.msra.mxu0 %v3166
      %3294 = vmatprep.subr.bf16.mxu0 0
      %3295 = vmatpush1.bf16.msra.mxu0 %v3167
      %3296 = vmatprep.subr.bf16.mxu0 0
      %3297 = vmatpush1.bf16.msra.mxu0 %v3168
      %3298 = vmatprep.mubr.bf16.mxu0 %v1648
      %3299 = vmatmul.mubr.bf16.gmra.mrb[0].mxu0 %v1608
      %v3300 = vpop.f32.mrb[0].mxu0
      %v3301 = vadd.f32 %v3236, %v3300
      %v3302 = vpop.f32.mrb[0].mxu0
      %v3303 = vpop.f32.mrb[0].mxu0
      %v3304 = vadd.f32 %v3239, %v3303
      %v3305 = vpop.f32.mrb[0].mxu0
      %3306 = vmatprep.mubr.bf16.mxu0 %v1649
      %3307 = vmatmul.mubr.bf16.gmra.mrb[0].mxu0 %v1625
      %v3308 = vpop.f32.mrb[0].mxu0
      %v3309 = vadd.f32 %v3244, %v3308
      %v3310 = vpop.f32.mrb[0].mxu0
      %v3311 = vpop.f32.mrb[0].mxu0
      %v3312 = vadd.f32 %v3247, %v3311
      %v3313 = vpop.f32.mrb[0].mxu0
      %3314 = vmatprep.mubr.bf16.mxu0 %v1658
      %3315 = vmatmul.mubr.bf16.gmra.mrb[0].mxu0 %v1642
      %v3316 = vpop.f32.mrb[0].mxu0
      %v3317 = vadd.f32 %v3252, %v3316
      %v3318 = vpop.f32.mrb[0].mxu0
      %v3319 = vpop.f32.mrb[0].mxu0
      %v3320 = vadd.f32 %v3255, %v3319
      %v3321 = vpop.f32.mrb[0].mxu0
      %3322 = vmatprep.mubr.bf16.mxu0 %v2942
      %3323 = vmatmul.mubr.bf16.gmra.mrb[0].mxu0 %v2932
      %v3324 = vpop.f32.mrb[0].mxu0
      %v3325 = vadd.f32 %v3260, %v3324
      %v3326 = vpop.f32.mrb[0].mxu0
      %v3327 = vpop.f32.mrb[0].mxu0
      %v3328 = vadd.f32 %v3263, %v3327
      %v3329 = vpop.f32.mrb[0].mxu0
      %3330 = vdwg.mxu0
      %v3331 = vadd.f32 %v2878, %v3301
      %v3332 = vadd.f32 %v2879, %v3304
      %v3333 = vadd.f32 %v2880, %v3309
      %v3334 = vadd.f32 %v2881, %v3312
      %v3335 = vadd.f32 %v2882, %v3317
      %v3336 = vadd.f32 %v2883, %v3320
      %v3337 = vadd.f32 %v2884, %v3325
      %v3338 = vadd.f32 %v2885, %v3328
      %v3340 = vshrl.u32 %v815, 16
      %v3342 = vrot.slane %v3340, 6
      %v3343 = vshll.u32 %v815, 16
      %v3345 = vrot.slane %v3343, 7
      %v3346 = vor.u32 %v3342, %v3345
      %v3347 = vrot.slane %v3346, 2
      %v3349 = vshll.u32 %v817, 16
      %v3351 = vrot.slane %v3349, 7
      %v3352 = vsel %vm841, %v3347, %v3351
      %v3353 = vshrl.u32 %v817, 16
      %v3355 = vrot.slane %v3353, 6
      %v3356 = vor.u32 %v3355, %v3351
      %v3357 = vrot.slane %v3356, 2
      %v3359 = vshll.u32 %v825, 16
      %v3361 = vrot.slane %v3359, 7
      %v3362 = vsel %vm841, %v3357, %v3361
      %v3363 = vrot.slane %v815, 7
      %v3364 = vrot.slane %v3363, 2
      %v3365 = vrot.slane %v817, 7
      %v3366 = vsel %vm1040, %v3364, %v3365
      %v3367 = vrot.slane %v3365, 2
      %v3368 = vrot.slane %v825, 7
      %v3369 = vsel %vm1040, %v3367, %v3368
      %v3370 = vrot.slane %v3340, 7
      %v3371 = vrot.slane %v3370, 2
      %v3372 = vrot.slane %v3353, 7
      %v3373 = vor.u32 %v3372, %v3349
      %v3374 = vsel %vm1103, %v3371, %v3373
      %v3375 = vrot.slane %v3372, 2
      %v3376 = vshrl.u32 %v825, 16
      %v3378 = vrot.slane %v3376, 7
      %v3379 = vor.u32 %v3378, %v3359
      %v3380 = vsel %vm1103, %v3375, %v3379
      %v3381 = vcombine.low %v3352, %v3362
      %v3383 = vunpack.c.l.s4 1983009808
      %v3384 = vunpack.c.0.s8 %v3383
      %v3385 = vlaneseq
      %v3386 = vshrl.u32 %v3385, 7
      %v3387 = vsub.s32 %v3384, %v3386
      %v3388 = vrot.slane %v3381, %v3387
      %v3389 = vcombine.low %v2488, %v3388
      %v3391 = vcombine.low %v3366, %v3369
      %v3393 = vunpack.c.l.s4 1983009808
      %v3394 = vunpack.c.0.s8 %v3393
      %v3395 = vlaneseq
      %v3396 = vshrl.u32 %v3395, 7
      %v3397 = vsub.s32 %v3394, %v3396
      %v3398 = vrot.slane %v3391, %v3397
      %v3399 = vcombine.low %v2911, %v3398
      %v3401 = vcombine.low %v3374, %v3380
      %v3403 = vunpack.c.l.s4 1983009808
      %v3404 = vunpack.c.0.s8 %v3403
      %v3405 = vlaneseq
      %v3406 = vshrl.u32 %v3405, 7
      %v3407 = vsub.s32 %v3404, %v3406
      %v3408 = vrot.slane %v3401, %v3407
      %v3409 = vcombine.low %v2921, %v3408
      %v3411 = vcombine.low %v817, %v825
      %v3413 = vunpack.c.l.s4 1983009808
      %v3414 = vunpack.c.0.s8 %v3413
      %v3415 = vlaneseq
      %v3416 = vshrl.u32 %v3415, 7
      %v3417 = vsub.s32 %v3414, %v3416
      %v3418 = vrot.slane %v3411, %v3417
      %v3419 = vcombine.low %v2931, %v3418
      %s3421 = scalar_lea.vmem %s3, 1024
      %v3422 = vld [vmem:[%s3421] sm:$0xf]
      %v3423 = vld [vmem:[%s3421 + $0x4] sm:$0xf]
      %v3424 = vld [vmem:[%s3421 + $0x8] sm:$0xf]
      %v3425 = vld [vmem:[%s3421 + $0xc] sm:$0xf]
      %v3426 = vld [vmem:[%s3421 + $0x10] sm:$0xf]
      %v3427 = vld [vmem:[%s3421 + $0x14] sm:$0xf]
      %v3428 = vld [vmem:[%s3421 + $0x18] sm:$0xf]
      %v3429 = vld [vmem:[%s3421 + $0x1c] sm:$0xf]
      %v3430 = vld [vmem:[%s3421 + $0x20] sm:$0xf]
      %v3431 = vld [vmem:[%s3421 + $0x24] sm:$0xf]
      %v3432 = vld [vmem:[%s3421 + $0x28] sm:$0xf]
      %v3433 = vld [vmem:[%s3421 + $0x2c] sm:$0xf]
      %v3434 = vld [vmem:[%s3421 + $0x30] sm:$0xf]
      %v3435 = vld [vmem:[%s3421 + $0x34] sm:$0xf]
      %v3436 = vld [vmem:[%s3421 + $0x38] sm:$0xf]
      %v3437 = vld [vmem:[%s3421 + $0x3c] sm:$0xf]
      %v3438 = vld [vmem:[%s3421 + $0x40] sm:$0xf]
      %v3439 = vld [vmem:[%s3421 + $0x44] sm:$0xf]
      %v3440 = vld [vmem:[%s3421 + $0x48] sm:$0xf]
      %v3441 = vld [vmem:[%s3421 + $0x4c] sm:$0xf]
      %v3442 = vld [vmem:[%s3421 + $0x50] sm:$0xf]
      %v3443 = vld [vmem:[%s3421 + $0x54] sm:$0xf]
      %v3444 = vld [vmem:[%s3421 + $0x58] sm:$0xf]
      %v3445 = vld [vmem:[%s3421 + $0x5c] sm:$0xf]
      %v3446 = vld [vmem:[%s3421 + $0x60] sm:$0xf]
      %v3447 = vld [vmem:[%s3421 + $0x64] sm:$0xf]
      %v3448 = vld [vmem:[%s3421 + $0x68] sm:$0xf]
      %v3449 = vld [vmem:[%s3421 + $0x6c] sm:$0xf]
      %v3450 = vld [vmem:[%s3421 + $0x70] sm:$0xf]
      %v3451 = vld [vmem:[%s3421 + $0x74] sm:$0xf]
      %v3452 = vld [vmem:[%s3421 + $0x78] sm:$0xf]
      %v3453 = vld [vmem:[%s3421 + $0x7c] sm:$0xf]
      %v3454 = vld [vmem:[%s3421 + $0x80] sm:$0xf]
      %v3455 = vld [vmem:[%s3421 + $0x84] sm:$0xf]
      %v3456 = vld [vmem:[%s3421 + $0x88] sm:$0xf]
      %v3457 = vld [vmem:[%s3421 + $0x8c] sm:$0xf]
      %v3458 = vld [vmem:[%s3421 + $0x90] sm:$0xf]
      %v3459 = vld [vmem:[%s3421 + $0x94] sm:$0xf]
      %v3460 = vld [vmem:[%s3421 + $0x98] sm:$0xf]
      %v3461 = vld [vmem:[%s3421 + $0x9c] sm:$0xf]
      %v3462 = vld [vmem:[%s3421 + $0xa0] sm:$0xf]
      %v3463 = vld [vmem:[%s3421 + $0xa4] sm:$0xf]
      %v3464 = vld [vmem:[%s3421 + $0xa8] sm:$0xf]
      %v3465 = vld [vmem:[%s3421 + $0xac] sm:$0xf]
      %v3466 = vld [vmem:[%s3421 + $0xb0] sm:$0xf]
      %v3467 = vld [vmem:[%s3421 + $0xb4] sm:$0xf]
      %v3468 = vld [vmem:[%s3421 + $0xb8] sm:$0xf]
      %v3469 = vld [vmem:[%s3421 + $0xbc] sm:$0xf]
      %v3470 = vld [vmem:[%s3421 + $0xc0] sm:$0xf]
      %v3471 = vld [vmem:[%s3421 + $0xc4] sm:$0xf]
      %v3472 = vld [vmem:[%s3421 + $0xc8] sm:$0xf]
      %v3473 = vld [vmem:[%s3421 + $0xcc] sm:$0xf]
      %v3474 = vld [vmem:[%s3421 + $0xd0] sm:$0xf]
      %v3475 = vld [vmem:[%s3421 + $0xd4] sm:$0xf]
      %v3476 = vld [vmem:[%s3421 + $0xd8] sm:$0xf]
      %v3477 = vld [vmem:[%s3421 + $0xdc] sm:$0xf]
      %v3478 = vld [vmem:[%s3421 + $0xe0] sm:$0xf]
      %v3479 = vld [vmem:[%s3421 + $0xe4] sm:$0xf]
      %v3480 = vld [vmem:[%s3421 + $0xe8] sm:$0xf]
      %v3481 = vld [vmem:[%s3421 + $0xec] sm:$0xf]
      %v3482 = vld [vmem:[%s3421 + $0xf0] sm:$0xf]
      %v3483 = vld [vmem:[%s3421 + $0xf4] sm:$0xf]
      %v3484 = vld [vmem:[%s3421 + $0xf8] sm:$0xf]
      %v3485 = vld [vmem:[%s3421 + $0xfc] sm:$0xf]
      %v3550 = vunpack.c.l.b16 %v3422
      %v3551 = vunpack.c.l.b16 %v3423
      %v3552 = vunpack.c.l.b16 %v3424
      %v3553 = vunpack.c.l.b16 %v3425
      %v3554 = vunpack.c.l.b16 %v3426
      %v3555 = vunpack.c.l.b16 %v3427
      %v3556 = vunpack.c.l.b16 %v3428
      %v3557 = vunpack.c.l.b16 %v3429
      %v3558 = vunpack.c.l.b16 %v3430
      %v3559 = vunpack.c.l.b16 %v3431
      %v3560 = vunpack.c.l.b16 %v3432
      %v3561 = vunpack.c.l.b16 %v3433
      %v3562 = vunpack.c.l.b16 %v3434
      %v3563 = vunpack.c.l.b16 %v3435
      %v3564 = vunpack.c.l.b16 %v3436
      %v3565 = vunpack.c.l.b16 %v3437
      %v3566 = vunpack.c.l.b16 %v3438
      %v3567 = vunpack.c.l.b16 %v3439
      %v3568 = vunpack.c.l.b16 %v3440
      %v3569 = vunpack.c.l.b16 %v3441
      %v3570 = vunpack.c.l.b16 %v3442
      %v3571 = vunpack.c.l.b16 %v3443
      %v3572 = vunpack.c.l.b16 %v3444
      %v3573 = vunpack.c.l.b16 %v3445
      %v3574 = vunpack.c.l.b16 %v3446
      %v3575 = vunpack.c.l.b16 %v3447
      %v3576 = vunpack.c.l.b16 %v3448
      %v3577 = vunpack.c.l.b16 %v3449
      %v3578 = vunpack.c.l.b16 %v3450
      %v3579 = vunpack.c.l.b16 %v3451
      %v3580 = vunpack.c.l.b16 %v3452
      %v3581 = vunpack.c.l.b16 %v3453
      %v3582 = vunpack.c.l.b16 %v3454
      %v3583 = vunpack.c.l.b16 %v3455
      %v3584 = vunpack.c.l.b16 %v3456
      %v3585 = vunpack.c.l.b16 %v3457
      %v3586 = vunpack.c.l.b16 %v3458
      %v3587 = vunpack.c.l.b16 %v3459
      %v3588 = vunpack.c.l.b16 %v3460
      %v3589 = vunpack.c.l.b16 %v3461
      %v3590 = vunpack.c.l.b16 %v3462
      %v3591 = vunpack.c.l.b16 %v3463
      %v3592 = vunpack.c.l.b16 %v3464
      %v3593 = vunpack.c.l.b16 %v3465
      %v3594 = vunpack.c.l.b16 %v3466
      %v3595 = vunpack.c.l.b16 %v3467
      %v3596 = vunpack.c.l.b16 %v3468
      %v3597 = vunpack.c.l.b16 %v3469
      %v3598 = vunpack.c.l.b16 %v3470
      %v3599 = vunpack.c.l.b16 %v3471
      %v3600 = vunpack.c.l.b16 %v3472
      %v3601 = vunpack.c.l.b16 %v3473
      %v3602 = vunpack.c.l.b16 %v3474
      %v3603 = vunpack.c.l.b16 %v3475
      %v3604 = vunpack.c.l.b16 %v3476
      %v3605 = vunpack.c.l.b16 %v3477
      %v3606 = vunpack.c.l.b16 %v3478
      %v3607 = vunpack.c.l.b16 %v3479
      %v3608 = vunpack.c.l.b16 %v3480
      %v3609 = vunpack.c.l.b16 %v3481
      %v3610 = vunpack.c.l.b16 %v3482
      %v3611 = vunpack.c.l.b16 %v3483
      %v3612 = vunpack.c.l.b16 %v3484
      %v3613 = vunpack.c.l.b16 %v3485
      %v3614 = vpack.c.b16 %v3551, %v3550
      %v3615 = vpack.c.b16 %v3553, %v3552
      %v3616 = vpack.c.b16 %v3555, %v3554
      %v3617 = vpack.c.b16 %v3557, %v3556
      %v3618 = vpack.c.b16 %v3559, %v3558
      %v3619 = vpack.c.b16 %v3561, %v3560
      %v3620 = vpack.c.b16 %v3563, %v3562
      %v3621 = vpack.c.b16 %v3565, %v3564
      %v3622 = vpack.c.b16 %v3567, %v3566
      %v3623 = vpack.c.b16 %v3569, %v3568
      %v3624 = vpack.c.b16 %v3571, %v3570
      %v3625 = vpack.c.b16 %v3573, %v3572
      %v3626 = vpack.c.b16 %v3575, %v3574
      %v3627 = vpack.c.b16 %v3577, %v3576
      %v3628 = vpack.c.b16 %v3579, %v3578
      %v3629 = vpack.c.b16 %v3581, %v3580
      %v3630 = vpack.c.b16 %v3583, %v3582
      %v3631 = vpack.c.b16 %v3585, %v3584
      %v3632 = vpack.c.b16 %v3587, %v3586
      %v3633 = vpack.c.b16 %v3589, %v3588
      %v3634 = vpack.c.b16 %v3591, %v3590
      %v3635 = vpack.c.b16 %v3593, %v3592
      %v3636 = vpack.c.b16 %v3595, %v3594
      %v3637 = vpack.c.b16 %v3597, %v3596
      %v3638 = vpack.c.b16 %v3599, %v3598
      %v3639 = vpack.c.b16 %v3601, %v3600
      %v3640 = vpack.c.b16 %v3603, %v3602
      %v3641 = vpack.c.b16 %v3605, %v3604
      %v3642 = vpack.c.b16 %v3607, %v3606
      %v3643 = vpack.c.b16 %v3609, %v3608
      %v3644 = vpack.c.b16 %v3611, %v3610
      %v3645 = vpack.c.b16 %v3613, %v3612
      %3678 = vmatprep.subr.bf16.mxu0 0
      %3679 = vmatpush1.bf16.msra.mxu0 %v3614
      %3680 = vmatprep.subr.bf16.mxu0 0
      %3681 = vmatpush1.bf16.msra.mxu0 %v3615
      %3682 = vmatprep.subr.bf16.mxu0 0
      %3683 = vmatpush1.bf16.msra.mxu0 %v3616
      %3684 = vmatprep.subr.bf16.mxu0 0
      %3685 = vmatpush1.bf16.msra.mxu0 %v3617
      %3686 = vmatprep.subr.bf16.mxu0 0
      %3687 = vmatpush1.bf16.msra.mxu0 %v3618
      %3688 = vmatprep.subr.bf16.mxu0 0
      %3689 = vmatpush1.bf16.msra.mxu0 %v3619
      %3690 = vmatprep.subr.bf16.mxu0 0
      %3691 = vmatpush1.bf16.msra.mxu0 %v3620
      %3692 = vmatprep.subr.bf16.mxu0 0
      %3693 = vmatpush1.bf16.msra.mxu0 %v3621
      %3694 = vmatprep.subr.bf16.mxu0 0
      %3695 = vmatpush1.bf16.msra.mxu0 %v3622
      %3696 = vmatprep.subr.bf16.mxu0 0
      %3697 = vmatpush1.bf16.msra.mxu0 %v3623
      %3698 = vmatprep.subr.bf16.mxu0 0
      %3699 = vmatpush1.bf16.msra.mxu0 %v3624
      %3700 = vmatprep.subr.bf16.mxu0 0
      %3701 = vmatpush1.bf16.msra.mxu0 %v3625
      %3702 = vmatprep.subr.bf16.mxu0 0
      %3703 = vmatpush1.bf16.msra.mxu0 %v3626
      %3704 = vmatprep.subr.bf16.mxu0 0
      %3705 = vmatpush1.bf16.msra.mxu0 %v3627
      %3706 = vmatprep.subr.bf16.mxu0 0
      %3707 = vmatpush1.bf16.msra.mxu0 %v3628
      %3708 = vmatprep.subr.bf16.mxu0 0
      %3709 = vmatpush1.bf16.msra.mxu0 %v3629
      %3710 = vmatprep.mubr.bf16.mxu0 %v1680
      %3711 = vmatmul.mubr.bf16.gmra.mrb[0].mxu0 %v1664
      %v3712 = vpop.f32.mrb[0].mxu0
      %v3713 = vadd.f32 0.0, %v3712
      %v3714 = vpop.f32.mrb[0].mxu0
      %v3715 = vpop.f32.mrb[0].mxu0
      %v3716 = vadd.f32 0.0, %v3715
      %v3717 = vpop.f32.mrb[0].mxu0
      %3718 = vmatprep.mubr.bf16.mxu0 %v1681
      %3719 = vmatmul.mubr.bf16.gmra.mrb[0].mxu0 %v1665
      %v3720 = vpop.f32.mrb[0].mxu0
      %v3721 = vadd.f32 0.0, %v3720
      %v3722 = vpop.f32.mrb[0].mxu0
      %v3723 = vpop.f32.mrb[0].mxu0
      %v3724 = vadd.f32 0.0, %v3723
      %v3725 = vpop.f32.mrb[0].mxu0
      %3726 = vmatprep.mubr.bf16.mxu0 %v1690
      %3727 = vmatmul.mubr.bf16.gmra.mrb[0].mxu0 %v1674
      %v3728 = vpop.f32.mrb[0].mxu0
      %v3729 = vadd.f32 0.0, %v3728
      %v3730 = vpop.f32.mrb[0].mxu0
      %v3731 = vpop.f32.mrb[0].mxu0
      %v3732 = vadd.f32 0.0, %v3731
      %v3733 = vpop.f32.mrb[0].mxu0
      %3734 = vmatprep.mubr.bf16.mxu0 %v3399
      %3735 = vmatmul.mubr.bf16.gmra.mrb[0].mxu0 %v3389
      %v3736 = vpop.f32.mrb[0].mxu0
      %v3737 = vadd.f32 0.0, %v3736
      %v3738 = vpop.f32.mrb[0].mxu0
      %v3739 = vpop.f32.mrb[0].mxu0
      %v3740 = vadd.f32 0.0, %v3739
      %v3741 = vpop.f32.mrb[0].mxu0
      %3742 = vdwg.mxu0
      %3743 = vmatprep.subr.bf16.mxu0 0
      %3744 = vmatpush1.bf16.msra.mxu0 %v3630
      %3745 = vmatprep.subr.bf16.mxu0 0
      %3746 = vmatpush1.bf16.msra.mxu0 %v3631
      %3747 = vmatprep.subr.bf16.mxu0 0
      %3748 = vmatpush1.bf16.msra.mxu0 %v3632
      %3749 = vmatprep.subr.bf16.mxu0 0
      %3750 = vmatpush1.bf16.msra.mxu0 %v3633
      %3751 = vmatprep.subr.bf16.mxu0 0
      %3752 = vmatpush1.bf16.msra.mxu0 %v3634
      %3753 = vmatprep.subr.bf16.mxu0 0
      %3754 = vmatpush1.bf16.msra.mxu0 %v3635
      %3755 = vmatprep.subr.bf16.mxu0 0
      %3756 = vmatpush1.bf16.msra.mxu0 %v3636
      %3757 = vmatprep.subr.bf16.mxu0 0
      %3758 = vmatpush1.bf16.msra.mxu0 %v3637
      %3759 = vmatprep.subr.bf16.mxu0 0
      %3760 = vmatpush1.bf16.msra.mxu0 %v3638
      %3761 = vmatprep.subr.bf16.mxu0 0
      %3762 = vmatpush1.bf16.msra.mxu0 %v3639
      %3763 = vmatprep.subr.bf16.mxu0 0
      %3764 = vmatpush1.bf16.msra.mxu0 %v3640
      %3765 = vmatprep.subr.bf16.mxu0 0
      %3766 = vmatpush1.bf16.msra.mxu0 %v3641
      %3767 = vmatprep.subr.bf16.mxu0 0
      %3768 = vmatpush1.bf16.msra.mxu0 %v3642
      %3769 = vmatprep.subr.bf16.mxu0 0
      %3770 = vmatpush1.bf16.msra.mxu0 %v3643
      %3771 = vmatprep.subr.bf16.mxu0 0
      %3772 = vmatpush1.bf16.msra.mxu0 %v3644
      %3773 = vmatprep.subr.bf16.mxu0 0
      %3774 = vmatpush1.bf16.msra.mxu0 %v3645
      %3775 = vmatprep.mubr.bf16.mxu0 %v2456
      %3776 = vmatmul.mubr.bf16.gmra.mrb[0].mxu0 %v2440
      %v3777 = vpop.f32.mrb[0].mxu0
      %v3778 = vadd.f32 %v3713, %v3777
      %v3779 = vpop.f32.mrb[0].mxu0
      %v3780 = vpop.f32.mrb[0].mxu0
      %v3781 = vadd.f32 %v3716, %v3780
      %v3782 = vpop.f32.mrb[0].mxu0
      %3783 = vmatprep.mubr.bf16.mxu0 %v2457
      %3784 = vmatmul.mubr.bf16.gmra.mrb[0].mxu0 %v2441
      %v3785 = vpop.f32.mrb[0].mxu0
      %v3786 = vadd.f32 %v3721, %v3785
      %v3787 = vpop.f32.mrb[0].mxu0
      %v3788 = vpop.f32.mrb[0].mxu0
      %v3789 = vadd.f32 %v3724, %v3788
      %v3790 = vpop.f32.mrb[0].mxu0
      %3791 = vmatprep.mubr.bf16.mxu0 %v2466
      %3792 = vmatmul.mubr.bf16.gmra.mrb[0].mxu0 %v2450
      %v3793 = vpop.f32.mrb[0].mxu0
      %v3794 = vadd.f32 %v3729, %v3793
      %v3795 = vpop.f32.mrb[0].mxu0
      %v3796 = vpop.f32.mrb[0].mxu0
      %v3797 = vadd.f32 %v3732, %v3796
      %v3798 = vpop.f32.mrb[0].mxu0
      %3799 = vmatprep.mubr.bf16.mxu0 %v3419
      %3800 = vmatmul.mubr.bf16.gmra.mrb[0].mxu0 %v3409
      %v3801 = vpop.f32.mrb[0].mxu0
      %v3802 = vadd.f32 %v3737, %v3801
      %v3803 = vpop.f32.mrb[0].mxu0
      %v3804 = vpop.f32.mrb[0].mxu0
      %v3805 = vadd.f32 %v3740, %v3804
      %v3806 = vpop.f32.mrb[0].mxu0
      %3807 = vdwg.mxu0
      %v3808 = vadd.f32 %v3331, %v3778
      %v3809 = vadd.f32 %v3332, %v3781
      %v3810 = vadd.f32 %v3333, %v3786
      %v3811 = vadd.f32 %v3334, %v3789
      %v3812 = vadd.f32 %v3335, %v3794
      %v3813 = vadd.f32 %v3336, %v3797
      %v3814 = vadd.f32 %v3337, %v3802
      %v3815 = vadd.f32 %v3338, %v3805
      %v3817 = vshrl.u32 %v833, 16
      %v3819 = vrot.slane %v3817, 6
      %v3820 = vshll.u32 %v833, 16
      %v3822 = vrot.slane %v3820, 7
      %v3823 = vor.u32 %v3819, %v3822
      %v3824 = vrot.slane %v3823, 2
      %v3826 = vshll.u32 %v832, 16
      %v3828 = vrot.slane %v3826, 7
      %v3829 = vsel %vm841, %v3824, %v3828
      %v3830 = vshrl.u32 %v832, 16
      %v3832 = vrot.slane %v3830, 6
      %v3833 = vor.u32 %v3832, %v3828
      %v3834 = vrot.slane %v3833, 2
      %v3836 = vshll.u32 %v834, 16
      %v3838 = vrot.slane %v3836, 7
      %v3839 = vsel %vm841, %v3834, %v3838
      %v3840 = vrot.slane %v833, 7
      %v3841 = vrot.slane %v3840, 2
      %v3842 = vrot.slane %v832, 7
      %v3843 = vsel %vm1040, %v3841, %v3842
      %v3844 = vrot.slane %v3842, 2
      %v3845 = vrot.slane %v834, 7
      %v3846 = vsel %vm1040, %v3844, %v3845
      %v3847 = vrot.slane %v3817, 7
      %v3848 = vrot.slane %v3847, 2
      %v3849 = vrot.slane %v3830, 7
      %v3850 = vor.u32 %v3849, %v3826
      %v3851 = vsel %vm1103, %v3848, %v3850
      %v3852 = vrot.slane %v3849, 2
      %v3853 = vshrl.u32 %v834, 16
      %v3855 = vrot.slane %v3853, 7
      %v3856 = vor.u32 %v3855, %v3836
      %v3857 = vsel %vm1103, %v3852, %v3856
      %v3858 = vcombine.low %v833, %v832
      %v3860 = vunpack.c.l.s4 1983009808
      %v3861 = vunpack.c.0.s8 %v3860
      %v3862 = vlaneseq
      %v3863 = vshrl.u32 %v3862, 7
      %v3864 = vsub.s32 %v3861, %v3863
      %v3865 = vrot.slane %v3858, %v3864
      %v3866 = vcombine.low %v2941, %v3865
      %v3868 = vcombine.low %v3829, %v3839
      %v3870 = vunpack.c.l.s4 1983009808
      %v3871 = vunpack.c.0.s8 %v3870
      %v3872 = vlaneseq
      %v3873 = vshrl.u32 %v3872, 7
      %v3874 = vsub.s32 %v3871, %v3873
      %v3875 = vrot.slane %v3868, %v3874
      %v3876 = vcombine.low %v3388, %v3875
      %v3878 = vcombine.low %v3843, %v3846
      %v3880 = vunpack.c.l.s4 1983009808
      %v3881 = vunpack.c.0.s8 %v3880
      %v3882 = vlaneseq
      %v3883 = vshrl.u32 %v3882, 7
      %v3884 = vsub.s32 %v3881, %v3883
      %v3885 = vrot.slane %v3878, %v3884
      %v3886 = vcombine.low %v3398, %v3885
      %v3888 = vcombine.low %v3851, %v3857
      %v3890 = vunpack.c.l.s4 1983009808
      %v3891 = vunpack.c.0.s8 %v3890
      %v3892 = vlaneseq
      %v3893 = vshrl.u32 %v3892, 7
      %v3894 = vsub.s32 %v3891, %v3893
      %v3895 = vrot.slane %v3888, %v3894
      %v3896 = vcombine.low %v3408, %v3895
      %s3898 = scalar_lea.vmem %s3, 1280
      %v3899 = vld [vmem:[%s3898] sm:$0xf]
      %v3900 = vld [vmem:[%s3898 + $0x4] sm:$0xf]
      %v3901 = vld [vmem:[%s3898 + $0x8] sm:$0xf]
      %v3902 = vld [vmem:[%s3898 + $0xc] sm:$0xf]
      %v3903 = vld [vmem:[%s3898 + $0x10] sm:$0xf]
      %v3904 = vld [vmem:[%s3898 + $0x14] sm:$0xf]
      %v3905 = vld [vmem:[%s3898 + $0x18] sm:$0xf]
      %v3906 = vld [vmem:[%s3898 + $0x1c] sm:$0xf]
      %v3907 = vld [vmem:[%s3898 + $0x20] sm:$0xf]
      %v3908 = vld [vmem:[%s3898 + $0x24] sm:$0xf]
      %v3909 = vld [vmem:[%s3898 + $0x28] sm:$0xf]
      %v3910 = vld [vmem:[%s3898 + $0x2c] sm:$0xf]
      %v3911 = vld [vmem:[%s3898 + $0x30] sm:$0xf]
      %v3912 = vld [vmem:[%s3898 + $0x34] sm:$0xf]
      %v3913 = vld [vmem:[%s3898 + $0x38] sm:$0xf]
      %v3914 = vld [vmem:[%s3898 + $0x3c] sm:$0xf]
      %v3915 = vld [vmem:[%s3898 + $0x40] sm:$0xf]
      %v3916 = vld [vmem:[%s3898 + $0x44] sm:$0xf]
      %v3917 = vld [vmem:[%s3898 + $0x48] sm:$0xf]
      %v3918 = vld [vmem:[%s3898 + $0x4c] sm:$0xf]
      %v3919 = vld [vmem:[%s3898 + $0x50] sm:$0xf]
      %v3920 = vld [vmem:[%s3898 + $0x54] sm:$0xf]
      %v3921 = vld [vmem:[%s3898 + $0x58] sm:$0xf]
      %v3922 = vld [vmem:[%s3898 + $0x5c] sm:$0xf]
      %v3923 = vld [vmem:[%s3898 + $0x60] sm:$0xf]
      %v3924 = vld [vmem:[%s3898 + $0x64] sm:$0xf]
      %v3925 = vld [vmem:[%s3898 + $0x68] sm:$0xf]
      %v3926 = vld [vmem:[%s3898 + $0x6c] sm:$0xf]
      %v3927 = vld [vmem:[%s3898 + $0x70] sm:$0xf]
      %v3928 = vld [vmem:[%s3898 + $0x74] sm:$0xf]
      %v3929 = vld [vmem:[%s3898 + $0x78] sm:$0xf]
      %v3930 = vld [vmem:[%s3898 + $0x7c] sm:$0xf]
      %v3931 = vld [vmem:[%s3898 + $0x80] sm:$0xf]
      %v3932 = vld [vmem:[%s3898 + $0x84] sm:$0xf]
      %v3933 = vld [vmem:[%s3898 + $0x88] sm:$0xf]
      %v3934 = vld [vmem:[%s3898 + $0x8c] sm:$0xf]
      %v3935 = vld [vmem:[%s3898 + $0x90] sm:$0xf]
      %v3936 = vld [vmem:[%s3898 + $0x94] sm:$0xf]
      %v3937 = vld [vmem:[%s3898 + $0x98] sm:$0xf]
      %v3938 = vld [vmem:[%s3898 + $0x9c] sm:$0xf]
      %v3939 = vld [vmem:[%s3898 + $0xa0] sm:$0xf]
      %v3940 = vld [vmem:[%s3898 + $0xa4] sm:$0xf]
      %v3941 = vld [vmem:[%s3898 + $0xa8] sm:$0xf]
      %v3942 = vld [vmem:[%s3898 + $0xac] sm:$0xf]
      %v3943 = vld [vmem:[%s3898 + $0xb0] sm:$0xf]
      %v3944 = vld [vmem:[%s3898 + $0xb4] sm:$0xf]
      %v3945 = vld [vmem:[%s3898 + $0xb8] sm:$0xf]
      %v3946 = vld [vmem:[%s3898 + $0xbc] sm:$0xf]
      %v3947 = vld [vmem:[%s3898 + $0xc0] sm:$0xf]
      %v3948 = vld [vmem:[%s3898 + $0xc4] sm:$0xf]
      %v3949 = vld [vmem:[%s3898 + $0xc8] sm:$0xf]
      %v3950 = vld [vmem:[%s3898 + $0xcc] sm:$0xf]
      %v3951 = vld [vmem:[%s3898 + $0xd0] sm:$0xf]
      %v3952 = vld [vmem:[%s3898 + $0xd4] sm:$0xf]
      %v3953 = vld [vmem:[%s3898 + $0xd8] sm:$0xf]
      %v3954 = vld [vmem:[%s3898 + $0xdc] sm:$0xf]
      %v3955 = vld [vmem:[%s3898 + $0xe0] sm:$0xf]
      %v3956 = vld [vmem:[%s3898 + $0xe4] sm:$0xf]
      %v3957 = vld [vmem:[%s3898 + $0xe8] sm:$0xf]
      %v3958 = vld [vmem:[%s3898 + $0xec] sm:$0xf]
      %v3959 = vld [vmem:[%s3898 + $0xf0] sm:$0xf]
      %v3960 = vld [vmem:[%s3898 + $0xf4] sm:$0xf]
      %v3961 = vld [vmem:[%s3898 + $0xf8] sm:$0xf]
      %v3962 = vld [vmem:[%s3898 + $0xfc] sm:$0xf]
      %v4027 = vunpack.c.l.b16 %v3899
      %v4028 = vunpack.c.l.b16 %v3900
      %v4029 = vunpack.c.l.b16 %v3901
      %v4030 = vunpack.c.l.b16 %v3902
      %v4031 = vunpack.c.l.b16 %v3903
      %v4032 = vunpack.c.l.b16 %v3904
      %v4033 = vunpack.c.l.b16 %v3905
      %v4034 = vunpack.c.l.b16 %v3906
      %v4035 = vunpack.c.l.b16 %v3907
      %v4036 = vunpack.c.l.b16 %v3908
      %v4037 = vunpack.c.l.b16 %v3909
      %v4038 = vunpack.c.l.b16 %v3910
      %v4039 = vunpack.c.l.b16 %v3911
      %v4040 = vunpack.c.l.b16 %v3912
      %v4041 = vunpack.c.l.b16 %v3913
      %v4042 = vunpack.c.l.b16 %v3914
      %v4043 = vunpack.c.l.b16 %v3915
      %v4044 = vunpack.c.l.b16 %v3916
      %v4045 = vunpack.c.l.b16 %v3917
      %v4046 = vunpack.c.l.b16 %v3918
      %v4047 = vunpack.c.l.b16 %v3919
      %v4048 = vunpack.c.l.b16 %v3920
      %v4049 = vunpack.c.l.b16 %v3921
      %v4050 = vunpack.c.l.b16 %v3922
      %v4051 = vunpack.c.l.b16 %v3923
      %v4052 = vunpack.c.l.b16 %v3924
      %v4053 = vunpack.c.l.b16 %v3925
      %v4054 = vunpack.c.l.b16 %v3926
      %v4055 = vunpack.c.l.b16 %v3927
      %v4056 = vunpack.c.l.b16 %v3928
      %v4057 = vunpack.c.l.b16 %v3929
      %v4058 = vunpack.c.l.b16 %v3930
      %v4059 = vunpack.c.l.b16 %v3931
      %v4060 = vunpack.c.l.b16 %v3932
      %v4061 = vunpack.c.l.b16 %v3933
      %v4062 = vunpack.c.l.b16 %v3934
      %v4063 = vunpack.c.l.b16 %v3935
      %v4064 = vunpack.c.l.b16 %v3936
      %v4065 = vunpack.c.l.b16 %v3937
      %v4066 = vunpack.c.l.b16 %v3938
      %v4067 = vunpack.c.l.b16 %v3939
      %v4068 = vunpack.c.l.b16 %v3940
      %v4069 = vunpack.c.l.b16 %v3941
      %v4070 = vunpack.c.l.b16 %v3942
      %v4071 = vunpack.c.l.b16 %v3943
      %v4072 = vunpack.c.l.b16 %v3944
      %v4073 = vunpack.c.l.b16 %v3945
      %v4074 = vunpack.c.l.b16 %v3946
      %v4075 = vunpack.c.l.b16 %v3947
      %v4076 = vunpack.c.l.b16 %v3948
      %v4077 = vunpack.c.l.b16 %v3949
      %v4078 = vunpack.c.l.b16 %v3950
      %v4079 = vunpack.c.l.b16 %v3951
      %v4080 = vunpack.c.l.b16 %v3952
      %v4081 = vunpack.c.l.b16 %v3953
      %v4082 = vunpack.c.l.b16 %v3954
      %v4083 = vunpack.c.l.b16 %v3955
      %v4084 = vunpack.c.l.b16 %v3956
      %v4085 = vunpack.c.l.b16 %v3957
      %v4086 = vunpack.c.l.b16 %v3958
      %v4087 = vunpack.c.l.b16 %v3959
      %v4088 = vunpack.c.l.b16 %v3960
      %v4089 = vunpack.c.l.b16 %v3961
      %v4090 = vunpack.c.l.b16 %v3962
      %v4091 = vpack.c.b16 %v4028, %v4027
      %v4092 = vpack.c.b16 %v4030, %v4029
      %v4093 = vpack.c.b16 %v4032, %v4031
      %v4094 = vpack.c.b16 %v4034, %v4033
      %v4095 = vpack.c.b16 %v4036, %v4035
      %v4096 = vpack.c.b16 %v4038, %v4037
      %v4097 = vpack.c.b16 %v4040, %v4039
      %v4098 = vpack.c.b16 %v4042, %v4041
      %v4099 = vpack.c.b16 %v4044, %v4043
      %v4100 = vpack.c.b16 %v4046, %v4045
      %v4101 = vpack.c.b16 %v4048, %v4047
      %v4102 = vpack.c.b16 %v4050, %v4049
      %v4103 = vpack.c.b16 %v4052, %v4051
      %v4104 = vpack.c.b16 %v4054, %v4053
      %v4105 = vpack.c.b16 %v4056, %v4055
      %v4106 = vpack.c.b16 %v4058, %v4057
      %v4107 = vpack.c.b16 %v4060, %v4059
      %v4108 = vpack.c.b16 %v4062, %v4061
      %v4109 = vpack.c.b16 %v4064, %v4063
      %v4110 = vpack.c.b16 %v4066, %v4065
      %v4111 = vpack.c.b16 %v4068, %v4067
      %v4112 = vpack.c.b16 %v4070, %v4069
      %v4113 = vpack.c.b16 %v4072, %v4071
      %v4114 = vpack.c.b16 %v4074, %v4073
      %v4115 = vpack.c.b16 %v4076, %v4075
      %v4116 = vpack.c.b16 %v4078, %v4077
      %v4117 = vpack.c.b16 %v4080, %v4079
      %v4118 = vpack.c.b16 %v4082, %v4081
      %v4119 = vpack.c.b16 %v4084, %v4083
      %v4120 = vpack.c.b16 %v4086, %v4085
      %v4121 = vpack.c.b16 %v4088, %v4087
      %v4122 = vpack.c.b16 %v4090, %v4089
      %4155 = vmatprep.subr.bf16.mxu0 0
      %4156 = vmatpush1.bf16.msra.mxu0 %v4091
      %4157 = vmatprep.subr.bf16.mxu0 0
      %4158 = vmatpush1.bf16.msra.mxu0 %v4092
      %4159 = vmatprep.subr.bf16.mxu0 0
      %4160 = vmatpush1.bf16.msra.mxu0 %v4093
      %4161 = vmatprep.subr.bf16.mxu0 0
      %4162 = vmatpush1.bf16.msra.mxu0 %v4094
      %4163 = vmatprep.subr.bf16.mxu0 0
      %4164 = vmatpush1.bf16.msra.mxu0 %v4095
      %4165 = vmatprep.subr.bf16.mxu0 0
      %4166 = vmatpush1.bf16.msra.mxu0 %v4096
      %4167 = vmatprep.subr.bf16.mxu0 0
      %4168 = vmatpush1.bf16.msra.mxu0 %v4097
      %4169 = vmatprep.subr.bf16.mxu0 0
      %4170 = vmatpush1.bf16.msra.mxu0 %v4098
      %4171 = vmatprep.subr.bf16.mxu0 0
      %4172 = vmatpush1.bf16.msra.mxu0 %v4099
      %4173 = vmatprep.subr.bf16.mxu0 0
      %4174 = vmatpush1.bf16.msra.mxu0 %v4100
      %4175 = vmatprep.subr.bf16.mxu0 0
      %4176 = vmatpush1.bf16.msra.mxu0 %v4101
      %4177 = vmatprep.subr.bf16.mxu0 0
      %4178 = vmatpush1.bf16.msra.mxu0 %v4102
      %4179 = vmatprep.subr.bf16.mxu0 0
      %4180 = vmatpush1.bf16.msra.mxu0 %v4103
      %4181 = vmatprep.subr.bf16.mxu0 0
      %4182 = vmatpush1.bf16.msra.mxu0 %v4104
      %4183 = vmatprep.subr.bf16.mxu0 0
      %4184 = vmatpush1.bf16.msra.mxu0 %v4105
      %4185 = vmatprep.subr.bf16.mxu0 0
      %4186 = vmatpush1.bf16.msra.mxu0 %v4106
      %4187 = vmatprep.mubr.bf16.mxu0 %v1314
      %4188 = vmatmul.mubr.bf16.gmra.mrb[0].mxu0 %v1242
      %v4189 = vpop.f32.mrb[0].mxu0
      %v4190 = vadd.f32 0.0, %v4189
      %v4191 = vpop.f32.mrb[0].mxu0
      %v4192 = vpop.f32.mrb[0].mxu0
      %v4193 = vadd.f32 0.0, %v4192
      %v4194 = vpop.f32.mrb[0].mxu0
      %4195 = vmatprep.mubr.bf16.mxu0 %v1331
      %4196 = vmatmul.mubr.bf16.gmra.mrb[0].mxu0 %v1259
      %v4197 = vpop.f32.mrb[0].mxu0
      %v4198 = vadd.f32 0.0, %v4197
      %v4199 = vpop.f32.mrb[0].mxu0
      %v4200 = vpop.f32.mrb[0].mxu0
      %v4201 = vadd.f32 0.0, %v4200
      %v4202 = vpop.f32.mrb[0].mxu0
      %4203 = vmatprep.mubr.bf16.mxu0 %v2489
      %4204 = vmatmul.mubr.bf16.gmra.mrb[0].mxu0 %v2479
      %v4205 = vpop.f32.mrb[0].mxu0
      %v4206 = vadd.f32 0.0, %v4205
      %v4207 = vpop.f32.mrb[0].mxu0
      %v4208 = vpop.f32.mrb[0].mxu0
      %v4209 = vadd.f32 0.0, %v4208
      %v4210 = vpop.f32.mrb[0].mxu0
      %4211 = vmatprep.mubr.bf16.mxu0 %v3876
      %4212 = vmatmul.mubr.bf16.gmra.mrb[0].mxu0 %v3866
      %v4213 = vpop.f32.mrb[0].mxu0
      %v4214 = vadd.f32 0.0, %v4213
      %v4215 = vpop.f32.mrb[0].mxu0
      %v4216 = vpop.f32.mrb[0].mxu0
      %v4217 = vadd.f32 0.0, %v4216
      %v4218 = vpop.f32.mrb[0].mxu0
      %4219 = vdwg.mxu0
      %4220 = vmatprep.subr.bf16.mxu0 0
      %4221 = vmatpush1.bf16.msra.mxu0 %v4107
      %4222 = vmatprep.subr.bf16.mxu0 0
      %4223 = vmatpush1.bf16.msra.mxu0 %v4108
      %4224 = vmatprep.subr.bf16.mxu0 0
      %4225 = vmatpush1.bf16.msra.mxu0 %v4109
      %4226 = vmatprep.subr.bf16.mxu0 0
      %4227 = vmatpush1.bf16.msra.mxu0 %v4110
      %4228 = vmatprep.subr.bf16.mxu0 0
      %4229 = vmatpush1.bf16.msra.mxu0 %v4111
      %4230 = vmatprep.subr.bf16.mxu0 0
      %4231 = vmatpush1.bf16.msra.mxu0 %v4112
      %4232 = vmatprep.subr.bf16.mxu0 0
      %4233 = vmatpush1.bf16.msra.mxu0 %v4113
      %4234 = vmatprep.subr.bf16.mxu0 0
      %4235 = vmatpush1.bf16.msra.mxu0 %v4114
      %4236 = vmatprep.subr.bf16.mxu0 0
      %4237 = vmatpush1.bf16.msra.mxu0 %v4115
      %4238 = vmatprep.subr.bf16.mxu0 0
      %4239 = vmatpush1.bf16.msra.mxu0 %v4116
      %4240 = vmatprep.subr.bf16.mxu0 0
      %4241 = vmatpush1.bf16.msra.mxu0 %v4117
      %4242 = vmatprep.subr.bf16.mxu0 0
      %4243 = vmatpush1.bf16.msra.mxu0 %v4118
      %4244 = vmatprep.subr.bf16.mxu0 0
      %4245 = vmatpush1.bf16.msra.mxu0 %v4119
      %4246 = vmatprep.subr.bf16.mxu0 0
      %4247 = vmatpush1.bf16.msra.mxu0 %v4120
      %4248 = vmatprep.subr.bf16.mxu0 0
      %4249 = vmatpush1.bf16.msra.mxu0 %v4121
      %4250 = vmatprep.subr.bf16.mxu0 0
      %4251 = vmatpush1.bf16.msra.mxu0 %v4122
      %4252 = vmatprep.mubr.bf16.mxu0 %v1458
      %4253 = vmatmul.mubr.bf16.gmra.mrb[0].mxu0 %v1386
      %v4254 = vpop.f32.mrb[0].mxu0
      %v4255 = vadd.f32 %v4190, %v4254
      %v4256 = vpop.f32.mrb[0].mxu0
      %v4257 = vpop.f32.mrb[0].mxu0
      %v4258 = vadd.f32 %v4193, %v4257
      %v4259 = vpop.f32.mrb[0].mxu0
      %4260 = vmatprep.mubr.bf16.mxu0 %v1475
      %4261 = vmatmul.mubr.bf16.gmra.mrb[0].mxu0 %v1403
      %v4262 = vpop.f32.mrb[0].mxu0
      %v4263 = vadd.f32 %v4198, %v4262
      %v4264 = vpop.f32.mrb[0].mxu0
      %v4265 = vpop.f32.mrb[0].mxu0
      %v4266 = vadd.f32 %v4201, %v4265
      %v4267 = vpop.f32.mrb[0].mxu0
      %4268 = vmatprep.mubr.bf16.mxu0 %v2922
      %4269 = vmatmul.mubr.bf16.gmra.mrb[0].mxu0 %v2912
      %v4270 = vpop.f32.mrb[0].mxu0
      %v4271 = vadd.f32 %v4206, %v4270
      %v4272 = vpop.f32.mrb[0].mxu0
      %v4273 = vpop.f32.mrb[0].mxu0
      %v4274 = vadd.f32 %v4209, %v4273
      %v4275 = vpop.f32.mrb[0].mxu0
      %4276 = vmatprep.mubr.bf16.mxu0 %v3896
      %4277 = vmatmul.mubr.bf16.gmra.mrb[0].mxu0 %v3886
      %v4278 = vpop.f32.mrb[0].mxu0
      %v4279 = vadd.f32 %v4214, %v4278
      %v4280 = vpop.f32.mrb[0].mxu0
      %v4281 = vpop.f32.mrb[0].mxu0
      %v4282 = vadd.f32 %v4217, %v4281
      %v4283 = vpop.f32.mrb[0].mxu0
      %4284 = vdwg.mxu0
      %v4285 = vadd.f32 %v3808, %v4255
      %v4286 = vadd.f32 %v3809, %v4258
      %v4287 = vadd.f32 %v3810, %v4263
      %v4288 = vadd.f32 %v3811, %v4266
      %v4289 = vadd.f32 %v3812, %v4271
      %v4290 = vadd.f32 %v3813, %v4274
      %v4291 = vadd.f32 %v3814, %v4279
      %v4292 = vadd.f32 %v3815, %v4282
      %s4293 = scalar_lea.vmem %s3, 1536
      %v4294 = vld [vmem:[%s4293] sm:$0xf]
      %v4295 = vld [vmem:[%s4293 + $0x4] sm:$0xf]
      %v4296 = vld [vmem:[%s4293 + $0x8] sm:$0xf]
      %v4297 = vld [vmem:[%s4293 + $0xc] sm:$0xf]
      %v4298 = vld [vmem:[%s4293 + $0x10] sm:$0xf]
      %v4299 = vld [vmem:[%s4293 + $0x14] sm:$0xf]
      %v4300 = vld [vmem:[%s4293 + $0x18] sm:$0xf]
      %v4301 = vld [vmem:[%s4293 + $0x1c] sm:$0xf]
      %v4302 = vld [vmem:[%s4293 + $0x20] sm:$0xf]
      %v4303 = vld [vmem:[%s4293 + $0x24] sm:$0xf]
      %v4304 = vld [vmem:[%s4293 + $0x28] sm:$0xf]
      %v4305 = vld [vmem:[%s4293 + $0x2c] sm:$0xf]
      %v4306 = vld [vmem:[%s4293 + $0x30] sm:$0xf]
      %v4307 = vld [vmem:[%s4293 + $0x34] sm:$0xf]
      %v4308 = vld [vmem:[%s4293 + $0x38] sm:$0xf]
      %v4309 = vld [vmem:[%s4293 + $0x3c] sm:$0xf]
      %v4310 = vcombine.low %v832, %v834
      %v4312 = vunpack.c.l.s4 1983009808
      %v4313 = vunpack.c.0.s8 %v4312
      %v4314 = vlaneseq
      %v4315 = vshrl.u32 %v4314, 7
      %v4316 = vsub.s32 %v4313, %v4315
      %v4317 = vrot.slane %v4310, %v4316
      %v4318 = vcombine.low %v3418, %v4317
      %v4336 = vunpack.c.l.b16 %v4294
      %v4337 = vunpack.c.l.b16 %v4295
      %v4338 = vunpack.c.l.b16 %v4296
      %v4339 = vunpack.c.l.b16 %v4297
      %v4340 = vunpack.c.l.b16 %v4298
      %v4341 = vunpack.c.l.b16 %v4299
      %v4342 = vunpack.c.l.b16 %v4300
      %v4343 = vunpack.c.l.b16 %v4301
      %v4344 = vunpack.c.l.b16 %v4302
      %v4345 = vunpack.c.l.b16 %v4303
      %v4346 = vunpack.c.l.b16 %v4304
      %v4347 = vunpack.c.l.b16 %v4305
      %v4348 = vunpack.c.l.b16 %v4306
      %v4349 = vunpack.c.l.b16 %v4307
      %v4350 = vunpack.c.l.b16 %v4308
      %v4351 = vunpack.c.l.b16 %v4309
      %v4352 = vpack.c.b16 %v4337, %v4336
      %v4353 = vpack.c.b16 %v4339, %v4338
      %v4354 = vpack.c.b16 %v4341, %v4340
      %v4355 = vpack.c.b16 %v4343, %v4342
      %v4356 = vpack.c.b16 %v4345, %v4344
      %v4357 = vpack.c.b16 %v4347, %v4346
      %v4358 = vpack.c.b16 %v4349, %v4348
      %v4359 = vpack.c.b16 %v4351, %v4350
      %4368 = vmatprep.subr.bf16.mxu0 0
      %4369 = vmatpush1.bf16.msra.mxu0 %v4352
      %4370 = vmatprep.subr.bf16.mxu0 0
      %4371 = vmatpush1.bf16.msra.mxu0 %v4353
      %4372 = vmatprep.subr.bf16.mxu0 0
      %4373 = vmatpush1.bf16.msra.mxu0 %v4354
      %4374 = vmatprep.subr.bf16.mxu0 0
      %4375 = vmatpush1.bf16.msra.mxu0 %v4355
      %4376 = vmatprep.subr.bf16.mxu0 0
      %4377 = vmatpush1.bf16.msra.mxu0 %v4356
      %4378 = vmatprep.subr.bf16.mxu0 0
      %4379 = vmatpush1.bf16.msra.mxu0 %v4357
      %4380 = vmatprep.subr.bf16.mxu0 0
      %4381 = vmatpush1.bf16.msra.mxu0 %v4358
      %4382 = vmatprep.subr.bf16.mxu0 0
      %4383 = vmatpush1.bf16.msra.mxu0 %v4359
      %4384 = vmatprep.subr.bf16.mxu0 0
      %4385 = vmatpush1.bf16.msra.mxu0 0
      %4386 = vmatprep.subr.bf16.mxu0 0
      %4387 = vmatpush1.bf16.msra.mxu0 0
      %4388 = vmatprep.subr.bf16.mxu0 0
      %4389 = vmatpush1.bf16.msra.mxu0 0
      %4390 = vmatprep.subr.bf16.mxu0 0
      %4391 = vmatpush1.bf16.msra.mxu0 0
      %4392 = vmatprep.subr.bf16.mxu0 0
      %4393 = vmatpush1.bf16.msra.mxu0 0
      %4394 = vmatprep.subr.bf16.mxu0 0
      %4395 = vmatpush1.bf16.msra.mxu0 0
      %4396 = vmatprep.subr.bf16.mxu0 0
      %4397 = vmatpush1.bf16.msra.mxu0 0
      %4398 = vmatprep.subr.bf16.mxu0 0
      %4399 = vmatpush1.bf16.msra.mxu0 0
      %4400 = vmatprep.mubr.bf16.mxu0 0
      %4401 = vmatmul.mubr.bf16.gmra.mrb[0].mxu0 %v1625
      %v4402 = vpop.f32.mrb[0].mxu0
      %v4403 = vadd.f32 0.0, %v4402
      %v4404 = vpop.f32.mrb[0].mxu0
      %v4405 = vpop.f32.mrb[0].mxu0
      %v4406 = vadd.f32 0.0, %v4405
      %v4407 = vpop.f32.mrb[0].mxu0
      %4408 = vmatprep.mubr.bf16.mxu0 0
      %4409 = vmatmul.mubr.bf16.gmra.mrb[0].mxu0 %v1642
      %v4410 = vpop.f32.mrb[0].mxu0
      %v4411 = vadd.f32 0.0, %v4410
      %v4412 = vpop.f32.mrb[0].mxu0
      %v4413 = vpop.f32.mrb[0].mxu0
      %v4414 = vadd.f32 0.0, %v4413
      %v4415 = vpop.f32.mrb[0].mxu0
      %4416 = vmatprep.mubr.bf16.mxu0 0
      %4417 = vmatmul.mubr.bf16.gmra.mrb[0].mxu0 %v2932
      %v4418 = vpop.f32.mrb[0].mxu0
      %v4419 = vadd.f32 0.0, %v4418
      %v4420 = vpop.f32.mrb[0].mxu0
      %v4421 = vpop.f32.mrb[0].mxu0
      %v4422 = vadd.f32 0.0, %v4421
      %v4423 = vpop.f32.mrb[0].mxu0
      %4424 = vmatprep.mubr.bf16.mxu0 0
      %4425 = vmatmul.mubr.bf16.gmra.mrb[0].mxu0 %v4318
      %v4426 = vpop.f32.mrb[0].mxu0
      %v4427 = vadd.f32 0.0, %v4426
      %v4428 = vpop.f32.mrb[0].mxu0
      %v4429 = vpop.f32.mrb[0].mxu0
      %v4430 = vadd.f32 0.0, %v4429
      %v4431 = vpop.f32.mrb[0].mxu0
      %4432 = vdwg.mxu0
      %v4433 = vadd.f32 %v4285, %v4403
      %v4434 = vadd.f32 %v4286, %v4406
      %v4435 = vadd.f32 %v4287, %v4411
      %v4436 = vadd.f32 %v4288, %v4414
      %v4437 = vadd.f32 %v4289, %v4419
      %v4438 = vadd.f32 %v4290, %v4422
      %v4439 = vadd.f32 %v4291, %v4427
      %v4440 = vadd.f32 %v4292, %v4430
      %v4441 = vpack.c.bf16 %v4434, %v4433
      %v4442 = vpack.c.bf16 %v4436, %v4435
      %v4443 = vpack.c.bf16 %v4438, %v4437
      %v4444 = vpack.c.bf16 %v4440, %v4439
      %v4449 = vunpack.c.l.b16 %v4441
      %v4450 = vunpack.c.h.b16 %v4441
      %v4451 = vunpack.c.l.b16 %v4442
      %v4452 = vunpack.c.h.b16 %v4442
      %v4453 = vunpack.c.l.b16 %v4443
      %v4454 = vunpack.c.h.b16 %v4443
      %v4455 = vunpack.c.l.b16 %v4444
      %v4456 = vunpack.c.h.b16 %v4444
      %v4457 = vpack.c.b16 %v4449, %v4449
      %v4458 = vpack.c.b16 %v4450, %v4450
      %v4459 = vpack.c.b16 %v4451, %v4451
      %v4460 = vpack.c.b16 %v4452, %v4452
      %v4461 = vpack.c.b16 %v4453, %v4453
      %v4462 = vpack.c.b16 %v4454, %v4454
      %v4463 = vpack.c.b16 %v4455, %v4455
      %v4464 = vpack.c.b16 %v4456, %v4456
      %4473 = vst [vmem:[%s233] sm:$0xf] %v4457
      %4474 = vst [vmem:[%s233 + $0x4] sm:$0xf] %v4458
      %4475 = vst [vmem:[%s233 + $0x8] sm:$0xf] %v4459
      %4476 = vst [vmem:[%s233 + $0xc] sm:$0xf] %v4460
      %4477 = vst [vmem:[%s233 + $0x10] sm:$0xf] %v4461
      %4478 = vst [vmem:[%s233 + $0x14] sm:$0xf] %v4462
      %4479 = vst [vmem:[%s233 + $0x18] sm:$0xf] %v4463
      %4480 = vst [vmem:[%s233 + $0x1c] sm:$0xf] %v4464
      %v4481 = vadd.f32 %v4433, %v4434
      %v4482 = vadd.f32 %v4481, %v4435
      %v4483 = vadd.f32 %v4482, %v4436
      %v4484 = vadd.f32 %v4483, %v4437
      %v4485 = vadd.f32 %v4484, %v4438
      %v4486 = vadd.f32 %v4485, %v4439
      %v4487 = vadd.f32 %v4486, %v4440
      %v4488 = vrot.slane %v4487, 4
      %v4489 = vadd.f32 %v4487, %v4488
      %v4490 = vrot.slane %v4489, 2
      %v4491 = vadd.f32 %v4489, %v4490
      %v4492 = vrot.slane %v4491, 1
      %v4493 = vadd.f32 %v4491, %v4492
      %v4494 = vmul.f32 %v4433, %v4433
      %v4495 = vmul.f32 %v4434, %v4434
      %v4496 = vmul.f32 %v4435, %v4435
      %v4497 = vmul.f32 %v4436, %v4436
      %v4498 = vmul.f32 %v4437, %v4437
      %v4499 = vmul.f32 %v4438, %v4438
      %v4500 = vmul.f32 %v4439, %v4439
      %v4501 = vmul.f32 %v4440, %v4440
      %v4502 = vadd.f32 %v4494, %v4495
      %v4503 = vadd.f32 %v4502, %v4496
      %v4504 = vadd.f32 %v4503, %v4497
      %v4505 = vadd.f32 %v4504, %v4498
      %v4506 = vadd.f32 %v4505, %v4499
      %v4507 = vadd.f32 %v4506, %v4500
      %v4508 = vadd.f32 %v4507, %v4501
      %v4509 = vrot.slane %v4508, 4
      %v4510 = vadd.f32 %v4508, %v4509
      %v4511 = vrot.slane %v4510, 2
      %v4512 = vadd.f32 %v4510, %v4511
      %v4513 = vrot.slane %v4512, 1
      %v4514 = vadd.f32 %v4512, %v4513
      %vm4515 = vcmask 1040384
      %v4516 = vsel %vm4515, %v4493, %v4514
      %4517 = vst [vmem:[%s238] sm:$0x3] %v4516
      %s4518 = smul.u32 8, %s17
      %p4519 = scmp.lt.s32.totalorder %s4518, 15
      %s4520 = scalar_select %p4519, %s4518, 15
      %s4521 = smul.addr %s4520, 4
      %s4522 = scalar_lea.vmem %s4, %s4521
      %p4523 = scmp.lt.s32.totalorder %s17, 1
      %s4524 = scalar_select %p4523, %s17, 1
      %s4525 = smul.addr %s4524, 2
      %s4526 = scalar_lea.vmem %s5, %s4525
      // Predicated region
      $region37: #{netf_forward.4} parent=35 // pred_check
        %p4527 = pneg %p124
      $region38: #{netf_forward.4} parent=35 // pred_check_branch
        %4529 = sbr.rel (%p4527) target = $region40
      $region39: #{netf_forward.4} parent=35 // pred_region
        %s4530 = smul.u32 8, %s17
      $region40: #{netf_forward.4} parent=35 // pred_fallthru
        _
      // Predicated region
      $region41: #{netf_forward.4} parent=35 // pred_check
        %p4531 = pneg %p150
      $region42: #{netf_forward.4} parent=35 // pred_check_branch
        %4533 = sbr.rel (%p4531) target = $region44
      $region43: #{netf_forward.4} parent=35 // pred_region
        _
      $region44: #{netf_forward.4} parent=35 // pred_fallthru
        _
    $region36: #{netf_forward.4} parent=5 // pred_fallthru
      _
    %p4534 = scmp.le.s32.totalorder 2, %s12
    // Predicated region
    $region45: #{netf_forward.4} parent=5 // pred_check
      %p4535 = pneg %p4534
    $region46: #{netf_forward.4} parent=5 // pred_check_branch
      %4537 = sbr.rel (%p4535) target = $region48
    $region47: #{netf_forward.4} parent=5 // pred_region
      %s4538 = ssub.s32 %s12, 2
      // Predicated region
      $region49: #{netf_forward.4} parent=47 // pred_check
        %p4539 = pneg %p130
      $region50: #{netf_forward.4} parent=47 // pred_check_branch
        %4541 = sbr.rel (%p4539) target = $region52
      $region51: #{netf_forward.4} parent=47 // pred_region
        %s4542 = smul.u32 8, %s18
        %p4543 = scmp.lt.s32.totalorder %s4542, 15
        %s4544 = scalar_select %p4543, %s4542, 15
        %s4545 = smul.addr %s4544, 4
        %s4546 = scalar_lea.vmem %s4, %s4545
      $region52: #{netf_forward.4} parent=47 // pred_fallthru
        _
      // Predicated region
      $region53: #{netf_forward.4} parent=47 // pred_check
        %p4547 = pneg %p156
      $region54: #{netf_forward.4} parent=47 // pred_check_branch
        %4549 = sbr.rel (%p4547) target = $region56
      $region55: #{netf_forward.4} parent=47 // pred_region
        %p4550 = scmp.lt.s32.totalorder %s18, 1
        %s4551 = scalar_select %p4550, %s18, 1
        %s4552 = smul.addr %s4551, 2
        %s4553 = scalar_lea.vmem %s5, %s4552
      $region56: #{netf_forward.4} parent=47 // pred_fallthru
        _
    $region48: #{netf_forward.4} parent=5 // pred_fallthru
      _
  $region6: #{netf_forward.4} parent=0 // loop_footer
    %s16 = sadd.s32 1, %s12
  $region7: #{netf_forward.4} parent=0 // loop_footer_branch
    %11 = sbr.rel target = $region3
  $region8: #{netf_forward.4} parent=0 // loop_exit
    _

</llo_original>
